<compile_context>
chip_gen: v7x
topology: tpu7x:2x2x1
jax: 0.10.0
libtpu: 0.0.40
codegen_flags: <defaults>
</compile_context>

<pallas_src>
import functools
import math

import jax
import jax.numpy as jnp
import numpy as np
from jax.experimental import pallas as pl
from jax.experimental.pallas import tpu as pltpu

START_LEN = 32


def _attention_kernel(x_ref, k_in_ref, v_in_ref, wqkv_ref, wo_ref,
                      k_out_ref, v_out_ref, x_out_ref,
                      *, start_len, n_steps):
    B, S, D = k_in_ref.shape

    # k = k + 0.0 ; v = v + 0.0  -> fresh copies that get mutated below.
    k_out_ref[...] = k_in_ref[...]
    v_out_ref[...] = v_in_ref[...]

    w_qkv = wqkv_ref[...]              # (D, 3D) bf16 (fused Wq|Wk|Wv)
    w_o = wo_ref[...]                  # (D, D)  bf16

    x_cur = x_ref[...]                 # (B, D) f32

    # Static full unroll of the decode loop (n_steps is a compile-time int).
    for i in range(n_steps):
        gen_id = start_len + i         # python int -> static indices

        # Fused Q/K/V projection: one (B, D) x (D, 3D) MXU matmul, f32 acc.
        qkv = jnp.dot(x_cur.astype(jnp.bfloat16), w_qkv,
                      preferred_element_type=jnp.float32)            # (B, 3D)
        q = qkv[:, 0 * D:1 * D]                                      # (B, D)
        k_row = qkv[:, 1 * D:2 * D]
        v_row = qkv[:, 2 * D:3 * D]

        # In-place KV-cache update at row `gen_id` (only the new row).
        k_out_ref[:, gen_id, :] = k_row
        v_out_ref[:, gen_id, :] = v_row

        k_full = k_out_ref[...]                                      # (B, S, D)
        v_full = v_out_ref[...]

        # scores = 0.125 * q @ k^T  -> (B, 1, S), lane-major over S (MXU).
        scores = jnp.einsum(
            'bqd,bsd->bqs',
            q.reshape(B, 1, D).astype(jnp.bfloat16),
            k_full.astype(jnp.bfloat16),
            preferred_element_type=jnp.float32) * 0.125              # (B, 1, S)

        # Softmax over S, kept entirely in f32.
        m = jnp.max(scores, axis=-1, keepdims=True)
        e = jnp.exp(scores - m)
        attn = e / jnp.sum(e, axis=-1, keepdims=True)                # (B, 1, S)

        # context = attn @ V (MXU, batched), then output projection (MXU).
        ctx = jnp.einsum(
            'bqs,bsd->bqd',
            attn.astype(jnp.bfloat16),
            v_full.astype(jnp.bfloat16),
            preferred_element_type=jnp.float32)                      # (B, 1, D)
        x_cur = jnp.dot(ctx.reshape(B, D).astype(jnp.bfloat16), w_o,
                        preferred_element_type=jnp.float32)          # (B, D)

    x_out_ref[...] = x_cur


def attention_pallas(x, k, v, wq, wk, wv, wo, *, start_len=START_LEN):
    B, H, S, D = k.shape
    n_steps = S - start_len
    assert n_steps > 0, "seq_len must exceed START_LEN"

    # Fuse the three projection weights and cast weights to bf16 once
    # (halves weight DMA; MXU still accumulates in f32).
    w_qkv = jnp.concatenate([wq, wk, wv], axis=-1).astype(jnp.bfloat16)  # (H, D, 3D)
    w_o = wo.astype(jnp.bfloat16)                                        # (H, D, D)

    kernel = functools.partial(_attention_kernel,
                               start_len=start_len, n_steps=n_steps)

    # One head per grid step; the whole batch lives inside the kernel.
    kv_spec = pl.BlockSpec((B, None, S, D), lambda h: (0, h, 0, 0))     # -> (B, S, D)
    x_spec = pl.BlockSpec((B, None, None, D), lambda h: (0, h, 0, 0))   # -> (B, D)
    wqkv_spec = pl.BlockSpec((None, D, 3 * D), lambda h: (h, 0, 0))     # -> (D, 3D)
    wo_spec = pl.BlockSpec((None, D, D), lambda h: (h, 0, 0))           # -> (D, D)

    return pl.pallas_call(
        kernel,
        grid=(H,),
        in_specs=[x_spec, kv_spec, kv_spec, wqkv_spec, wo_spec],
        out_specs=(kv_spec, kv_spec, x_spec),
        out_shape=(
            jax.ShapeDtypeStruct((B, H, S, D), jnp.float32),   # k
            jax.ShapeDtypeStruct((B, H, S, D), jnp.float32),   # v
            jax.ShapeDtypeStruct((B, H, 1, D), jnp.float32),   # x
        ),
        compiler_params=pltpu.CompilerParams(
            dimension_semantics=("parallel",)),                # megacore over heads
    )(x, k, v, w_qkv, w_o)


def attention_ref(x, k, v, wq, wk, wv, wo, *, start_len=START_LEN):
    """Pure-JAX transliteration of the PyTorch forward (bf16 matmul inputs,
    f32 accumulation — mirrors the kernel's precision choices)."""
    B, H, S, D = k.shape
    bf, f32 = jnp.bfloat16, jnp.float32
    k = k + 0.0
    v = v + 0.0
    for i in range(S - start_len):
        gen_id = start_len + i
        xb = x.astype(bf)
        q = jnp.matmul(xb, wq.astype(bf), preferred_element_type=f32)       # (B,H,1,D)
        k = k.at[:, :, gen_id, :].set(
            jnp.matmul(xb, wk.astype(bf),
                       preferred_element_type=f32).reshape(B, H, D))
        v = v.at[:, :, gen_id, :].set(
            jnp.matmul(xb, wv.astype(bf),
                       preferred_element_type=f32).reshape(B, H, D))
        attn = jnp.swapaxes(
            jnp.matmul(k.astype(bf), jnp.swapaxes(q, 2, 3).astype(bf),
                       preferred_element_type=f32), 2, 3)                   # (B,H,1,S)
        attn = jax.nn.softmax(attn * 0.125, axis=3)
        x = jnp.matmul(attn.astype(bf), v.astype(bf),
                       preferred_element_type=f32)                          # (B,H,1,D)
        x = jnp.matmul(x.astype(bf), wo.astype(bf),
                       preferred_element_type=f32)                          # (B,H,1,D)
    return k, v, x


if __name__ == "__main__":
    # Small, deterministic problem: B=2, H=4, D=128 (size_per_head), S=40
    # (seq_len) -> 8 autoregressive generation steps.
    B, H, D, S = 2, 4, 128, 40

    key = jax.random.PRNGKey(0)
    kx, kk, kv_, kq, kkw, kvw, kow = jax.random.split(key, 7)

    x = jax.random.normal(kx, (B, H, 1, D), dtype=jnp.float32)
    k = jax.random.normal(kk, (B, H, S, D), dtype=jnp.float32)
    v = jax.random.normal(kv_, (B, H, S, D), dtype=jnp.float32)

    # Xavier-uniform-style deterministic init for (H, D, D) weights.
    bound = math.sqrt(6.0 / (2.0 * D))
    wq = jax.random.uniform(kq, (H, D, D), jnp.float32, -bound, bound)
    wk = jax.random.uniform(kkw, (H, D, D), jnp.float32, -bound, bound)
    wv = jax.random.uniform(kvw, (H, D, D), jnp.float32, -bound, bound)
    wo = jax.random.uniform(kow, (H, D, D), jnp.float32, -bound, bound)

    k_out, v_out, x_out = jax.block_until_ready(
        attention_pallas(x, k, v, wq, wk, wv, wo))

    k_ref, v_ref, x_ref_ = attention_ref(x, k, v, wq, wk, wv, wo)

    np.testing.assert_allclose(np.asarray(k_out), np.asarray(k_ref),
                               rtol=1e-2, atol=1e-2)
    np.testing.assert_allclose(np.asarray(v_out), np.asarray(v_ref),
                               rtol=1e-2, atol=1e-2)
    np.testing.assert_allclose(np.asarray(x_out), np.asarray(x_ref_),
                               rtol=1e-2, atol=1e-2)

    print("KERNEL_OK")
</pallas_src>

<mosaic_0001>
module attributes {stable_mosaic.version = 11 : i64} {
  func.func @_attention_kernel(%arg0: i32, %arg1: memref<2x1x1x128xf32, #tpu.memory_space<vmem>>, %arg2: memref<2x1x40x128xf32, #tpu.memory_space<vmem>>, %arg3: memref<2x1x40x128xf32, #tpu.memory_space<vmem>>, %arg4: memref<1x128x384xbf16, #tpu.memory_space<vmem>>, %arg5: memref<1x128x128xbf16, #tpu.memory_space<vmem>>, %arg6: memref<2x1x40x128xf32, #tpu.memory_space<vmem>>, %arg7: memref<2x1x40x128xf32, #tpu.memory_space<vmem>>, %arg8: memref<2x1x1x128xf32, #tpu.memory_space<vmem>>) attributes {dimension_semantics = [#tpu.dimension_semantics<parallel>], iteration_bounds = array<i64: 4>, scalar_prefetch = 0 : i64, scratch_operands = 0 : i64, tpu.core_type = #tpu.core_type<tc>, window_params = [{transform_indices = @transform_0, window_bounds = array<i64: 2, 1, 1, 128>}, {transform_indices = @transform_1, window_bounds = array<i64: 2, 1, 40, 128>}, {transform_indices = @transform_2, window_bounds = array<i64: 2, 1, 40, 128>}, {transform_indices = @transform_3, window_bounds = array<i64: 1, 128, 384>}, {transform_indices = @transform_4, window_bounds = array<i64: 1, 128, 128>}, {transform_indices = @transform_5, window_bounds = array<i64: 2, 1, 40, 128>}, {transform_indices = @transform_6, window_bounds = array<i64: 2, 1, 40, 128>}, {transform_indices = @transform_7, window_bounds = array<i64: 2, 1, 1, 128>}]} {
    %c0 = arith.constant 0 : index
    %c0_0 = arith.constant 0 : index
    %c0_1 = arith.constant 0 : index
    %c0_2 = arith.constant 0 : index
    %0 = vector.load %arg2[%c0, %c0_0, %c0_1, %c0_2] : memref<2x1x40x128xf32, #tpu.memory_space<vmem>>, vector<2x1x40x128xf32>
    %1 = vector.shape_cast %0 : vector<2x1x40x128xf32> to vector<2x40x128xf32>
    %c0_3 = arith.constant 0 : index
    %c0_4 = arith.constant 0 : index
    %c0_5 = arith.constant 0 : index
    %c0_6 = arith.constant 0 : index
    %2 = vector.load %arg6[%c0_3, %c0_4, %c0_5, %c0_6] : memref<2x1x40x128xf32, #tpu.memory_space<vmem>>, vector<2x1x40x128xf32>
    %3 = vector.shape_cast %2 : vector<2x1x40x128xf32> to vector<2x40x128xf32>
    %4 = vector.shape_cast %1 : vector<2x40x128xf32> to vector<2x1x40x128xf32>
    tpu.vector_store %arg6[%c0_3, %c0_4, %c0_5, %c0_6], %4 {strides = array<i32>} : memref<2x1x40x128xf32, #tpu.memory_space<vmem>>, vector<2x1x40x128xf32>,
    %c0_7 = arith.constant 0 : index
    %c0_8 = arith.constant 0 : index
    %c0_9 = arith.constant 0 : index
    %c0_10 = arith.constant 0 : index
    %5 = vector.load %arg3[%c0_7, %c0_8, %c0_9, %c0_10] : memref<2x1x40x128xf32, #tpu.memory_space<vmem>>, vector<2x1x40x128xf32>
    %6 = vector.shape_cast %5 : vector<2x1x40x128xf32> to vector<2x40x128xf32>
    %c0_11 = arith.constant 0 : index
    %c0_12 = arith.constant 0 : index
    %c0_13 = arith.constant 0 : index
    %c0_14 = arith.constant 0 : index
    %7 = vector.load %arg7[%c0_11, %c0_12, %c0_13, %c0_14] : memref<2x1x40x128xf32, #tpu.memory_space<vmem>>, vector<2x1x40x128xf32>
    %8 = vector.shape_cast %7 : vector<2x1x40x128xf32> to vector<2x40x128xf32>
    %9 = vector.shape_cast %6 : vector<2x40x128xf32> to vector<2x1x40x128xf32>
    tpu.vector_store %arg7[%c0_11, %c0_12, %c0_13, %c0_14], %9 {strides = array<i32>} : memref<2x1x40x128xf32, #tpu.memory_space<vmem>>, vector<2x1x40x128xf32>,
    %c0_15 = arith.constant 0 : index
    %c0_16 = arith.constant 0 : index
    %c0_17 = arith.constant 0 : index
    %10 = vector.load %arg4[%c0_15, %c0_16, %c0_17] : memref<1x128x384xbf16, #tpu.memory_space<vmem>>, vector<1x128x384xbf16>
    %11 = vector.shape_cast %10 : vector<1x128x384xbf16> to vector<128x384xbf16>
    %c0_18 = arith.constant 0 : index
    %c0_19 = arith.constant 0 : index
    %c0_20 = arith.constant 0 : index
    %12 = vector.load %arg5[%c0_18, %c0_19, %c0_20] : memref<1x128x128xbf16, #tpu.memory_space<vmem>>, vector<1x128x128xbf16>
    %13 = vector.shape_cast %12 : vector<1x128x128xbf16> to vector<128x128xbf16>
    %c0_21 = arith.constant 0 : index
    %c0_22 = arith.constant 0 : index
    %c0_23 = arith.constant 0 : index
    %c0_24 = arith.constant 0 : index
    %14 = vector.load %arg1[%c0_21, %c0_22, %c0_23, %c0_24] : memref<2x1x1x128xf32, #tpu.memory_space<vmem>>, vector<2x1x1x128xf32>
    %15 = vector.shape_cast %14 : vector<2x1x1x128xf32> to vector<2x128xf32>
    %16 = arith.truncf %15 : vector<2x128xf32> to vector<2x128xbf16>
    %cst = arith.constant dense<0.000000e+00> : vector<2x384xf32>
    %17 = tpu.matmul %16, %11, %cst {dimension_numbers = #tpu.dot_dimension_numbers<[1], [0], [0], [1], [0, 0, 1, 1], [], []>} : vector<2x128xbf16>, vector<128x384xbf16>, vector<2x384xf32> -> vector<2x384xf32>
    %18 = vector.extract_strided_slice %17 {offsets = [0, 0], sizes = [2, 128], strides = [1, 1]} : vector<2x384xf32> to vector<2x128xf32>
    %19 = vector.extract_strided_slice %17 {offsets = [0, 128], sizes = [2, 128], strides = [1, 1]} : vector<2x384xf32> to vector<2x128xf32>
    %20 = vector.extract_strided_slice %17 {offsets = [0, 256], sizes = [2, 128], strides = [1, 1]} : vector<2x384xf32> to vector<2x128xf32>
    %c0_25 = arith.constant 0 : index
    %c0_26 = arith.constant 0 : index
    %c32 = arith.constant 32 : index
    %c0_27 = arith.constant 0 : index
    %21 = vector.load %arg6[%c0_25, %c0_26, %c32, %c0_27] : memref<2x1x40x128xf32, #tpu.memory_space<vmem>>, vector<2x1x1x128xf32>
    %22 = vector.shape_cast %21 : vector<2x1x1x128xf32> to vector<2x128xf32>
    %23 = vector.shape_cast %19 : vector<2x128xf32> to vector<2x1x1x128xf32>
    tpu.vector_store %arg6[%c0_25, %c0_26, %c32, %c0_27], %23 {strides = array<i32>} : memref<2x1x40x128xf32, #tpu.memory_space<vmem>>, vector<2x1x1x128xf32>,
    %c0_28 = arith.constant 0 : index
    %c0_29 = arith.constant 0 : index
    %c32_30 = arith.constant 32 : index
    %c0_31 = arith.constant 0 : index
    %24 = vector.load %arg7[%c0_28, %c0_29, %c32_30, %c0_31] : memref<2x1x40x128xf32, #tpu.memory_space<vmem>>, vector<2x1x1x128xf32>
    %25 = vector.shape_cast %24 : vector<2x1x1x128xf32> to vector<2x128xf32>
    %26 = vector.shape_cast %20 : vector<2x128xf32> to vector<2x1x1x128xf32>
    tpu.vector_store %arg7[%c0_28, %c0_29, %c32_30, %c0_31], %26 {strides = array<i32>} : memref<2x1x40x128xf32, #tpu.memory_space<vmem>>, vector<2x1x1x128xf32>,
    %c0_32 = arith.constant 0 : index
    %c0_33 = arith.constant 0 : index
    %c0_34 = arith.constant 0 : index
    %c0_35 = arith.constant 0 : index
    %27 = vector.load %arg6[%c0_32, %c0_33, %c0_34, %c0_35] : memref<2x1x40x128xf32, #tpu.memory_space<vmem>>, vector<2x1x40x128xf32>
    %28 = vector.shape_cast %27 : vector<2x1x40x128xf32> to vector<2x40x128xf32>
    %c0_36 = arith.constant 0 : index
    %c0_37 = arith.constant 0 : index
    %c0_38 = arith.constant 0 : index
    %c0_39 = arith.constant 0 : index
    %29 = vector.load %arg7[%c0_36, %c0_37, %c0_38, %c0_39] : memref<2x1x40x128xf32, #tpu.memory_space<vmem>>, vector<2x1x40x128xf32>
    %30 = vector.shape_cast %29 : vector<2x1x40x128xf32> to vector<2x40x128xf32>
    %31 = vector.shape_cast %18 : vector<2x128xf32> to vector<2x1x128xf32>
    %32 = arith.truncf %31 : vector<2x1x128xf32> to vector<2x1x128xbf16>
    %33 = arith.truncf %28 : vector<2x40x128xf32> to vector<2x40x128xbf16>
    "tpu.trace_start"() <{level = 10 : i32, message = "bqd,bsd->bqs"}> : () -> ()
    %cst_40 = arith.constant dense<0.000000e+00> : vector<2x1x40xf32>
    %34 = tpu.matmul %32, %33, %cst_40 {dimension_numbers = #tpu.dot_dimension_numbers<[2], [2], [1], [1], [0, 0, 0, 1, 1, 1], [0], [0]>} : vector<2x1x128xbf16>, vector<2x40x128xbf16>, vector<2x1x40xf32> -> vector<2x1x40xf32>
    "tpu.trace_stop"() : () -> ()
    %cst_41 = arith.constant 1.250000e-01 : f32
    %35 = vector.broadcast %cst_41 : f32 to vector<2x1x40xf32>
    %36 = arith.mulf %34, %35 : vector<2x1x40xf32>
    %cst_42 = arith.constant dense<0xFF800000> : vector<2x1xf32>
    %37 = vector.multi_reduction <maximumf>, %36, %cst_42 [2] : vector<2x1x40xf32> to vector<2x1xf32>
    %38 = vector.shape_cast %37 : vector<2x1xf32> to vector<2x1x1xf32>
    %39 = vector.broadcast %38 : vector<2x1x1xf32> to vector<2x1x40xf32>
    %40 = arith.subf %36, %39 : vector<2x1x40xf32>
    %41 = math.exp %40 : vector<2x1x40xf32>
    %cst_43 = arith.constant dense<0.000000e+00> : vector<2x1xf32>
    %42 = vector.multi_reduction <add>, %41, %cst_43 [2] : vector<2x1x40xf32> to vector<2x1xf32>
    %43 = vector.shape_cast %42 : vector<2x1xf32> to vector<2x1x1xf32>
    %44 = vector.broadcast %43 : vector<2x1x1xf32> to vector<2x1x40xf32>
    %45 = arith.divf %41, %44 : vector<2x1x40xf32>
    %46 = arith.truncf %45 : vector<2x1x40xf32> to vector<2x1x40xbf16>
    %47 = arith.truncf %30 : vector<2x40x128xf32> to vector<2x40x128xbf16>
    "tpu.trace_start"() <{level = 10 : i32, message = "bqs,bsd->bqd"}> : () -> ()
    %cst_44 = arith.constant dense<0.000000e+00> : vector<2x1x128xf32>
    %48 = tpu.matmul %46, %47, %cst_44 {dimension_numbers = #tpu.dot_dimension_numbers<[2], [1], [1], [2], [0, 0, 0, 1, 1, 2], [0], [0]>} : vector<2x1x40xbf16>, vector<2x40x128xbf16>, vector<2x1x128xf32> -> vector<2x1x128xf32>
    "tpu.trace_stop"() : () -> ()
    %49 = vector.shape_cast %48 : vector<2x1x128xf32> to vector<2x128xf32>
    %50 = arith.truncf %49 : vector<2x128xf32> to vector<2x128xbf16>
    %cst_45 = arith.constant dense<0.000000e+00> : vector<2x128xf32>
    %51 = tpu.matmul %50, %13, %cst_45 {dimension_numbers = #tpu.dot_dimension_numbers<[1], [0], [0], [1], [0, 0, 1, 1], [], []>} : vector<2x128xbf16>, vector<128x128xbf16>, vector<2x128xf32> -> vector<2x128xf32>
    %52 = arith.truncf %51 : vector<2x128xf32> to vector<2x128xbf16>
    %cst_46 = arith.constant dense<0.000000e+00> : vector<2x384xf32>
    %53 = tpu.matmul %52, %11, %cst_46 {dimension_numbers = #tpu.dot_dimension_numbers<[1], [0], [0], [1], [0, 0, 1, 1], [], []>} : vector<2x128xbf16>, vector<128x384xbf16>, vector<2x384xf32> -> vector<2x384xf32>
    %54 = vector.extract_strided_slice %53 {offsets = [0, 0], sizes = [2, 128], strides = [1, 1]} : vector<2x384xf32> to vector<2x128xf32>
    %55 = vector.extract_strided_slice %53 {offsets = [0, 128], sizes = [2, 128], strides = [1, 1]} : vector<2x384xf32> to vector<2x128xf32>
    %56 = vector.extract_strided_slice %53 {offsets = [0, 256], sizes = [2, 128], strides = [1, 1]} : vector<2x384xf32> to vector<2x128xf32>
    %c0_47 = arith.constant 0 : index
    %c0_48 = arith.constant 0 : index
    %c33 = arith.constant 33 : index
    %c0_49 = arith.constant 0 : index
    %57 = vector.load %arg6[%c0_47, %c0_48, %c33, %c0_49] : memref<2x1x40x128xf32, #tpu.memory_space<vmem>>, vector<2x1x1x128xf32>
    %58 = vector.shape_cast %57 : vector<2x1x1x128xf32> to vector<2x128xf32>
    %59 = vector.shape_cast %55 : vector<2x128xf32> to vector<2x1x1x128xf32>
    tpu.vector_store %arg6[%c0_47, %c0_48, %c33, %c0_49], %59 {strides = array<i32>} : memref<2x1x40x128xf32, #tpu.memory_space<vmem>>, vector<2x1x1x128xf32>,
    %c0_50 = arith.constant 0 : index
    %c0_51 = arith.constant 0 : index
    %c33_52 = arith.constant 33 : index
    %c0_53 = arith.constant 0 : index
    %60 = vector.load %arg7[%c0_50, %c0_51, %c33_52, %c0_53] : memref<2x1x40x128xf32, #tpu.memory_space<vmem>>, vector<2x1x1x128xf32>
    %61 = vector.shape_cast %60 : vector<2x1x1x128xf32> to vector<2x128xf32>
    %62 = vector.shape_cast %56 : vector<2x128xf32> to vector<2x1x1x128xf32>
    tpu.vector_store %arg7[%c0_50, %c0_51, %c33_52, %c0_53], %62 {strides = array<i32>} : memref<2x1x40x128xf32, #tpu.memory_space<vmem>>, vector<2x1x1x128xf32>,
    %c0_54 = arith.constant 0 : index
    %c0_55 = arith.constant 0 : index
    %c0_56 = arith.constant 0 : index
    %c0_57 = arith.constant 0 : index
    %63 = vector.load %arg6[%c0_54, %c0_55, %c0_56, %c0_57] : memref<2x1x40x128xf32, #tpu.memory_space<vmem>>, vector<2x1x40x128xf32>
    %64 = vector.shape_cast %63 : vector<2x1x40x128xf32> to vector<2x40x128xf32>
    %c0_58 = arith.constant 0 : index
    %c0_59 = arith.constant 0 : index
    %c0_60 = arith.constant 0 : index
    %c0_61 = arith.constant 0 : index
    %65 = vector.load %arg7[%c0_58, %c0_59, %c0_60, %c0_61] : memref<2x1x40x128xf32, #tpu.memory_space<vmem>>, vector<2x1x40x128xf32>
    %66 = vector.shape_cast %65 : vector<2x1x40x128xf32> to vector<2x40x128xf32>
    %67 = vector.shape_cast %54 : vector<2x128xf32> to vector<2x1x128xf32>
    %68 = arith.truncf %67 : vector<2x1x128xf32> to vector<2x1x128xbf16>
    %69 = arith.truncf %64 : vector<2x40x128xf32> to vector<2x40x128xbf16>
    "tpu.trace_start"() <{level = 10 : i32, message = "bqd,bsd->bqs"}> : () -> ()
    %cst_62 = arith.constant dense<0.000000e+00> : vector<2x1x40xf32>
    %70 = tpu.matmul %68, %69, %cst_62 {dimension_numbers = #tpu.dot_dimension_numbers<[2], [2], [1], [1], [0, 0, 0, 1, 1, 1], [0], [0]>} : vector<2x1x128xbf16>, vector<2x40x128xbf16>, vector<2x1x40xf32> -> vector<2x1x40xf32>
    "tpu.trace_stop"() : () -> ()
    %cst_63 = arith.constant 1.250000e-01 : f32
    %71 = vector.broadcast %cst_63 : f32 to vector<2x1x40xf32>
    %72 = arith.mulf %70, %71 : vector<2x1x40xf32>
    %cst_64 = arith.constant dense<0xFF800000> : vector<2x1xf32>
    %73 = vector.multi_reduction <maximumf>, %72, %cst_64 [2] : vector<2x1x40xf32> to vector<2x1xf32>
    %74 = vector.shape_cast %73 : vector<2x1xf32> to vector<2x1x1xf32>
    %75 = vector.broadcast %74 : vector<2x1x1xf32> to vector<2x1x40xf32>
    %76 = arith.subf %72, %75 : vector<2x1x40xf32>
    %77 = math.exp %76 : vector<2x1x40xf32>
    %cst_65 = arith.constant dense<0.000000e+00> : vector<2x1xf32>
    %78 = vector.multi_reduction <add>, %77, %cst_65 [2] : vector<2x1x40xf32> to vector<2x1xf32>
    %79 = vector.shape_cast %78 : vector<2x1xf32> to vector<2x1x1xf32>
    %80 = vector.broadcast %79 : vector<2x1x1xf32> to vector<2x1x40xf32>
    %81 = arith.divf %77, %80 : vector<2x1x40xf32>
    %82 = arith.truncf %81 : vector<2x1x40xf32> to vector<2x1x40xbf16>
    %83 = arith.truncf %66 : vector<2x40x128xf32> to vector<2x40x128xbf16>
    "tpu.trace_start"() <{level = 10 : i32, message = "bqs,bsd->bqd"}> : () -> ()
    %cst_66 = arith.constant dense<0.000000e+00> : vector<2x1x128xf32>
    %84 = tpu.matmul %82, %83, %cst_66 {dimension_numbers = #tpu.dot_dimension_numbers<[2], [1], [1], [2], [0, 0, 0, 1, 1, 2], [0], [0]>} : vector<2x1x40xbf16>, vector<2x40x128xbf16>, vector<2x1x128xf32> -> vector<2x1x128xf32>
    "tpu.trace_stop"() : () -> ()
    %85 = vector.shape_cast %84 : vector<2x1x128xf32> to vector<2x128xf32>
    %86 = arith.truncf %85 : vector<2x128xf32> to vector<2x128xbf16>
    %cst_67 = arith.constant dense<0.000000e+00> : vector<2x128xf32>
    %87 = tpu.matmul %86, %13, %cst_67 {dimension_numbers = #tpu.dot_dimension_numbers<[1], [0], [0], [1], [0, 0, 1, 1], [], []>} : vector<2x128xbf16>, vector<128x128xbf16>, vector<2x128xf32> -> vector<2x128xf32>
    %88 = arith.truncf %87 : vector<2x128xf32> to vector<2x128xbf16>
    %cst_68 = arith.constant dense<0.000000e+00> : vector<2x384xf32>
    %89 = tpu.matmul %88, %11, %cst_68 {dimension_numbers = #tpu.dot_dimension_numbers<[1], [0], [0], [1], [0, 0, 1, 1], [], []>} : vector<2x128xbf16>, vector<128x384xbf16>, vector<2x384xf32> -> vector<2x384xf32>
    %90 = vector.extract_strided_slice %89 {offsets = [0, 0], sizes = [2, 128], strides = [1, 1]} : vector<2x384xf32> to vector<2x128xf32>
    %91 = vector.extract_strided_slice %89 {offsets = [0, 128], sizes = [2, 128], strides = [1, 1]} : vector<2x384xf32> to vector<2x128xf32>
    %92 = vector.extract_strided_slice %89 {offsets = [0, 256], sizes = [2, 128], strides = [1, 1]} : vector<2x384xf32> to vector<2x128xf32>
    %c0_69 = arith.constant 0 : index
    %c0_70 = arith.constant 0 : index
    %c34 = arith.constant 34 : index
    %c0_71 = arith.constant 0 : index
    %93 = vector.load %arg6[%c0_69, %c0_70, %c34, %c0_71] : memref<2x1x40x128xf32, #tpu.memory_space<vmem>>, vector<2x1x1x128xf32>
    %94 = vector.shape_cast %93 : vector<2x1x1x128xf32> to vector<2x128xf32>
    %95 = vector.shape_cast %91 : vector<2x128xf32> to vector<2x1x1x128xf32>
    tpu.vector_store %arg6[%c0_69, %c0_70, %c34, %c0_71], %95 {strides = array<i32>} : memref<2x1x40x128xf32, #tpu.memory_space<vmem>>, vector<2x1x1x128xf32>,
    %c0_72 = arith.constant 0 : index
    %c0_73 = arith.constant 0 : index
    %c34_74 = arith.constant 34 : index
    %c0_75 = arith.constant 0 : index
    %96 = vector.load %arg7[%c0_72, %c0_73, %c34_74, %c0_75] : memref<2x1x40x128xf32, #tpu.memory_space<vmem>>, vector<2x1x1x128xf32>
    %97 = vector.shape_cast %96 : vector<2x1x1x128xf32> to vector<2x128xf32>
    %98 = vector.shape_cast %92 : vector<2x128xf32> to vector<2x1x1x128xf32>
    tpu.vector_store %arg7[%c0_72, %c0_73, %c34_74, %c0_75], %98 {strides = array<i32>} : memref<2x1x40x128xf32, #tpu.memory_space<vmem>>, vector<2x1x1x128xf32>,
    %c0_76 = arith.constant 0 : index
    %c0_77 = arith.constant 0 : index
    %c0_78 = arith.constant 0 : index
    %c0_79 = arith.constant 0 : index
    %99 = vector.load %arg6[%c0_76, %c0_77, %c0_78, %c0_79] : memref<2x1x40x128xf32, #tpu.memory_space<vmem>>, vector<2x1x40x128xf32>
    %100 = vector.shape_cast %99 : vector<2x1x40x128xf32> to vector<2x40x128xf32>
    %c0_80 = arith.constant 0 : index
    %c0_81 = arith.constant 0 : index
    %c0_82 = arith.constant 0 : index
    %c0_83 = arith.constant 0 : index
    %101 = vector.load %arg7[%c0_80, %c0_81, %c0_82, %c0_83] : memref<2x1x40x128xf32, #tpu.memory_space<vmem>>, vector<2x1x40x128xf32>
    %102 = vector.shape_cast %101 : vector<2x1x40x128xf32> to vector<2x40x128xf32>
    %103 = vector.shape_cast %90 : vector<2x128xf32> to vector<2x1x128xf32>
    %104 = arith.truncf %103 : vector<2x1x128xf32> to vector<2x1x128xbf16>
    %105 = arith.truncf %100 : vector<2x40x128xf32> to vector<2x40x128xbf16>
    "tpu.trace_start"() <{level = 10 : i32, message = "bqd,bsd->bqs"}> : () -> ()
    %cst_84 = arith.constant dense<0.000000e+00> : vector<2x1x40xf32>
    %106 = tpu.matmul %104, %105, %cst_84 {dimension_numbers = #tpu.dot_dimension_numbers<[2], [2], [1], [1], [0, 0, 0, 1, 1, 1], [0], [0]>} : vector<2x1x128xbf16>, vector<2x40x128xbf16>, vector<2x1x40xf32> -> vector<2x1x40xf32>
    "tpu.trace_stop"() : () -> ()
    %cst_85 = arith.constant 1.250000e-01 : f32
    %107 = vector.broadcast %cst_85 : f32 to vector<2x1x40xf32>
    %108 = arith.mulf %106, %107 : vector<2x1x40xf32>
    %cst_86 = arith.constant dense<0xFF800000> : vector<2x1xf32>
    %109 = vector.multi_reduction <maximumf>, %108, %cst_86 [2] : vector<2x1x40xf32> to vector<2x1xf32>
    %110 = vector.shape_cast %109 : vector<2x1xf32> to vector<2x1x1xf32>
    %111 = vector.broadcast %110 : vector<2x1x1xf32> to vector<2x1x40xf32>
    %112 = arith.subf %108, %111 : vector<2x1x40xf32>
    %113 = math.exp %112 : vector<2x1x40xf32>
    %cst_87 = arith.constant dense<0.000000e+00> : vector<2x1xf32>
    %114 = vector.multi_reduction <add>, %113, %cst_87 [2] : vector<2x1x40xf32> to vector<2x1xf32>
    %115 = vector.shape_cast %114 : vector<2x1xf32> to vector<2x1x1xf32>
    %116 = vector.broadcast %115 : vector<2x1x1xf32> to vector<2x1x40xf32>
    %117 = arith.divf %113, %116 : vector<2x1x40xf32>
    %118 = arith.truncf %117 : vector<2x1x40xf32> to vector<2x1x40xbf16>
    %119 = arith.truncf %102 : vector<2x40x128xf32> to vector<2x40x128xbf16>
    "tpu.trace_start"() <{level = 10 : i32, message = "bqs,bsd->bqd"}> : () -> ()
    %cst_88 = arith.constant dense<0.000000e+00> : vector<2x1x128xf32>
    %120 = tpu.matmul %118, %119, %cst_88 {dimension_numbers = #tpu.dot_dimension_numbers<[2], [1], [1], [2], [0, 0, 0, 1, 1, 2], [0], [0]>} : vector<2x1x40xbf16>, vector<2x40x128xbf16>, vector<2x1x128xf32> -> vector<2x1x128xf32>
    "tpu.trace_stop"() : () -> ()
    %121 = vector.shape_cast %120 : vector<2x1x128xf32> to vector<2x128xf32>
    %122 = arith.truncf %121 : vector<2x128xf32> to vector<2x128xbf16>
    %cst_89 = arith.constant dense<0.000000e+00> : vector<2x128xf32>
    %123 = tpu.matmul %122, %13, %cst_89 {dimension_numbers = #tpu.dot_dimension_numbers<[1], [0], [0], [1], [0, 0, 1, 1], [], []>} : vector<2x128xbf16>, vector<128x128xbf16>, vector<2x128xf32> -> vector<2x128xf32>
    %124 = arith.truncf %123 : vector<2x128xf32> to vector<2x128xbf16>
    %cst_90 = arith.constant dense<0.000000e+00> : vector<2x384xf32>
    %125 = tpu.matmul %124, %11, %cst_90 {dimension_numbers = #tpu.dot_dimension_numbers<[1], [0], [0], [1], [0, 0, 1, 1], [], []>} : vector<2x128xbf16>, vector<128x384xbf16>, vector<2x384xf32> -> vector<2x384xf32>
    %126 = vector.extract_strided_slice %125 {offsets = [0, 0], sizes = [2, 128], strides = [1, 1]} : vector<2x384xf32> to vector<2x128xf32>
    %127 = vector.extract_strided_slice %125 {offsets = [0, 128], sizes = [2, 128], strides = [1, 1]} : vector<2x384xf32> to vector<2x128xf32>
    %128 = vector.extract_strided_slice %125 {offsets = [0, 256], sizes = [2, 128], strides = [1, 1]} : vector<2x384xf32> to vector<2x128xf32>
    %c0_91 = arith.constant 0 : index
    %c0_92 = arith.constant 0 : index
    %c35 = arith.constant 35 : index
    %c0_93 = arith.constant 0 : index
    %129 = vector.load %arg6[%c0_91, %c0_92, %c35, %c0_93] : memref<2x1x40x128xf32, #tpu.memory_space<vmem>>, vector<2x1x1x128xf32>
    %130 = vector.shape_cast %129 : vector<2x1x1x128xf32> to vector<2x128xf32>
    %131 = vector.shape_cast %127 : vector<2x128xf32> to vector<2x1x1x128xf32>
    tpu.vector_store %arg6[%c0_91, %c0_92, %c35, %c0_93], %131 {strides = array<i32>} : memref<2x1x40x128xf32, #tpu.memory_space<vmem>>, vector<2x1x1x128xf32>,
    %c0_94 = arith.constant 0 : index
    %c0_95 = arith.constant 0 : index
    %c35_96 = arith.constant 35 : index
    %c0_97 = arith.constant 0 : index
    %132 = vector.load %arg7[%c0_94, %c0_95, %c35_96, %c0_97] : memref<2x1x40x128xf32, #tpu.memory_space<vmem>>, vector<2x1x1x128xf32>
    %133 = vector.shape_cast %132 : vector<2x1x1x128xf32> to vector<2x128xf32>
    %134 = vector.shape_cast %128 : vector<2x128xf32> to vector<2x1x1x128xf32>
    tpu.vector_store %arg7[%c0_94, %c0_95, %c35_96, %c0_97], %134 {strides = array<i32>} : memref<2x1x40x128xf32, #tpu.memory_space<vmem>>, vector<2x1x1x128xf32>,
    %c0_98 = arith.constant 0 : index
    %c0_99 = arith.constant 0 : index
    %c0_100 = arith.constant 0 : index
    %c0_101 = arith.constant 0 : index
    %135 = vector.load %arg6[%c0_98, %c0_99, %c0_100, %c0_101] : memref<2x1x40x128xf32, #tpu.memory_space<vmem>>, vector<2x1x40x128xf32>
    %136 = vector.shape_cast %135 : vector<2x1x40x128xf32> to vector<2x40x128xf32>
    %c0_102 = arith.constant 0 : index
    %c0_103 = arith.constant 0 : index
    %c0_104 = arith.constant 0 : index
    %c0_105 = arith.constant 0 : index
    %137 = vector.load %arg7[%c0_102, %c0_103, %c0_104, %c0_105] : memref<2x1x40x128xf32, #tpu.memory_space<vmem>>, vector<2x1x40x128xf32>
    %138 = vector.shape_cast %137 : vector<2x1x40x128xf32> to vector<2x40x128xf32>
    %139 = vector.shape_cast %126 : vector<2x128xf32> to vector<2x1x128xf32>
    %140 = arith.truncf %139 : vector<2x1x128xf32> to vector<2x1x128xbf16>
    %141 = arith.truncf %136 : vector<2x40x128xf32> to vector<2x40x128xbf16>
    "tpu.trace_start"() <{level = 10 : i32, message = "bqd,bsd->bqs"}> : () -> ()
    %cst_106 = arith.constant dense<0.000000e+00> : vector<2x1x40xf32>
    %142 = tpu.matmul %140, %141, %cst_106 {dimension_numbers = #tpu.dot_dimension_numbers<[2], [2], [1], [1], [0, 0, 0, 1, 1, 1], [0], [0]>} : vector<2x1x128xbf16>, vector<2x40x128xbf16>, vector<2x1x40xf32> -> vector<2x1x40xf32>
    "tpu.trace_stop"() : () -> ()
    %cst_107 = arith.constant 1.250000e-01 : f32
    %143 = vector.broadcast %cst_107 : f32 to vector<2x1x40xf32>
    %144 = arith.mulf %142, %143 : vector<2x1x40xf32>
    %cst_108 = arith.constant dense<0xFF800000> : vector<2x1xf32>
    %145 = vector.multi_reduction <maximumf>, %144, %cst_108 [2] : vector<2x1x40xf32> to vector<2x1xf32>
    %146 = vector.shape_cast %145 : vector<2x1xf32> to vector<2x1x1xf32>
    %147 = vector.broadcast %146 : vector<2x1x1xf32> to vector<2x1x40xf32>
    %148 = arith.subf %144, %147 : vector<2x1x40xf32>
    %149 = math.exp %148 : vector<2x1x40xf32>
    %cst_109 = arith.constant dense<0.000000e+00> : vector<2x1xf32>
    %150 = vector.multi_reduction <add>, %149, %cst_109 [2] : vector<2x1x40xf32> to vector<2x1xf32>
    %151 = vector.shape_cast %150 : vector<2x1xf32> to vector<2x1x1xf32>
    %152 = vector.broadcast %151 : vector<2x1x1xf32> to vector<2x1x40xf32>
    %153 = arith.divf %149, %152 : vector<2x1x40xf32>
    %154 = arith.truncf %153 : vector<2x1x40xf32> to vector<2x1x40xbf16>
    %155 = arith.truncf %138 : vector<2x40x128xf32> to vector<2x40x128xbf16>
    "tpu.trace_start"() <{level = 10 : i32, message = "bqs,bsd->bqd"}> : () -> ()
    %cst_110 = arith.constant dense<0.000000e+00> : vector<2x1x128xf32>
    %156 = tpu.matmul %154, %155, %cst_110 {dimension_numbers = #tpu.dot_dimension_numbers<[2], [1], [1], [2], [0, 0, 0, 1, 1, 2], [0], [0]>} : vector<2x1x40xbf16>, vector<2x40x128xbf16>, vector<2x1x128xf32> -> vector<2x1x128xf32>
    "tpu.trace_stop"() : () -> ()
    %157 = vector.shape_cast %156 : vector<2x1x128xf32> to vector<2x128xf32>
    %158 = arith.truncf %157 : vector<2x128xf32> to vector<2x128xbf16>
    %cst_111 = arith.constant dense<0.000000e+00> : vector<2x128xf32>
    %159 = tpu.matmul %158, %13, %cst_111 {dimension_numbers = #tpu.dot_dimension_numbers<[1], [0], [0], [1], [0, 0, 1, 1], [], []>} : vector<2x128xbf16>, vector<128x128xbf16>, vector<2x128xf32> -> vector<2x128xf32>
    %160 = arith.truncf %159 : vector<2x128xf32> to vector<2x128xbf16>
    %cst_112 = arith.constant dense<0.000000e+00> : vector<2x384xf32>
    %161 = tpu.matmul %160, %11, %cst_112 {dimension_numbers = #tpu.dot_dimension_numbers<[1], [0], [0], [1], [0, 0, 1, 1], [], []>} : vector<2x128xbf16>, vector<128x384xbf16>, vector<2x384xf32> -> vector<2x384xf32>
    %162 = vector.extract_strided_slice %161 {offsets = [0, 0], sizes = [2, 128], strides = [1, 1]} : vector<2x384xf32> to vector<2x128xf32>
    %163 = vector.extract_strided_slice %161 {offsets = [0, 128], sizes = [2, 128], strides = [1, 1]} : vector<2x384xf32> to vector<2x128xf32>
    %164 = vector.extract_strided_slice %161 {offsets = [0, 256], sizes = [2, 128], strides = [1, 1]} : vector<2x384xf32> to vector<2x128xf32>
    %c0_113 = arith.constant 0 : index
    %c0_114 = arith.constant 0 : index
    %c36 = arith.constant 36 : index
    %c0_115 = arith.constant 0 : index
    %165 = vector.load %arg6[%c0_113, %c0_114, %c36, %c0_115] : memref<2x1x40x128xf32, #tpu.memory_space<vmem>>, vector<2x1x1x128xf32>
    %166 = vector.shape_cast %165 : vector<2x1x1x128xf32> to vector<2x128xf32>
    %167 = vector.shape_cast %163 : vector<2x128xf32> to vector<2x1x1x128xf32>
    tpu.vector_store %arg6[%c0_113, %c0_114, %c36, %c0_115], %167 {strides = array<i32>} : memref<2x1x40x128xf32, #tpu.memory_space<vmem>>, vector<2x1x1x128xf32>,
    %c0_116 = arith.constant 0 : index
    %c0_117 = arith.constant 0 : index
    %c36_118 = arith.constant 36 : index
    %c0_119 = arith.constant 0 : index
    %168 = vector.load %arg7[%c0_116, %c0_117, %c36_118, %c0_119] : memref<2x1x40x128xf32, #tpu.memory_space<vmem>>, vector<2x1x1x128xf32>
    %169 = vector.shape_cast %168 : vector<2x1x1x128xf32> to vector<2x128xf32>
    %170 = vector.shape_cast %164 : vector<2x128xf32> to vector<2x1x1x128xf32>
    tpu.vector_store %arg7[%c0_116, %c0_117, %c36_118, %c0_119], %170 {strides = array<i32>} : memref<2x1x40x128xf32, #tpu.memory_space<vmem>>, vector<2x1x1x128xf32>,
    %c0_120 = arith.constant 0 : index
    %c0_121 = arith.constant 0 : index
    %c0_122 = arith.constant 0 : index
    %c0_123 = arith.constant 0 : index
    %171 = vector.load %arg6[%c0_120, %c0_121, %c0_122, %c0_123] : memref<2x1x40x128xf32, #tpu.memory_space<vmem>>, vector<2x1x40x128xf32>
    %172 = vector.shape_cast %171 : vector<2x1x40x128xf32> to vector<2x40x128xf32>
    %c0_124 = arith.constant 0 : index
    %c0_125 = arith.constant 0 : index
    %c0_126 = arith.constant 0 : index
    %c0_127 = arith.constant 0 : index
    %173 = vector.load %arg7[%c0_124, %c0_125, %c0_126, %c0_127] : memref<2x1x40x128xf32, #tpu.memory_space<vmem>>, vector<2x1x40x128xf32>
    %174 = vector.shape_cast %173 : vector<2x1x40x128xf32> to vector<2x40x128xf32>
    %175 = vector.shape_cast %162 : vector<2x128xf32> to vector<2x1x128xf32>
    %176 = arith.truncf %175 : vector<2x1x128xf32> to vector<2x1x128xbf16>
    %177 = arith.truncf %172 : vector<2x40x128xf32> to vector<2x40x128xbf16>
    "tpu.trace_start"() <{level = 10 : i32, message = "bqd,bsd->bqs"}> : () -> ()
    %cst_128 = arith.constant dense<0.000000e+00> : vector<2x1x40xf32>
    %178 = tpu.matmul %176, %177, %cst_128 {dimension_numbers = #tpu.dot_dimension_numbers<[2], [2], [1], [1], [0, 0, 0, 1, 1, 1], [0], [0]>} : vector<2x1x128xbf16>, vector<2x40x128xbf16>, vector<2x1x40xf32> -> vector<2x1x40xf32>
    "tpu.trace_stop"() : () -> ()
    %cst_129 = arith.constant 1.250000e-01 : f32
    %179 = vector.broadcast %cst_129 : f32 to vector<2x1x40xf32>
    %180 = arith.mulf %178, %179 : vector<2x1x40xf32>
    %cst_130 = arith.constant dense<0xFF800000> : vector<2x1xf32>
    %181 = vector.multi_reduction <maximumf>, %180, %cst_130 [2] : vector<2x1x40xf32> to vector<2x1xf32>
    %182 = vector.shape_cast %181 : vector<2x1xf32> to vector<2x1x1xf32>
    %183 = vector.broadcast %182 : vector<2x1x1xf32> to vector<2x1x40xf32>
    %184 = arith.subf %180, %183 : vector<2x1x40xf32>
    %185 = math.exp %184 : vector<2x1x40xf32>
    %cst_131 = arith.constant dense<0.000000e+00> : vector<2x1xf32>
    %186 = vector.multi_reduction <add>, %185, %cst_131 [2] : vector<2x1x40xf32> to vector<2x1xf32>
    %187 = vector.shape_cast %186 : vector<2x1xf32> to vector<2x1x1xf32>
    %188 = vector.broadcast %187 : vector<2x1x1xf32> to vector<2x1x40xf32>
    %189 = arith.divf %185, %188 : vector<2x1x40xf32>
    %190 = arith.truncf %189 : vector<2x1x40xf32> to vector<2x1x40xbf16>
    %191 = arith.truncf %174 : vector<2x40x128xf32> to vector<2x40x128xbf16>
    "tpu.trace_start"() <{level = 10 : i32, message = "bqs,bsd->bqd"}> : () -> ()
    %cst_132 = arith.constant dense<0.000000e+00> : vector<2x1x128xf32>
    %192 = tpu.matmul %190, %191, %cst_132 {dimension_numbers = #tpu.dot_dimension_numbers<[2], [1], [1], [2], [0, 0, 0, 1, 1, 2], [0], [0]>} : vector<2x1x40xbf16>, vector<2x40x128xbf16>, vector<2x1x128xf32> -> vector<2x1x128xf32>
    "tpu.trace_stop"() : () -> ()
    %193 = vector.shape_cast %192 : vector<2x1x128xf32> to vector<2x128xf32>
    %194 = arith.truncf %193 : vector<2x128xf32> to vector<2x128xbf16>
    %cst_133 = arith.constant dense<0.000000e+00> : vector<2x128xf32>
    %195 = tpu.matmul %194, %13, %cst_133 {dimension_numbers = #tpu.dot_dimension_numbers<[1], [0], [0], [1], [0, 0, 1, 1], [], []>} : vector<2x128xbf16>, vector<128x128xbf16>, vector<2x128xf32> -> vector<2x128xf32>
    %196 = arith.truncf %195 : vector<2x128xf32> to vector<2x128xbf16>
    %cst_134 = arith.constant dense<0.000000e+00> : vector<2x384xf32>
    %197 = tpu.matmul %196, %11, %cst_134 {dimension_numbers = #tpu.dot_dimension_numbers<[1], [0], [0], [1], [0, 0, 1, 1], [], []>} : vector<2x128xbf16>, vector<128x384xbf16>, vector<2x384xf32> -> vector<2x384xf32>
    %198 = vector.extract_strided_slice %197 {offsets = [0, 0], sizes = [2, 128], strides = [1, 1]} : vector<2x384xf32> to vector<2x128xf32>
    %199 = vector.extract_strided_slice %197 {offsets = [0, 128], sizes = [2, 128], strides = [1, 1]} : vector<2x384xf32> to vector<2x128xf32>
    %200 = vector.extract_strided_slice %197 {offsets = [0, 256], sizes = [2, 128], strides = [1, 1]} : vector<2x384xf32> to vector<2x128xf32>
    %c0_135 = arith.constant 0 : index
    %c0_136 = arith.constant 0 : index
    %c37 = arith.constant 37 : index
    %c0_137 = arith.constant 0 : index
    %201 = vector.load %arg6[%c0_135, %c0_136, %c37, %c0_137] : memref<2x1x40x128xf32, #tpu.memory_space<vmem>>, vector<2x1x1x128xf32>
    %202 = vector.shape_cast %201 : vector<2x1x1x128xf32> to vector<2x128xf32>
    %203 = vector.shape_cast %199 : vector<2x128xf32> to vector<2x1x1x128xf32>
    tpu.vector_store %arg6[%c0_135, %c0_136, %c37, %c0_137], %203 {strides = array<i32>} : memref<2x1x40x128xf32, #tpu.memory_space<vmem>>, vector<2x1x1x128xf32>,
    %c0_138 = arith.constant 0 : index
    %c0_139 = arith.constant 0 : index
    %c37_140 = arith.constant 37 : index
    %c0_141 = arith.constant 0 : index
    %204 = vector.load %arg7[%c0_138, %c0_139, %c37_140, %c0_141] : memref<2x1x40x128xf32, #tpu.memory_space<vmem>>, vector<2x1x1x128xf32>
    %205 = vector.shape_cast %204 : vector<2x1x1x128xf32> to vector<2x128xf32>
    %206 = vector.shape_cast %200 : vector<2x128xf32> to vector<2x1x1x128xf32>
    tpu.vector_store %arg7[%c0_138, %c0_139, %c37_140, %c0_141], %206 {strides = array<i32>} : memref<2x1x40x128xf32, #tpu.memory_space<vmem>>, vector<2x1x1x128xf32>,
    %c0_142 = arith.constant 0 : index
    %c0_143 = arith.constant 0 : index
    %c0_144 = arith.constant 0 : index
    %c0_145 = arith.constant 0 : index
    %207 = vector.load %arg6[%c0_142, %c0_143, %c0_144, %c0_145] : memref<2x1x40x128xf32, #tpu.memory_space<vmem>>, vector<2x1x40x128xf32>
    %208 = vector.shape_cast %207 : vector<2x1x40x128xf32> to vector<2x40x128xf32>
    %c0_146 = arith.constant 0 : index
    %c0_147 = arith.constant 0 : index
    %c0_148 = arith.constant 0 : index
    %c0_149 = arith.constant 0 : index
    %209 = vector.load %arg7[%c0_146, %c0_147, %c0_148, %c0_149] : memref<2x1x40x128xf32, #tpu.memory_space<vmem>>, vector<2x1x40x128xf32>
    %210 = vector.shape_cast %209 : vector<2x1x40x128xf32> to vector<2x40x128xf32>
    %211 = vector.shape_cast %198 : vector<2x128xf32> to vector<2x1x128xf32>
    %212 = arith.truncf %211 : vector<2x1x128xf32> to vector<2x1x128xbf16>
    %213 = arith.truncf %208 : vector<2x40x128xf32> to vector<2x40x128xbf16>
    "tpu.trace_start"() <{level = 10 : i32, message = "bqd,bsd->bqs"}> : () -> ()
    %cst_150 = arith.constant dense<0.000000e+00> : vector<2x1x40xf32>
    %214 = tpu.matmul %212, %213, %cst_150 {dimension_numbers = #tpu.dot_dimension_numbers<[2], [2], [1], [1], [0, 0, 0, 1, 1, 1], [0], [0]>} : vector<2x1x128xbf16>, vector<2x40x128xbf16>, vector<2x1x40xf32> -> vector<2x1x40xf32>
    "tpu.trace_stop"() : () -> ()
    %cst_151 = arith.constant 1.250000e-01 : f32
    %215 = vector.broadcast %cst_151 : f32 to vector<2x1x40xf32>
    %216 = arith.mulf %214, %215 : vector<2x1x40xf32>
    %cst_152 = arith.constant dense<0xFF800000> : vector<2x1xf32>
    %217 = vector.multi_reduction <maximumf>, %216, %cst_152 [2] : vector<2x1x40xf32> to vector<2x1xf32>
    %218 = vector.shape_cast %217 : vector<2x1xf32> to vector<2x1x1xf32>
    %219 = vector.broadcast %218 : vector<2x1x1xf32> to vector<2x1x40xf32>
    %220 = arith.subf %216, %219 : vector<2x1x40xf32>
    %221 = math.exp %220 : vector<2x1x40xf32>
    %cst_153 = arith.constant dense<0.000000e+00> : vector<2x1xf32>
    %222 = vector.multi_reduction <add>, %221, %cst_153 [2] : vector<2x1x40xf32> to vector<2x1xf32>
    %223 = vector.shape_cast %222 : vector<2x1xf32> to vector<2x1x1xf32>
    %224 = vector.broadcast %223 : vector<2x1x1xf32> to vector<2x1x40xf32>
    %225 = arith.divf %221, %224 : vector<2x1x40xf32>
    %226 = arith.truncf %225 : vector<2x1x40xf32> to vector<2x1x40xbf16>
    %227 = arith.truncf %210 : vector<2x40x128xf32> to vector<2x40x128xbf16>
    "tpu.trace_start"() <{level = 10 : i32, message = "bqs,bsd->bqd"}> : () -> ()
    %cst_154 = arith.constant dense<0.000000e+00> : vector<2x1x128xf32>
    %228 = tpu.matmul %226, %227, %cst_154 {dimension_numbers = #tpu.dot_dimension_numbers<[2], [1], [1], [2], [0, 0, 0, 1, 1, 2], [0], [0]>} : vector<2x1x40xbf16>, vector<2x40x128xbf16>, vector<2x1x128xf32> -> vector<2x1x128xf32>
    "tpu.trace_stop"() : () -> ()
    %229 = vector.shape_cast %228 : vector<2x1x128xf32> to vector<2x128xf32>
    %230 = arith.truncf %229 : vector<2x128xf32> to vector<2x128xbf16>
    %cst_155 = arith.constant dense<0.000000e+00> : vector<2x128xf32>
    %231 = tpu.matmul %230, %13, %cst_155 {dimension_numbers = #tpu.dot_dimension_numbers<[1], [0], [0], [1], [0, 0, 1, 1], [], []>} : vector<2x128xbf16>, vector<128x128xbf16>, vector<2x128xf32> -> vector<2x128xf32>
    %232 = arith.truncf %231 : vector<2x128xf32> to vector<2x128xbf16>
    %cst_156 = arith.constant dense<0.000000e+00> : vector<2x384xf32>
    %233 = tpu.matmul %232, %11, %cst_156 {dimension_numbers = #tpu.dot_dimension_numbers<[1], [0], [0], [1], [0, 0, 1, 1], [], []>} : vector<2x128xbf16>, vector<128x384xbf16>, vector<2x384xf32> -> vector<2x384xf32>
    %234 = vector.extract_strided_slice %233 {offsets = [0, 0], sizes = [2, 128], strides = [1, 1]} : vector<2x384xf32> to vector<2x128xf32>
    %235 = vector.extract_strided_slice %233 {offsets = [0, 128], sizes = [2, 128], strides = [1, 1]} : vector<2x384xf32> to vector<2x128xf32>
    %236 = vector.extract_strided_slice %233 {offsets = [0, 256], sizes = [2, 128], strides = [1, 1]} : vector<2x384xf32> to vector<2x128xf32>
    %c0_157 = arith.constant 0 : index
    %c0_158 = arith.constant 0 : index
    %c38 = arith.constant 38 : index
    %c0_159 = arith.constant 0 : index
    %237 = vector.load %arg6[%c0_157, %c0_158, %c38, %c0_159] : memref<2x1x40x128xf32, #tpu.memory_space<vmem>>, vector<2x1x1x128xf32>
    %238 = vector.shape_cast %237 : vector<2x1x1x128xf32> to vector<2x128xf32>
    %239 = vector.shape_cast %235 : vector<2x128xf32> to vector<2x1x1x128xf32>
    tpu.vector_store %arg6[%c0_157, %c0_158, %c38, %c0_159], %239 {strides = array<i32>} : memref<2x1x40x128xf32, #tpu.memory_space<vmem>>, vector<2x1x1x128xf32>,
    %c0_160 = arith.constant 0 : index
    %c0_161 = arith.constant 0 : index
    %c38_162 = arith.constant 38 : index
    %c0_163 = arith.constant 0 : index
    %240 = vector.load %arg7[%c0_160, %c0_161, %c38_162, %c0_163] : memref<2x1x40x128xf32, #tpu.memory_space<vmem>>, vector<2x1x1x128xf32>
    %241 = vector.shape_cast %240 : vector<2x1x1x128xf32> to vector<2x128xf32>
    %242 = vector.shape_cast %236 : vector<2x128xf32> to vector<2x1x1x128xf32>
    tpu.vector_store %arg7[%c0_160, %c0_161, %c38_162, %c0_163], %242 {strides = array<i32>} : memref<2x1x40x128xf32, #tpu.memory_space<vmem>>, vector<2x1x1x128xf32>,
    %c0_164 = arith.constant 0 : index
    %c0_165 = arith.constant 0 : index
    %c0_166 = arith.constant 0 : index
    %c0_167 = arith.constant 0 : index
    %243 = vector.load %arg6[%c0_164, %c0_165, %c0_166, %c0_167] : memref<2x1x40x128xf32, #tpu.memory_space<vmem>>, vector<2x1x40x128xf32>
    %244 = vector.shape_cast %243 : vector<2x1x40x128xf32> to vector<2x40x128xf32>
    %c0_168 = arith.constant 0 : index
    %c0_169 = arith.constant 0 : index
    %c0_170 = arith.constant 0 : index
    %c0_171 = arith.constant 0 : index
    %245 = vector.load %arg7[%c0_168, %c0_169, %c0_170, %c0_171] : memref<2x1x40x128xf32, #tpu.memory_space<vmem>>, vector<2x1x40x128xf32>
    %246 = vector.shape_cast %245 : vector<2x1x40x128xf32> to vector<2x40x128xf32>
    %247 = vector.shape_cast %234 : vector<2x128xf32> to vector<2x1x128xf32>
    %248 = arith.truncf %247 : vector<2x1x128xf32> to vector<2x1x128xbf16>
    %249 = arith.truncf %244 : vector<2x40x128xf32> to vector<2x40x128xbf16>
    "tpu.trace_start"() <{level = 10 : i32, message = "bqd,bsd->bqs"}> : () -> ()
    %cst_172 = arith.constant dense<0.000000e+00> : vector<2x1x40xf32>
    %250 = tpu.matmul %248, %249, %cst_172 {dimension_numbers = #tpu.dot_dimension_numbers<[2], [2], [1], [1], [0, 0, 0, 1, 1, 1], [0], [0]>} : vector<2x1x128xbf16>, vector<2x40x128xbf16>, vector<2x1x40xf32> -> vector<2x1x40xf32>
    "tpu.trace_stop"() : () -> ()
    %cst_173 = arith.constant 1.250000e-01 : f32
    %251 = vector.broadcast %cst_173 : f32 to vector<2x1x40xf32>
    %252 = arith.mulf %250, %251 : vector<2x1x40xf32>
    %cst_174 = arith.constant dense<0xFF800000> : vector<2x1xf32>
    %253 = vector.multi_reduction <maximumf>, %252, %cst_174 [2] : vector<2x1x40xf32> to vector<2x1xf32>
    %254 = vector.shape_cast %253 : vector<2x1xf32> to vector<2x1x1xf32>
    %255 = vector.broadcast %254 : vector<2x1x1xf32> to vector<2x1x40xf32>
    %256 = arith.subf %252, %255 : vector<2x1x40xf32>
    %257 = math.exp %256 : vector<2x1x40xf32>
    %cst_175 = arith.constant dense<0.000000e+00> : vector<2x1xf32>
    %258 = vector.multi_reduction <add>, %257, %cst_175 [2] : vector<2x1x40xf32> to vector<2x1xf32>
    %259 = vector.shape_cast %258 : vector<2x1xf32> to vector<2x1x1xf32>
    %260 = vector.broadcast %259 : vector<2x1x1xf32> to vector<2x1x40xf32>
    %261 = arith.divf %257, %260 : vector<2x1x40xf32>
    %262 = arith.truncf %261 : vector<2x1x40xf32> to vector<2x1x40xbf16>
    %263 = arith.truncf %246 : vector<2x40x128xf32> to vector<2x40x128xbf16>
    "tpu.trace_start"() <{level = 10 : i32, message = "bqs,bsd->bqd"}> : () -> ()
    %cst_176 = arith.constant dense<0.000000e+00> : vector<2x1x128xf32>
    %264 = tpu.matmul %262, %263, %cst_176 {dimension_numbers = #tpu.dot_dimension_numbers<[2], [1], [1], [2], [0, 0, 0, 1, 1, 2], [0], [0]>} : vector<2x1x40xbf16>, vector<2x40x128xbf16>, vector<2x1x128xf32> -> vector<2x1x128xf32>
    "tpu.trace_stop"() : () -> ()
    %265 = vector.shape_cast %264 : vector<2x1x128xf32> to vector<2x128xf32>
    %266 = arith.truncf %265 : vector<2x128xf32> to vector<2x128xbf16>
    %cst_177 = arith.constant dense<0.000000e+00> : vector<2x128xf32>
    %267 = tpu.matmul %266, %13, %cst_177 {dimension_numbers = #tpu.dot_dimension_numbers<[1], [0], [0], [1], [0, 0, 1, 1], [], []>} : vector<2x128xbf16>, vector<128x128xbf16>, vector<2x128xf32> -> vector<2x128xf32>
    %268 = arith.truncf %267 : vector<2x128xf32> to vector<2x128xbf16>
    %cst_178 = arith.constant dense<0.000000e+00> : vector<2x384xf32>
    %269 = tpu.matmul %268, %11, %cst_178 {dimension_numbers = #tpu.dot_dimension_numbers<[1], [0], [0], [1], [0, 0, 1, 1], [], []>} : vector<2x128xbf16>, vector<128x384xbf16>, vector<2x384xf32> -> vector<2x384xf32>
    %270 = vector.extract_strided_slice %269 {offsets = [0, 0], sizes = [2, 128], strides = [1, 1]} : vector<2x384xf32> to vector<2x128xf32>
    %271 = vector.extract_strided_slice %269 {offsets = [0, 128], sizes = [2, 128], strides = [1, 1]} : vector<2x384xf32> to vector<2x128xf32>
    %272 = vector.extract_strided_slice %269 {offsets = [0, 256], sizes = [2, 128], strides = [1, 1]} : vector<2x384xf32> to vector<2x128xf32>
    %c0_179 = arith.constant 0 : index
    %c0_180 = arith.constant 0 : index
    %c39 = arith.constant 39 : index
    %c0_181 = arith.constant 0 : index
    %273 = vector.load %arg6[%c0_179, %c0_180, %c39, %c0_181] : memref<2x1x40x128xf32, #tpu.memory_space<vmem>>, vector<2x1x1x128xf32>
    %274 = vector.shape_cast %273 : vector<2x1x1x128xf32> to vector<2x128xf32>
    %275 = vector.shape_cast %271 : vector<2x128xf32> to vector<2x1x1x128xf32>
    tpu.vector_store %arg6[%c0_179, %c0_180, %c39, %c0_181], %275 {strides = array<i32>} : memref<2x1x40x128xf32, #tpu.memory_space<vmem>>, vector<2x1x1x128xf32>,
    %c0_182 = arith.constant 0 : index
    %c0_183 = arith.constant 0 : index
    %c39_184 = arith.constant 39 : index
    %c0_185 = arith.constant 0 : index
    %276 = vector.load %arg7[%c0_182, %c0_183, %c39_184, %c0_185] : memref<2x1x40x128xf32, #tpu.memory_space<vmem>>, vector<2x1x1x128xf32>
    %277 = vector.shape_cast %276 : vector<2x1x1x128xf32> to vector<2x128xf32>
    %278 = vector.shape_cast %272 : vector<2x128xf32> to vector<2x1x1x128xf32>
    tpu.vector_store %arg7[%c0_182, %c0_183, %c39_184, %c0_185], %278 {strides = array<i32>} : memref<2x1x40x128xf32, #tpu.memory_space<vmem>>, vector<2x1x1x128xf32>,
    %c0_186 = arith.constant 0 : index
    %c0_187 = arith.constant 0 : index
    %c0_188 = arith.constant 0 : index
    %c0_189 = arith.constant 0 : index
    %279 = vector.load %arg6[%c0_186, %c0_187, %c0_188, %c0_189] : memref<2x1x40x128xf32, #tpu.memory_space<vmem>>, vector<2x1x40x128xf32>
    %280 = vector.shape_cast %279 : vector<2x1x40x128xf32> to vector<2x40x128xf32>
    %c0_190 = arith.constant 0 : index
    %c0_191 = arith.constant 0 : index
    %c0_192 = arith.constant 0 : index
    %c0_193 = arith.constant 0 : index
    %281 = vector.load %arg7[%c0_190, %c0_191, %c0_192, %c0_193] : memref<2x1x40x128xf32, #tpu.memory_space<vmem>>, vector<2x1x40x128xf32>
    %282 = vector.shape_cast %281 : vector<2x1x40x128xf32> to vector<2x40x128xf32>
    %283 = vector.shape_cast %270 : vector<2x128xf32> to vector<2x1x128xf32>
    %284 = arith.truncf %283 : vector<2x1x128xf32> to vector<2x1x128xbf16>
    %285 = arith.truncf %280 : vector<2x40x128xf32> to vector<2x40x128xbf16>
    "tpu.trace_start"() <{level = 10 : i32, message = "bqd,bsd->bqs"}> : () -> ()
    %cst_194 = arith.constant dense<0.000000e+00> : vector<2x1x40xf32>
    %286 = tpu.matmul %284, %285, %cst_194 {dimension_numbers = #tpu.dot_dimension_numbers<[2], [2], [1], [1], [0, 0, 0, 1, 1, 1], [0], [0]>} : vector<2x1x128xbf16>, vector<2x40x128xbf16>, vector<2x1x40xf32> -> vector<2x1x40xf32>
    "tpu.trace_stop"() : () -> ()
    %cst_195 = arith.constant 1.250000e-01 : f32
    %287 = vector.broadcast %cst_195 : f32 to vector<2x1x40xf32>
    %288 = arith.mulf %286, %287 : vector<2x1x40xf32>
    %cst_196 = arith.constant dense<0xFF800000> : vector<2x1xf32>
    %289 = vector.multi_reduction <maximumf>, %288, %cst_196 [2] : vector<2x1x40xf32> to vector<2x1xf32>
    %290 = vector.shape_cast %289 : vector<2x1xf32> to vector<2x1x1xf32>
    %291 = vector.broadcast %290 : vector<2x1x1xf32> to vector<2x1x40xf32>
    %292 = arith.subf %288, %291 : vector<2x1x40xf32>
    %293 = math.exp %292 : vector<2x1x40xf32>
    %cst_197 = arith.constant dense<0.000000e+00> : vector<2x1xf32>
    %294 = vector.multi_reduction <add>, %293, %cst_197 [2] : vector<2x1x40xf32> to vector<2x1xf32>
    %295 = vector.shape_cast %294 : vector<2x1xf32> to vector<2x1x1xf32>
    %296 = vector.broadcast %295 : vector<2x1x1xf32> to vector<2x1x40xf32>
    %297 = arith.divf %293, %296 : vector<2x1x40xf32>
    %298 = arith.truncf %297 : vector<2x1x40xf32> to vector<2x1x40xbf16>
    %299 = arith.truncf %282 : vector<2x40x128xf32> to vector<2x40x128xbf16>
    "tpu.trace_start"() <{level = 10 : i32, message = "bqs,bsd->bqd"}> : () -> ()
    %cst_198 = arith.constant dense<0.000000e+00> : vector<2x1x128xf32>
    %300 = tpu.matmul %298, %299, %cst_198 {dimension_numbers = #tpu.dot_dimension_numbers<[2], [1], [1], [2], [0, 0, 0, 1, 1, 2], [0], [0]>} : vector<2x1x40xbf16>, vector<2x40x128xbf16>, vector<2x1x128xf32> -> vector<2x1x128xf32>
    "tpu.trace_stop"() : () -> ()
    %301 = vector.shape_cast %300 : vector<2x1x128xf32> to vector<2x128xf32>
    %302 = arith.truncf %301 : vector<2x128xf32> to vector<2x128xbf16>
    %cst_199 = arith.constant dense<0.000000e+00> : vector<2x128xf32>
    %303 = tpu.matmul %302, %13, %cst_199 {dimension_numbers = #tpu.dot_dimension_numbers<[1], [0], [0], [1], [0, 0, 1, 1], [], []>} : vector<2x128xbf16>, vector<128x128xbf16>, vector<2x128xf32> -> vector<2x128xf32>
    %c0_200 = arith.constant 0 : index
    %c0_201 = arith.constant 0 : index
    %c0_202 = arith.constant 0 : index
    %c0_203 = arith.constant 0 : index
    %304 = vector.load %arg8[%c0_200, %c0_201, %c0_202, %c0_203] : memref<2x1x1x128xf32, #tpu.memory_space<vmem>>, vector<2x1x1x128xf32>
    %305 = vector.shape_cast %304 : vector<2x1x1x128xf32> to vector<2x128xf32>
    %306 = vector.shape_cast %303 : vector<2x128xf32> to vector<2x1x1x128xf32>
    tpu.vector_store %arg8[%c0_200, %c0_201, %c0_202, %c0_203], %306 {strides = array<i32>} : memref<2x1x1x128xf32, #tpu.memory_space<vmem>>, vector<2x1x1x128xf32>,
    return
  }
  func.func @transform_0(%arg0: i32) -> (i32, i32, i32, i32) {
    %c0_i32 = arith.constant 0 : i32
    %c0_i32_0 = arith.constant 0 : i32
    %c0_i32_1 = arith.constant 0 : i32
    %c0_i32_2 = arith.constant 0 : i32
    return %c0_i32, %arg0, %c0_i32_0, %c0_i32_1 : i32, i32, i32, i32
  }
  func.func @transform_1(%arg0: i32) -> (i32, i32, i32, i32) {
    %c0_i32 = arith.constant 0 : i32
    %c0_i32_0 = arith.constant 0 : i32
    %c0_i32_1 = arith.constant 0 : i32
    %c0_i32_2 = arith.constant 0 : i32
    return %c0_i32, %arg0, %c0_i32_0, %c0_i32_1 : i32, i32, i32, i32
  }
  func.func @transform_2(%arg0: i32) -> (i32, i32, i32, i32) {
    %c0_i32 = arith.constant 0 : i32
    %c0_i32_0 = arith.constant 0 : i32
    %c0_i32_1 = arith.constant 0 : i32
    %c0_i32_2 = arith.constant 0 : i32
    return %c0_i32, %arg0, %c0_i32_0, %c0_i32_1 : i32, i32, i32, i32
  }
  func.func @transform_3(%arg0: i32) -> (i32, i32, i32) {
    %c0_i32 = arith.constant 0 : i32
    %c0_i32_0 = arith.constant 0 : i32
    %c0_i32_1 = arith.constant 0 : i32
    return %arg0, %c0_i32, %c0_i32_0 : i32, i32, i32
  }
  func.func @transform_4(%arg0: i32) -> (i32, i32, i32) {
    %c0_i32 = arith.constant 0 : i32
    %c0_i32_0 = arith.constant 0 : i32
    %c0_i32_1 = arith.constant 0 : i32
    return %arg0, %c0_i32, %c0_i32_0 : i32, i32, i32
  }
  func.func @transform_5(%arg0: i32) -> (i32, i32, i32, i32) {
    %c0_i32 = arith.constant 0 : i32
    %c0_i32_0 = arith.constant 0 : i32
    %c0_i32_1 = arith.constant 0 : i32
    %c0_i32_2 = arith.constant 0 : i32
    return %c0_i32, %arg0, %c0_i32_0, %c0_i32_1 : i32, i32, i32, i32
  }
  func.func @transform_6(%arg0: i32) -> (i32, i32, i32, i32) {
    %c0_i32 = arith.constant 0 : i32
    %c0_i32_0 = arith.constant 0 : i32
    %c0_i32_1 = arith.constant 0 : i32
    %c0_i32_2 = arith.constant 0 : i32
    return %c0_i32, %arg0, %c0_i32_0, %c0_i32_1 : i32, i32, i32, i32
  }
  func.func @transform_7(%arg0: i32) -> (i32, i32, i32, i32) {
    %c0_i32 = arith.constant 0 : i32
    %c0_i32_0 = arith.constant 0 : i32
    %c0_i32_1 = arith.constant 0 : i32
    %c0_i32_2 = arith.constant 0 : i32
    return %c0_i32, %arg0, %c0_i32_0, %c0_i32_1 : i32, i32, i32, i32
  }
}

</mosaic_0001>

<llo_original>
// kernel: tpu_custom_call.1
$region0: #{tpu_custom_call.1}
  #allocation0 [shape = 'u32[]', space=smem, size = 0x4, offset = 0x4, fixed_abs, tag = 'smem constant byte address 0x4 - core index']
  #allocation1 [shape = 'u32[144,128]{1,0:T(1,128)}', space=vmem, size = 0x12000, scoped, tag = 'internal scratch']
  #allocation15 [shape = 's32[]', space=sflag, size = 0x4, offset = 0, fixed_abs, tag = 'sflag constant byte address 0x0 - dummy sync flag']
  #allocation17 [shape = 's32[]', space=sflag, size = 0x4, offset = 0, fixed_abs, tag = 'sflag constant byte address 0x0 - dummy sync flag']
  #allocation19 [shape = 's32[]', space=sflag, size = 0x4, offset = 0, fixed_abs, tag = 'sflag constant byte address 0x0 - dummy sync flag']
  #allocation21 [shape = 's32[]', space=sflag, size = 0x4, offset = 0, fixed_abs, tag = 'sflag constant byte address 0x0 - dummy sync flag']
  %s0 = inlined_call_operand.hbm [shape: f32[2,4,1,128], index: 0, kind: input, shape index: {}]
  %s1 = inlined_call_operand.hbm [shape: f32[2,4,40,128], index: 1, kind: input, shape index: {}]
  %s2 = inlined_call_operand.hbm [shape: f32[2,4,40,128], index: 2, kind: input, shape index: {}]
  %s3 = inlined_call_operand.hbm [shape: bf16[4,128,384], index: 3, kind: input, shape index: {}]
  %s4 = inlined_call_operand.hbm [shape: bf16[4,128,128], index: 4, kind: input, shape index: {}]
  %s5 = inlined_call_operand.hbm [shape: f32[2,4,40,128], index: 5, kind: output, shape index: {0}]
  %s6 = inlined_call_operand.hbm [shape: f32[2,4,40,128], index: 6, kind: output, shape index: {1}]
  %s7 = inlined_call_operand.hbm [shape: f32[2,4,1,128], index: 7, kind: output, shape index: {2}]
  %8 = xla_tuple %s5, %s6, %s7
  %s9 = sld [smem:[#allocation0]]
  $region89: #{tpu_custom_call.1} parent=0
    _
  %s11 = ssub.s32 1, %s9
  %s12 = scalar_select 0, %s11, %s9
  $region1: #{tpu_custom_call.1} parent=0
    #allocation2 [shape = 'u8[2048]{0}', space=vmem, size = 0x800, scoped, tag = 'input window, operand 0']
    #allocation3 [shape = 's32[2]{0}', space=sflag, size = 0x8, scoped, tag = 'scoped memory for tpu_custom_call.1']
    #allocation4 [shape = 's32[2]{0}', space=sflag, size = 0x8, scoped, tag = 'scoped memory for tpu_custom_call.1']
    #allocation5 [shape = 'u8[81920]{0}', space=vmem, size = 0x14000, scoped, tag = 'input window, operand 1']
    #allocation6 [shape = 's32[2]{0}', space=sflag, size = 0x8, scoped, tag = 'scoped memory for tpu_custom_call.1']
    #allocation7 [shape = 'u8[81920]{0}', space=vmem, size = 0x14000, scoped, tag = 'input window, operand 2']
    #allocation8 [shape = 'u8[196608]{0}', space=vmem, size = 0x30000, scoped, tag = 'input window, operand 3']
    #allocation9 [shape = 's32[2]{0}', space=sflag, size = 0x8, scoped, tag = 'scoped memory for tpu_custom_call.1']
    #allocation10 [shape = 'u8[65536]{0}', space=vmem, size = 0x10000, scoped, tag = 'input window, operand 4']
    #allocation11 [shape = 'u8[81920]{0}', space=vmem, size = 0x14000, scoped, tag = 'output window, operand 0']
    #allocation12 [shape = 'u8[81920]{0}', space=vmem, size = 0x14000, scoped, tag = 'output window, operand 1']
    #allocation13 [shape = 's32[2]{0}', space=sflag, size = 0x8, scoped, tag = 'scoped memory for tpu_custom_call.1']
    #allocation14 [shape = 'u8[2048]{0}', space=vmem, size = 0x800, scoped, tag = 'output window, operand 2']
    %13 = vsyncpa [#allocation3], 0
    %s14 = scalar_lea.sflag [#allocation3], 1
    %15 = vsyncpa %s14, 0
    %16 = vsyncpa [#allocation6], 0
    %s17 = scalar_lea.sflag [#allocation6], 1
    %18 = vsyncpa %s17, 0
    %19 = vsyncpa [#allocation9], 0
    %s20 = scalar_lea.sflag [#allocation9], 1
    %21 = vsyncpa %s20, 0
    %22 = vsyncpa [#allocation4], 0
    %s23 = scalar_lea.sflag [#allocation4], 1
    %24 = vsyncpa %s23, 0
    %25 = vsyncpa [#allocation13], 0
    %s26 = scalar_lea.sflag [#allocation13], 1
    %27 = vsyncpa %s26, 0
    loop: start=0, step=1, limit=6
    $region2: #{tpu_custom_call.1} parent=1 // loop_pre_header
      _
    $region3: #{tpu_custom_call.1} parent=1 // loop_header
      %s29 = sphi 0, %s33
      %p30 = scmp.ge.s32.totalorder %s29, 6
      %s39 = sphi 0, %s41
      %s42 = sphi 0, %s39
      %s43 = sphi 0, %s42
      %s59 = sphi 0, %s43
      %s65 = sphi 0, %s67
      %s68 = sphi 0, %s65
      %s69 = sphi 0, %s68
      %s85 = sphi 0, %s69
      %s91 = sphi 0, %s93
      %s94 = sphi 0, %s91
      %s95 = sphi 0, %s94
      %s111 = sphi 0, %s95
      %s117 = sphi 0, %s119
      %s120 = sphi 0, %s117
      %s121 = sphi 0, %s120
      %s137 = sphi 0, %s121
      %s143 = sphi 0, %s145
      %s146 = sphi 0, %s143
      %s147 = sphi 0, %s146
      %s163 = sphi 0, %s147
      %s169 = sphi 0, %s171
      %s172 = sphi 0, %s169
      %s173 = sphi 0, %s172
      %s189 = sphi 0, %s173
      %s195 = sphi 0, %s197
      %s198 = sphi 0, %s195
      %s199 = sphi 0, %s198
      %s215 = sphi 0, %s199
      %s221 = sphi 0, %s223
      %s224 = sphi 0, %s221
      %s225 = sphi 0, %s224
      %s241 = sphi 0, %s225
    $region4: #{tpu_custom_call.1} parent=1 // loop_header_branch
      %32 = sbr.rel (%p30) target = $region8
    $region5: #{tpu_custom_call.1} parent=1 // loop_body
      %s34 = ssub.s32 %s29, 1
      %s35 = ssub.s32 %s29, 2
      %s36 = sadd.s32 %s29, 1
      %s37 = ssub.s32 %s29, %s36
      %p38 = scmp.eq.s32.totalorder %s37, 0
      %s40 = sadd.s32 %s39, 1
      %s41 = scalar_select %p38, %s39, %s40
      %p44 = pneg %p38
      %p45 = scmp.eq.s32.totalorder %s29, 3
      %p46 = por %p44, %p45
      %p47 = scmp.ne.s32.totalorder %s39, %s42
      %p48 = scmp.eq.s32.totalorder %s29, 0
      %p49 = por %p47, %p48
      %p50 = scmp.ne.s32.totalorder %s39, %s42
      %p51 = scmp.eq.s32.totalorder %s34, 3
      %p52 = por %p50, %p51
      %p53 = scmp.ne.s32.totalorder %s42, %s43
      %p54 = scmp.eq.s32.totalorder %s34, 0
      %p55 = por %p53, %p54
      %p56 = scmp.ne.s32.totalorder %s42, %s43
      %p57 = scmp.eq.s32.totalorder %s35, 3
      %p58 = por %p56, %p57
      %p60 = scmp.ne.s32.totalorder %s43, %s59
      %p61 = scmp.eq.s32.totalorder %s35, 0
      %p62 = por %p60, %p61
      %s63 = ssub.s32 %s29, %s36
      %p64 = scmp.eq.s32.totalorder %s63, 0
      %s66 = sadd.s32 %s65, 1
      %s67 = scalar_select %p64, %s65, %s66
      %p70 = pneg %p64
      %p71 = scmp.eq.s32.totalorder %s29, 3
      %p72 = por %p70, %p71
      %p73 = scmp.ne.s32.totalorder %s65, %s68
      %p74 = scmp.eq.s32.totalorder %s29, 0
      %p75 = por %p73, %p74
      %p76 = scmp.ne.s32.totalorder %s65, %s68
      %p77 = scmp.eq.s32.totalorder %s34, 3
      %p78 = por %p76, %p77
      %p79 = scmp.ne.s32.totalorder %s68, %s69
      %p80 = scmp.eq.s32.totalorder %s34, 0
      %p81 = por %p79, %p80
      %p82 = scmp.ne.s32.totalorder %s68, %s69
      %p83 = scmp.eq.s32.totalorder %s35, 3
      %p84 = por %p82, %p83
      %p86 = scmp.ne.s32.totalorder %s69, %s85
      %p87 = scmp.eq.s32.totalorder %s35, 0
      %p88 = por %p86, %p87
      %s89 = ssub.s32 %s29, %s36
      %p90 = scmp.eq.s32.totalorder %s89, 0
      %s92 = sadd.s32 %s91, 1
      %s93 = scalar_select %p90, %s91, %s92
      %p96 = pneg %p90
      %p97 = scmp.eq.s32.totalorder %s29, 3
      %p98 = por %p96, %p97
      %p99 = scmp.ne.s32.totalorder %s91, %s94
      %p100 = scmp.eq.s32.totalorder %s29, 0
      %p101 = por %p99, %p100
      %p102 = scmp.ne.s32.totalorder %s91, %s94
      %p103 = scmp.eq.s32.totalorder %s34, 3
      %p104 = por %p102, %p103
      %p105 = scmp.ne.s32.totalorder %s94, %s95
      %p106 = scmp.eq.s32.totalorder %s34, 0
      %p107 = por %p105, %p106
      %p108 = scmp.ne.s32.totalorder %s94, %s95
      %p109 = scmp.eq.s32.totalorder %s35, 3
      %p110 = por %p108, %p109
      %p112 = scmp.ne.s32.totalorder %s95, %s111
      %p113 = scmp.eq.s32.totalorder %s35, 0
      %p114 = por %p112, %p113
      %s115 = ssub.s32 %s29, %s36
      %p116 = scmp.eq.s32.totalorder %s115, 0
      %s118 = sadd.s32 %s117, 1
      %s119 = scalar_select %p116, %s117, %s118
      %p122 = pneg %p116
      %p123 = scmp.eq.s32.totalorder %s29, 3
      %p124 = por %p122, %p123
      %p125 = scmp.ne.s32.totalorder %s117, %s120
      %p126 = scmp.eq.s32.totalorder %s29, 0
      %p127 = por %p125, %p126
      %p128 = scmp.ne.s32.totalorder %s117, %s120
      %p129 = scmp.eq.s32.totalorder %s34, 3
      %p130 = por %p128, %p129
      %p131 = scmp.ne.s32.totalorder %s120, %s121
      %p132 = scmp.eq.s32.totalorder %s34, 0
      %p133 = por %p131, %p132
      %p134 = scmp.ne.s32.totalorder %s120, %s121
      %p135 = scmp.eq.s32.totalorder %s35, 3
      %p136 = por %p134, %p135
      %p138 = scmp.ne.s32.totalorder %s121, %s137
      %p139 = scmp.eq.s32.totalorder %s35, 0
      %p140 = por %p138, %p139
      %s141 = ssub.s32 %s29, %s36
      %p142 = scmp.eq.s32.totalorder %s141, 0
      %s144 = sadd.s32 %s143, 1
      %s145 = scalar_select %p142, %s143, %s144
      %p148 = pneg %p142
      %p149 = scmp.eq.s32.totalorder %s29, 3
      %p150 = por %p148, %p149
      %p151 = scmp.ne.s32.totalorder %s143, %s146
      %p152 = scmp.eq.s32.totalorder %s29, 0
      %p153 = por %p151, %p152
      %p154 = scmp.ne.s32.totalorder %s143, %s146
      %p155 = scmp.eq.s32.totalorder %s34, 3
      %p156 = por %p154, %p155
      %p157 = scmp.ne.s32.totalorder %s146, %s147
      %p158 = scmp.eq.s32.totalorder %s34, 0
      %p159 = por %p157, %p158
      %p160 = scmp.ne.s32.totalorder %s146, %s147
      %p161 = scmp.eq.s32.totalorder %s35, 3
      %p162 = por %p160, %p161
      %p164 = scmp.ne.s32.totalorder %s147, %s163
      %p165 = scmp.eq.s32.totalorder %s35, 0
      %p166 = por %p164, %p165
      %s167 = ssub.s32 %s29, %s36
      %p168 = scmp.eq.s32.totalorder %s167, 0
      %s170 = sadd.s32 %s169, 1
      %s171 = scalar_select %p168, %s169, %s170
      %p174 = pneg %p168
      %p175 = scmp.eq.s32.totalorder %s29, 3
      %p176 = por %p174, %p175
      %p177 = scmp.ne.s32.totalorder %s169, %s172
      %p178 = scmp.eq.s32.totalorder %s29, 0
      %p179 = por %p177, %p178
      %p180 = scmp.ne.s32.totalorder %s169, %s172
      %p181 = scmp.eq.s32.totalorder %s34, 3
      %p182 = por %p180, %p181
      %p183 = scmp.ne.s32.totalorder %s172, %s173
      %p184 = scmp.eq.s32.totalorder %s34, 0
      %p185 = por %p183, %p184
      %p186 = scmp.ne.s32.totalorder %s172, %s173
      %p187 = scmp.eq.s32.totalorder %s35, 3
      %p188 = por %p186, %p187
      %p190 = scmp.ne.s32.totalorder %s173, %s189
      %p191 = scmp.eq.s32.totalorder %s35, 0
      %p192 = por %p190, %p191
      %s193 = ssub.s32 %s29, %s36
      %p194 = scmp.eq.s32.totalorder %s193, 0
      %s196 = sadd.s32 %s195, 1
      %s197 = scalar_select %p194, %s195, %s196
      %p200 = pneg %p194
      %p201 = scmp.eq.s32.totalorder %s29, 3
      %p202 = por %p200, %p201
      %p203 = scmp.ne.s32.totalorder %s195, %s198
      %p204 = scmp.eq.s32.totalorder %s29, 0
      %p205 = por %p203, %p204
      %p206 = scmp.ne.s32.totalorder %s195, %s198
      %p207 = scmp.eq.s32.totalorder %s34, 3
      %p208 = por %p206, %p207
      %p209 = scmp.ne.s32.totalorder %s198, %s199
      %p210 = scmp.eq.s32.totalorder %s34, 0
      %p211 = por %p209, %p210
      %p212 = scmp.ne.s32.totalorder %s198, %s199
      %p213 = scmp.eq.s32.totalorder %s35, 3
      %p214 = por %p212, %p213
      %p216 = scmp.ne.s32.totalorder %s199, %s215
      %p217 = scmp.eq.s32.totalorder %s35, 0
      %p218 = por %p216, %p217
      %s219 = ssub.s32 %s29, %s36
      %p220 = scmp.eq.s32.totalorder %s219, 0
      %s222 = sadd.s32 %s221, 1
      %s223 = scalar_select %p220, %s221, %s222
      %p226 = pneg %p220
      %p227 = scmp.eq.s32.totalorder %s29, 3
      %p228 = por %p226, %p227
      %p229 = scmp.ne.s32.totalorder %s221, %s224
      %p230 = scmp.eq.s32.totalorder %s29, 0
      %p231 = por %p229, %p230
      %p232 = scmp.ne.s32.totalorder %s221, %s224
      %p233 = scmp.eq.s32.totalorder %s34, 3
      %p234 = por %p232, %p233
      %p235 = scmp.ne.s32.totalorder %s224, %s225
      %p236 = scmp.eq.s32.totalorder %s34, 0
      %p237 = por %p235, %p236
      %p238 = scmp.ne.s32.totalorder %s224, %s225
      %p239 = scmp.eq.s32.totalorder %s35, 3
      %p240 = por %p238, %p239
      %p242 = scmp.ne.s32.totalorder %s225, %s241
      %p243 = scmp.eq.s32.totalorder %s35, 0
      %p244 = por %p242, %p243
      %p245 = scmp.le.s32.totalorder 1, %s29
      %p246 = scmp.lt.s32.totalorder %s29, 5
      %p247 = pnand %p245, %p246
      %p248 = pneg %p247
      // Predicated region
      $region9: #{tpu_custom_call.1} parent=5 // pred_check
        _
      $region10: #{tpu_custom_call.1} parent=5 // pred_check_branch
        %250 = sbr.rel (%p247) target = $region12
      $region11: #{tpu_custom_call.1} parent=5 // pred_region
        %s251 = ssub.s32 %s29, 1
      $region12: #{tpu_custom_call.1} parent=5 // pred_fallthru
        _
      %p252 = scmp.lt.s32.totalorder %s29, 4
      // Predicated region
      $region13: #{tpu_custom_call.1} parent=5 // pred_check
        %p253 = pneg %p252
      $region14: #{tpu_custom_call.1} parent=5 // pred_check_branch
        %255 = sbr.rel (%p253) target = $region16
      $region15: #{tpu_custom_call.1} parent=5 // pred_region
        // Predicated region
        $region17: #{tpu_custom_call.1} parent=15 // pred_check
          %p256 = pneg %p49
        $region18: #{tpu_custom_call.1} parent=15 // pred_check_branch
          %258 = sbr.rel (%p256) target = $region20
        $region19: #{tpu_custom_call.1} parent=15 // pred_region
          %s259 = sand.u32 %s39, 1
          %s260 = scalar_lea.sflag [#allocation3], %s259
          %s261 = sand.u32 %s39, 1
          %s262 = smul.addr %s261, 2
          %s263 = scalar_lea.vmem [#allocation2], %s262
          %s265 = ssub.s32 32, 32
          %266 = vsyncadd %s260, %s265
          %s267 = smul.addr %s29, 16
          %s268 = scalar_lea.hbm %s0, %s267
          %s269 = sshll.u32 %s263, 4
          %s270 = int_to_ptr.vmem [resolvable:$true] %s269
          %275 = dma.hbm_to_vmem [thread:$0]  %s268, 32, %s270, %s260, 64, 16, 1
        $region20: #{tpu_custom_call.1} parent=15 // pred_fallthru
          _
        // Predicated region
        $region21: #{tpu_custom_call.1} parent=15 // pred_check
          %p276 = pneg %p75
        $region22: #{tpu_custom_call.1} parent=15 // pred_check_branch
          %278 = sbr.rel (%p276) target = $region24
        $region23: #{tpu_custom_call.1} parent=15 // pred_region
          #allocation16 [shape = 'u32[6]{0}', space=smem, size = 0x18, scoped, tag = 'DMA stride descriptor']
          %s279 = sand.u32 %s29, 1
          %s280 = scalar_lea.sflag [#allocation6], %s279
          %s281 = sand.u32 %s65, 1
          %s282 = smul.addr %s281, 80
          %s283 = scalar_lea.vmem [#allocation5], %s282
          %s285 = ssub.s32 1280, 1280
          %286 = vsyncadd %s280, %s285
          %s287 = smul.addr %s29, 5
          %s288 = smul.addr %s287, 128
          %s289 = scalar_lea.hbm %s1, %s288
          %s291 = sshll.u32 1, 14
          %s292 = sxor.u32 4294967295, %s291
          %s294 = sld [smem:[#allocation0]]
          %s295 = sadd.s32 2, %s294
          %s297 = sshll.u32 7, 26
          %s298 = sxor.u32 4294967295, %s297
          %s299 = sand.u32 0, %s298
          %s300 = sshll.u32 %s295, 26
          %s301 = sor.u32 %s299, %s300
          %s302 = sshll.u32 %s283, 4
          %s303 = int_to_ptr.vmem [resolvable:$true] %s302
          %309 = sst [smem:[#allocation16]] 2560
          %s310 = scalar_lea.smem [#allocation16], 1
          %311 = sst [smem:[%s310]] 640
          %s312 = scalar_lea.smem [#allocation16], 2
          %313 = sst [smem:[%s312]] 5
          %s314 = scalar_lea.smem [#allocation16], 3
          %315 = sst [smem:[%s314]] 128
          %s316 = scalar_lea.smem [#allocation16], 4
          %317 = sst [smem:[%s316]] 128
          %s318 = scalar_lea.smem [#allocation16], 5
          %319 = sst [smem:[%s318]] 8
          %321 = dma.general %s289, 1280, %s303, %s280, [#allocation15], [#allocation16], %s301, 0
        $region24: #{tpu_custom_call.1} parent=15 // pred_fallthru
          _
        // Predicated region
        $region25: #{tpu_custom_call.1} parent=15 // pred_check
          %p322 = pneg %p101
        $region26: #{tpu_custom_call.1} parent=15 // pred_check_branch
          %324 = sbr.rel (%p322) target = $region28
        $region27: #{tpu_custom_call.1} parent=15 // pred_region
          #allocation18 [shape = 'u32[6]{0}', space=smem, size = 0x18, scoped, tag = 'DMA stride descriptor']
          %s325 = sand.u32 %s29, 1
          %s326 = scalar_lea.sflag [#allocation6], %s325
          %s327 = sand.u32 %s91, 1
          %s328 = smul.addr %s327, 80
          %s329 = scalar_lea.vmem [#allocation7], %s328
          %s331 = ssub.s32 1280, 1280
          %332 = vsyncadd %s326, %s331
          %s333 = smul.addr %s29, 5
          %s334 = smul.addr %s333, 128
          %s335 = scalar_lea.hbm %s2, %s334
          %s337 = sshll.u32 1, 14
          %s338 = sxor.u32 4294967295, %s337
          %s340 = sld [smem:[#allocation0]]
          %s341 = sadd.s32 2, %s340
          %s343 = sshll.u32 7, 26
          %s344 = sxor.u32 4294967295, %s343
          %s345 = sand.u32 0, %s344
          %s346 = sshll.u32 %s341, 26
          %s347 = sor.u32 %s345, %s346
          %s348 = sshll.u32 %s329, 4
          %s349 = int_to_ptr.vmem [resolvable:$true] %s348
          %355 = sst [smem:[#allocation18]] 2560
          %s356 = scalar_lea.smem [#allocation18], 1
          %357 = sst [smem:[%s356]] 640
          %s358 = scalar_lea.smem [#allocation18], 2
          %359 = sst [smem:[%s358]] 5
          %s360 = scalar_lea.smem [#allocation18], 3
          %361 = sst [smem:[%s360]] 128
          %s362 = scalar_lea.smem [#allocation18], 4
          %363 = sst [smem:[%s362]] 128
          %s364 = scalar_lea.smem [#allocation18], 5
          %365 = sst [smem:[%s364]] 8
          %367 = dma.general %s335, 1280, %s349, %s326, [#allocation17], [#allocation18], %s347, 0
        $region28: #{tpu_custom_call.1} parent=15 // pred_fallthru
          _
        // Predicated region
        $region29: #{tpu_custom_call.1} parent=15 // pred_check
          %p368 = pneg %p127
        $region30: #{tpu_custom_call.1} parent=15 // pred_check_branch
          %370 = sbr.rel (%p368) target = $region32
        $region31: #{tpu_custom_call.1} parent=15 // pred_region
          %s371 = sand.u32 %s29, 1
          %s372 = scalar_lea.sflag [#allocation9], %s371
          %s373 = sand.u32 %s117, 1
          %s374 = smul.addr %s373, 192
          %s375 = scalar_lea.vmem [#allocation8], %s374
          %s377 = ssub.s32 3072, 3072
          %378 = vsyncadd %s372, %s377
          %s379 = smul.addr %s29, 48
          %s380 = smul.addr %s379, 64
          %s381 = scalar_lea.hbm %s3, %s380
          %s382 = sshll.u32 %s375, 4
          %s383 = int_to_ptr.vmem [resolvable:$true] %s382
          %388 = dma.hbm_to_vmem [thread:$0]  %s381, 3072, %s383, %s372, 192, 192, 12
        $region32: #{tpu_custom_call.1} parent=15 // pred_fallthru
          _
        // Predicated region
        $region33: #{tpu_custom_call.1} parent=15 // pred_check
          %p389 = pneg %p153
        $region34: #{tpu_custom_call.1} parent=15 // pred_check_branch
          %391 = sbr.rel (%p389) target = $region36
        $region35: #{tpu_custom_call.1} parent=15 // pred_region
          %s392 = sand.u32 %s29, 1
          %s393 = scalar_lea.sflag [#allocation9], %s392
          %s394 = sand.u32 %s143, 1
          %s395 = smul.addr %s394, 64
          %s396 = scalar_lea.vmem [#allocation10], %s395
          %s398 = ssub.s32 1024, 1024
          %399 = vsyncadd %s393, %s398
          %s400 = smul.addr %s29, 16
          %s401 = smul.addr %s400, 64
          %s402 = scalar_lea.hbm %s4, %s401
          %s403 = sshll.u32 %s396, 4
          %s404 = int_to_ptr.vmem [resolvable:$true] %s403
          %409 = dma.hbm_to_vmem [thread:$0]  %s402, 1024, %s404, %s393, 64, 64, 4
        $region36: #{tpu_custom_call.1} parent=15 // pred_fallthru
          _
      $region16: #{tpu_custom_call.1} parent=5 // pred_fallthru
        _
      %p410 = scmp.le.s32.totalorder 1, %s29
      %p411 = scmp.lt.s32.totalorder %s29, 5
      %p412 = pnand %p410, %p411
      %p413 = pneg %p412
      // Predicated region
      $region37: #{tpu_custom_call.1} parent=5 // pred_check
        _
      $region38: #{tpu_custom_call.1} parent=5 // pred_check_branch
        %415 = sbr.rel (%p412) target = $region40
      $region39: #{tpu_custom_call.1} parent=5 // pred_region
        %s416 = ssub.s32 %s29, 1
        %s417 = sand.u32 %s42, 1
        %s418 = scalar_lea.sflag [#allocation3], %s417
        %s419 = sand.u32 %s42, 1
        %s420 = smul.addr %s419, 2
        %s421 = scalar_lea.vmem [#allocation2], %s420
        // Predicated region
        $region41: #{tpu_custom_call.1} parent=39 // pred_check
          %p422 = pneg %p55
        $region42: #{tpu_custom_call.1} parent=39 // pred_check_branch
          %424 = sbr.rel (%p422) target = $region44
        $region43: #{tpu_custom_call.1} parent=39 // pred_region
          %425 = dma.done %s418, 32
        $region44: #{tpu_custom_call.1} parent=39 // pred_fallthru
          _
        %s426 = sand.u32 %s34, 1
        %s427 = scalar_lea.sflag [#allocation6], %s426
        %s428 = sand.u32 %s68, 1
        %s429 = smul.addr %s428, 80
        %s430 = scalar_lea.vmem [#allocation5], %s429
        // Predicated region
        $region45: #{tpu_custom_call.1} parent=39 // pred_check
          %p431 = pneg %p81
        $region46: #{tpu_custom_call.1} parent=39 // pred_check_branch
          %433 = sbr.rel (%p431) target = $region48
        $region47: #{tpu_custom_call.1} parent=39 // pred_region
          %434 = dma.done %s427, 1280
        $region48: #{tpu_custom_call.1} parent=39 // pred_fallthru
          _
        %s435 = sand.u32 %s34, 1
        %s436 = scalar_lea.sflag [#allocation6], %s435
        %s437 = sand.u32 %s94, 1
        %s438 = smul.addr %s437, 80
        %s439 = scalar_lea.vmem [#allocation7], %s438
        // Predicated region
        $region49: #{tpu_custom_call.1} parent=39 // pred_check
          %p440 = pneg %p107
        $region50: #{tpu_custom_call.1} parent=39 // pred_check_branch
          %442 = sbr.rel (%p440) target = $region52
        $region51: #{tpu_custom_call.1} parent=39 // pred_region
          %443 = dma.done %s436, 1280
        $region52: #{tpu_custom_call.1} parent=39 // pred_fallthru
          _
        %s444 = sand.u32 %s34, 1
        %s445 = scalar_lea.sflag [#allocation9], %s444
        %s446 = sand.u32 %s120, 1
        %s447 = smul.addr %s446, 192
        %s448 = scalar_lea.vmem [#allocation8], %s447
        // Predicated region
        $region53: #{tpu_custom_call.1} parent=39 // pred_check
          %p449 = pneg %p133
        $region54: #{tpu_custom_call.1} parent=39 // pred_check_branch
          %451 = sbr.rel (%p449) target = $region56
        $region55: #{tpu_custom_call.1} parent=39 // pred_region
          %452 = dma.done %s445, 3072
        $region56: #{tpu_custom_call.1} parent=39 // pred_fallthru
          _
        %s453 = sand.u32 %s34, 1
        %s454 = scalar_lea.sflag [#allocation9], %s453
        %s455 = sand.u32 %s146, 1
        %s456 = smul.addr %s455, 64
        %s457 = scalar_lea.vmem [#allocation10], %s456
        // Predicated region
        $region57: #{tpu_custom_call.1} parent=39 // pred_check
          %p458 = pneg %p159
        $region58: #{tpu_custom_call.1} parent=39 // pred_check_branch
          %460 = sbr.rel (%p458) target = $region60
        $region59: #{tpu_custom_call.1} parent=39 // pred_region
          %461 = dma.done %s454, 1024
        $region60: #{tpu_custom_call.1} parent=39 // pred_fallthru
          _
        %s462 = sand.u32 %s42, 1
        %s463 = scalar_lea.sflag [#allocation3], %s462
        %s464 = sand.u32 %s42, 1
        %s465 = smul.addr %s464, 2
        %s466 = scalar_lea.vmem [#allocation2], %s465
        %p467 = pneg %p55
        %p468 = pneg %p52
        %s469 = sand.u32 %s34, 1
        %s470 = scalar_lea.sflag [#allocation6], %s469
        %s471 = sand.u32 %s68, 1
        %s472 = smul.addr %s471, 80
        %s473 = scalar_lea.vmem [#allocation5], %s472
        %p474 = pneg %p81
        %p475 = pneg %p78
        %s476 = sand.u32 %s34, 1
        %s477 = scalar_lea.sflag [#allocation6], %s476
        %s478 = sand.u32 %s94, 1
        %s479 = smul.addr %s478, 80
        %s480 = scalar_lea.vmem [#allocation7], %s479
        %p481 = pneg %p107
        %p482 = pneg %p104
        %s483 = sand.u32 %s34, 1
        %s484 = scalar_lea.sflag [#allocation9], %s483
        %s485 = sand.u32 %s120, 1
        %s486 = smul.addr %s485, 192
        %s487 = scalar_lea.vmem [#allocation8], %s486
        %p488 = pneg %p133
        %p489 = pneg %p130
        %s490 = sand.u32 %s34, 1
        %s491 = scalar_lea.sflag [#allocation9], %s490
        %s492 = sand.u32 %s146, 1
        %s493 = smul.addr %s492, 64
        %s494 = scalar_lea.vmem [#allocation10], %s493
        %p495 = pneg %p159
        %p496 = pneg %p156
        %p497 = pneg %p185
        %p498 = pneg %p182
        %s499 = sand.u32 %s172, 1
        %s500 = scalar_lea.sflag [#allocation4], %s499
        %s501 = sand.u32 %s172, 1
        %s502 = smul.addr %s501, 80
        %s503 = scalar_lea.vmem [#allocation11], %s502
        %p504 = pneg %p211
        %p505 = pneg %p208
        %s506 = sand.u32 %s34, 1
        %s507 = scalar_lea.sflag [#allocation13], %s506
        %s508 = sand.u32 %s198, 1
        %s509 = smul.addr %s508, 80
        %s510 = scalar_lea.vmem [#allocation12], %s509
        %p511 = pneg %p237
        %p512 = pneg %p234
        %s513 = sand.u32 %s34, 1
        %s514 = scalar_lea.sflag [#allocation13], %s513
        %s515 = sand.u32 %s224, 1
        %s516 = smul.addr %s515, 2
        %s517 = scalar_lea.vmem [#allocation14], %s516
        %v519 = vld [vmem:[%s430] sm:$0xff]
        %v520 = vld [vmem:[%s430 + $0x8] sm:$0xff]
        %v521 = vld [vmem:[%s430 + $0x10] sm:$0xff]
        %v522 = vld [vmem:[%s430 + $0x18] sm:$0xff]
        %v523 = vld [vmem:[%s430 + $0x20] sm:$0xff]
        %v524 = vld [vmem:[%s430 + $0x28] sm:$0xff]
        %v525 = vld [vmem:[%s430 + $0x30] sm:$0xff]
        %v526 = vld [vmem:[%s430 + $0x38] sm:$0xff]
        %v527 = vld [vmem:[%s430 + $0x40] sm:$0xff]
        %v528 = vld [vmem:[%s430 + $0x48] sm:$0xff]
        %529 = vst [vmem:[%s503] sm:$0xff] %v519
        %530 = vst [vmem:[%s503 + $0x8] sm:$0xff] %v520
        %531 = vst [vmem:[%s503 + $0x10] sm:$0xff] %v521
        %532 = vst [vmem:[%s503 + $0x18] sm:$0xff] %v522
        %533 = vst [vmem:[%s503 + $0x20] sm:$0xff] %v523
        %534 = vst [vmem:[%s503 + $0x28] sm:$0xff] %v524
        %535 = vst [vmem:[%s503 + $0x30] sm:$0xff] %v525
        %536 = vst [vmem:[%s503 + $0x38] sm:$0xff] %v526
        %537 = vst [vmem:[%s503 + $0x40] sm:$0xff] %v527
        %538 = vst [vmem:[%s503 + $0x48] sm:$0xff] %v528
        %v539 = vld [vmem:[%s439] sm:$0xff]
        %v540 = vld [vmem:[%s439 + $0x8] sm:$0xff]
        %v541 = vld [vmem:[%s439 + $0x10] sm:$0xff]
        %v542 = vld [vmem:[%s439 + $0x18] sm:$0xff]
        %v543 = vld [vmem:[%s439 + $0x20] sm:$0xff]
        %v544 = vld [vmem:[%s439 + $0x28] sm:$0xff]
        %v545 = vld [vmem:[%s439 + $0x30] sm:$0xff]
        %v546 = vld [vmem:[%s439 + $0x38] sm:$0xff]
        %v547 = vld [vmem:[%s439 + $0x40] sm:$0xff]
        %v548 = vld [vmem:[%s439 + $0x48] sm:$0xff]
        %549 = vst [vmem:[%s510] sm:$0xff] %v539
        %550 = vst [vmem:[%s510 + $0x8] sm:$0xff] %v540
        %551 = vst [vmem:[%s510 + $0x10] sm:$0xff] %v541
        %552 = vst [vmem:[%s510 + $0x18] sm:$0xff] %v542
        %553 = vst [vmem:[%s510 + $0x20] sm:$0xff] %v543
        %554 = vst [vmem:[%s510 + $0x28] sm:$0xff] %v544
        %555 = vst [vmem:[%s510 + $0x30] sm:$0xff] %v545
        %556 = vst [vmem:[%s510 + $0x38] sm:$0xff] %v546
        %557 = vst [vmem:[%s510 + $0x40] sm:$0xff] %v547
        %558 = vst [vmem:[%s510 + $0x48] sm:$0xff] %v548
        %v559 = vld [vmem:[%s448] sm:$0xff]
        %v560 = vld [vmem:[%s448 + $0x8] sm:$0xf]
        %v561 = vld [vmem:[%s448 + $0xc] sm:$0xff]
        %v562 = vld [vmem:[%s448 + $0x14] sm:$0xf]
        %v563 = vld [vmem:[%s448 + $0x18] sm:$0xff]
        %v564 = vld [vmem:[%s448 + $0x20] sm:$0xf]
        %v565 = vld [vmem:[%s448 + $0x24] sm:$0xff]
        %v566 = vld [vmem:[%s448 + $0x2c] sm:$0xf]
        %v567 = vld [vmem:[%s448 + $0x30] sm:$0xff]
        %v568 = vld [vmem:[%s448 + $0x38] sm:$0xf]
        %v569 = vld [vmem:[%s448 + $0x3c] sm:$0xff]
        %v570 = vld [vmem:[%s448 + $0x44] sm:$0xf]
        %v571 = vld [vmem:[%s448 + $0x48] sm:$0xff]
        %v572 = vld [vmem:[%s448 + $0x50] sm:$0xf]
        %v573 = vld [vmem:[%s448 + $0x54] sm:$0xff]
        %v574 = vld [vmem:[%s448 + $0x5c] sm:$0xf]
        %v575 = vld [vmem:[%s448 + $0x60] sm:$0xff]
        %v576 = vld [vmem:[%s448 + $0x68] sm:$0xf]
        %v577 = vld [vmem:[%s448 + $0x6c] sm:$0xff]
        %v578 = vld [vmem:[%s448 + $0x74] sm:$0xf]
        %v579 = vld [vmem:[%s448 + $0x78] sm:$0xff]
        %v580 = vld [vmem:[%s448 + $0x80] sm:$0xf]
        %v581 = vld [vmem:[%s448 + $0x84] sm:$0xff]
        %v582 = vld [vmem:[%s448 + $0x8c] sm:$0xf]
        %v583 = vld [vmem:[%s448 + $0x90] sm:$0xff]
        %v584 = vld [vmem:[%s448 + $0x98] sm:$0xf]
        %v585 = vld [vmem:[%s448 + $0x9c] sm:$0xff]
        %v586 = vld [vmem:[%s448 + $0xa4] sm:$0xf]
        %v587 = vld [vmem:[%s448 + $0xa8] sm:$0xff]
        %v588 = vld [vmem:[%s448 + $0xb0] sm:$0xf]
        %v589 = vld [vmem:[%s448 + $0xb4] sm:$0xff]
        %v590 = vld [vmem:[%s448 + $0xbc] sm:$0xf]
        %v591 = vld [vmem:[%s457] sm:$0xf]
        %v592 = vld [vmem:[%s457 + $0x4] sm:$0xf]
        %v593 = vld [vmem:[%s457 + $0x8] sm:$0xf]
        %v594 = vld [vmem:[%s457 + $0xc] sm:$0xf]
        %v595 = vld [vmem:[%s457 + $0x10] sm:$0xf]
        %v596 = vld [vmem:[%s457 + $0x14] sm:$0xf]
        %v597 = vld [vmem:[%s457 + $0x18] sm:$0xf]
        %v598 = vld [vmem:[%s457 + $0x1c] sm:$0xf]
        %v599 = vld [vmem:[%s457 + $0x20] sm:$0xf]
        %v600 = vld [vmem:[%s457 + $0x24] sm:$0xf]
        %v601 = vld [vmem:[%s457 + $0x28] sm:$0xf]
        %v602 = vld [vmem:[%s457 + $0x2c] sm:$0xf]
        %v603 = vld [vmem:[%s457 + $0x30] sm:$0xf]
        %v604 = vld [vmem:[%s457 + $0x34] sm:$0xf]
        %v605 = vld [vmem:[%s457 + $0x38] sm:$0xf]
        %v606 = vld [vmem:[%s457 + $0x3c] sm:$0xf]
        %v607 = vld [vmem:[%s421] sm:$0x1]
        %v608 = vld [vmem:[%s421 + $0x1] sm:$0x1]
        %v609 = vpack.c.bf16 %v607, %v607
        %v610 = vpack.c.bf16 %v608, %v608
        %v613 = vunpack.c.l.b16 %v609
        %v614 = vunpack.c.l.b16 %v610
        %v615 = vrot.slane %v614, 7
        %vm616 = vcmask 1041409
        %v617 = vsel %vm616, %v615, %v613
        %v618 = vpack.c.b16 %v617, %v617
        %v652 = vunpack.c.l.b16 %v559
        %v653 = vunpack.c.h.b16 %v559
        %v654 = vunpack.c.l.b16 %v560
        %v655 = vunpack.c.l.b16 %v561
        %v656 = vunpack.c.h.b16 %v561
        %v657 = vunpack.c.l.b16 %v562
        %v658 = vunpack.c.l.b16 %v563
        %v659 = vunpack.c.h.b16 %v563
        %v660 = vunpack.c.l.b16 %v564
        %v661 = vunpack.c.l.b16 %v565
        %v662 = vunpack.c.h.b16 %v565
        %v663 = vunpack.c.l.b16 %v566
        %v664 = vunpack.c.l.b16 %v567
        %v665 = vunpack.c.h.b16 %v567
        %v666 = vunpack.c.l.b16 %v568
        %v667 = vunpack.c.l.b16 %v569
        %v668 = vunpack.c.h.b16 %v569
        %v669 = vunpack.c.l.b16 %v570
        %v670 = vunpack.c.l.b16 %v571
        %v671 = vunpack.c.h.b16 %v571
        %v672 = vunpack.c.l.b16 %v572
        %v673 = vunpack.c.l.b16 %v573
        %v674 = vunpack.c.h.b16 %v573
        %v675 = vunpack.c.l.b16 %v574
        %v676 = vunpack.c.l.b16 %v575
        %v677 = vunpack.c.h.b16 %v575
        %v678 = vunpack.c.l.b16 %v576
        %v679 = vunpack.c.l.b16 %v577
        %v680 = vunpack.c.h.b16 %v577
        %v681 = vunpack.c.l.b16 %v578
        %v682 = vunpack.c.l.b16 %v579
        %v683 = vunpack.c.h.b16 %v579
        %v684 = vunpack.c.l.b16 %v580
        %v685 = vunpack.c.l.b16 %v581
        %v686 = vunpack.c.h.b16 %v581
        %v687 = vunpack.c.l.b16 %v582
        %v688 = vunpack.c.l.b16 %v583
        %v689 = vunpack.c.h.b16 %v583
        %v690 = vunpack.c.l.b16 %v584
        %v691 = vunpack.c.l.b16 %v585
        %v692 = vunpack.c.h.b16 %v585
        %v693 = vunpack.c.l.b16 %v586
        %v694 = vunpack.c.l.b16 %v587
        %v695 = vunpack.c.h.b16 %v587
        %v696 = vunpack.c.l.b16 %v588
        %v697 = vunpack.c.l.b16 %v589
        %v698 = vunpack.c.h.b16 %v589
        %v699 = vunpack.c.l.b16 %v590
        %v700 = vpack.c.b16 %v655, %v652
        %v701 = vpack.c.b16 %v656, %v653
        %v702 = vpack.c.b16 %v657, %v654
        %v703 = vpack.c.b16 %v661, %v658
        %v704 = vpack.c.b16 %v662, %v659
        %v705 = vpack.c.b16 %v663, %v660
        %v706 = vpack.c.b16 %v667, %v664
        %v707 = vpack.c.b16 %v668, %v665
        %v708 = vpack.c.b16 %v669, %v666
        %v709 = vpack.c.b16 %v673, %v670
        %v710 = vpack.c.b16 %v674, %v671
        %v711 = vpack.c.b16 %v675, %v672
        %v712 = vpack.c.b16 %v679, %v676
        %v713 = vpack.c.b16 %v680, %v677
        %v714 = vpack.c.b16 %v681, %v678
        %v715 = vpack.c.b16 %v685, %v682
        %v716 = vpack.c.b16 %v686, %v683
        %v717 = vpack.c.b16 %v687, %v684
        %v718 = vpack.c.b16 %v691, %v688
        %v719 = vpack.c.b16 %v692, %v689
        %v720 = vpack.c.b16 %v693, %v690
        %v721 = vpack.c.b16 %v697, %v694
        %v722 = vpack.c.b16 %v698, %v695
        %v723 = vpack.c.b16 %v699, %v696
        %748 = vmatprep.subr.bf16.mxu0 %v701
        %749 = vmatpush1.bf16.msra.mxu0 %v700
        %750 = vmatprep.subr.bf16.mxu0 %v704
        %751 = vmatpush1.bf16.msra.mxu0 %v703
        %752 = vmatprep.subr.bf16.mxu0 %v707
        %753 = vmatpush1.bf16.msra.mxu0 %v706
        %754 = vmatprep.subr.bf16.mxu0 %v710
        %755 = vmatpush1.bf16.msra.mxu0 %v709
        %756 = vmatprep.subr.bf16.mxu0 %v713
        %757 = vmatpush1.bf16.msra.mxu0 %v712
        %758 = vmatprep.subr.bf16.mxu0 %v716
        %759 = vmatpush1.bf16.msra.mxu0 %v715
        %760 = vmatprep.subr.bf16.mxu0 %v719
        %761 = vmatpush1.bf16.msra.mxu0 %v718
        %762 = vmatprep.subr.bf16.mxu0 %v722
        %763 = vmatpush1.bf16.msra.mxu0 %v721
        %764 = vmatprep.subr.bf16.mxu0 0
        %765 = vmatpush1.bf16.msra.mxu0 0
        %766 = vmatprep.subr.bf16.mxu0 0
        %767 = vmatpush1.bf16.msra.mxu0 0
        %768 = vmatprep.subr.bf16.mxu0 0
        %769 = vmatpush1.bf16.msra.mxu0 0
        %770 = vmatprep.subr.bf16.mxu0 0
        %771 = vmatpush1.bf16.msra.mxu0 0
        %772 = vmatprep.subr.bf16.mxu0 0
        %773 = vmatpush1.bf16.msra.mxu0 0
        %774 = vmatprep.subr.bf16.mxu0 0
        %775 = vmatpush1.bf16.msra.mxu0 0
        %776 = vmatprep.subr.bf16.mxu0 0
        %777 = vmatpush1.bf16.msra.mxu0 0
        %778 = vmatprep.subr.bf16.mxu0 0
        %779 = vmatpush1.bf16.msra.mxu0 0
        %780 = vmatprep.mubr.bf16.mxu0 0
        %781 = vmatmul.mubr.bf16.gmra.mrb[0].mxu0 %v618
        %v782 = vpop.f32.mrb[0].mxu0
        %v783 = vadd.f32 0.0, %v782
        %v784 = vpop.f32.mrb[0].mxu0
        %v785 = vadd.f32 0.0, %v784
        %v786 = vpop.f32.mrb[0].mxu0
        %v787 = vpop.f32.mrb[0].mxu0
        %788 = vdwg.mxu0
        %789 = vmatprep.subr.bf16.mxu0 0
        %790 = vmatpush1.bf16.msra.mxu0 %v702
        %791 = vmatprep.subr.bf16.mxu0 0
        %792 = vmatpush1.bf16.msra.mxu0 %v705
        %793 = vmatprep.subr.bf16.mxu0 0
        %794 = vmatpush1.bf16.msra.mxu0 %v708
        %795 = vmatprep.subr.bf16.mxu0 0
        %796 = vmatpush1.bf16.msra.mxu0 %v711
        %797 = vmatprep.subr.bf16.mxu0 0
        %798 = vmatpush1.bf16.msra.mxu0 %v714
        %799 = vmatprep.subr.bf16.mxu0 0
        %800 = vmatpush1.bf16.msra.mxu0 %v717
        %801 = vmatprep.subr.bf16.mxu0 0
        %802 = vmatpush1.bf16.msra.mxu0 %v720
        %803 = vmatprep.subr.bf16.mxu0 0
        %804 = vmatpush1.bf16.msra.mxu0 %v723
        %805 = vmatprep.subr.bf16.mxu0 0
        %806 = vmatpush1.bf16.msra.mxu0 0
        %807 = vmatprep.subr.bf16.mxu0 0
        %808 = vmatpush1.bf16.msra.mxu0 0
        %809 = vmatprep.subr.bf16.mxu0 0
        %810 = vmatpush1.bf16.msra.mxu0 0
        %811 = vmatprep.subr.bf16.mxu0 0
        %812 = vmatpush1.bf16.msra.mxu0 0
        %813 = vmatprep.subr.bf16.mxu0 0
        %814 = vmatpush1.bf16.msra.mxu0 0
        %815 = vmatprep.subr.bf16.mxu0 0
        %816 = vmatpush1.bf16.msra.mxu0 0
        %817 = vmatprep.subr.bf16.mxu0 0
        %818 = vmatpush1.bf16.msra.mxu0 0
        %819 = vmatprep.subr.bf16.mxu0 0
        %820 = vmatpush1.bf16.msra.mxu0 0
        %821 = vmatprep.mubr.bf16.mxu0 0
        %822 = vmatmul.mubr.bf16.gmra.mrb[0].mxu0 %v618
        %v823 = vpop.f32.mrb[0].mxu0
        %v824 = vadd.f32 0.0, %v823
        %v825 = vpop.f32.mrb[0].mxu0
        %v826 = vpop.f32.mrb[0].mxu0
        %v827 = vpop.f32.mrb[0].mxu0
        %828 = vdwg.mxu0
        %v831 = vunpack.c.l.s4 1966171168
        %v832 = vunpack.c.0.s8 %v831
        %v833 = vlaneseq
        %v834 = vshrl.u32 %v833, 7
        %v835 = vsub.s32 %v832, %v834
        %v836 = vrot.slane %v785, %v835
        %v837 = vcombine.high %v836, %v836
        %v839 = vunpack.c.l.s4 1966171168
        %v840 = vunpack.c.0.s8 %v839
        %v841 = vlaneseq
        %v842 = vshrl.u32 %v841, 7
        %v843 = vsub.s32 %v840, %v842
        %v844 = vrot.slane %v836, %v843
        %v846 = vunpack.c.l.s4 1966171168
        %v847 = vunpack.c.0.s8 %v846
        %v848 = vlaneseq
        %v849 = vshrl.u32 %v848, 7
        %v850 = vsub.s32 %v847, %v849
        %v851 = vrot.slane %v837, %v850
        %854 = vst [vmem:[%s503 + $0x20] sm:$0x1] %v844
        %855 = vst [vmem:[%s503 + $0x48] sm:$0x1] %v851
        %v858 = vunpack.c.l.s4 1966171168
        %v859 = vunpack.c.0.s8 %v858
        %v860 = vlaneseq
        %v861 = vshrl.u32 %v860, 7
        %v862 = vsub.s32 %v859, %v861
        %v863 = vrot.slane %v824, %v862
        %v864 = vcombine.high %v863, %v863
        %v866 = vunpack.c.l.s4 1966171168
        %v867 = vunpack.c.0.s8 %v866
        %v868 = vlaneseq
        %v869 = vshrl.u32 %v868, 7
        %v870 = vsub.s32 %v867, %v869
        %v871 = vrot.slane %v863, %v870
        %v873 = vunpack.c.l.s4 1966171168
        %v874 = vunpack.c.0.s8 %v873
        %v875 = vlaneseq
        %v876 = vshrl.u32 %v875, 7
        %v877 = vsub.s32 %v874, %v876
        %v878 = vrot.slane %v864, %v877
        %881 = vst [vmem:[%s510 + $0x20] sm:$0x1] %v871
        %882 = vst [vmem:[%s510 + $0x48] sm:$0x1] %v878
        %v883 = vld [vmem:[%s503] sm:$0xff]
        %v884 = vld [vmem:[%s503 + $0x8] sm:$0xff]
        %v885 = vld [vmem:[%s503 + $0x10] sm:$0xff]
        %v886 = vld [vmem:[%s503 + $0x18] sm:$0xff]
        %v887 = vld [vmem:[%s503 + $0x20] sm:$0xff]
        %v888 = vld [vmem:[%s503 + $0x28] sm:$0xff]
        %v889 = vld [vmem:[%s503 + $0x30] sm:$0xff]
        %v890 = vld [vmem:[%s503 + $0x38] sm:$0xff]
        %v891 = vld [vmem:[%s503 + $0x40] sm:$0xff]
        %v892 = vld [vmem:[%s503 + $0x48] sm:$0xff]
        %v893 = vld [vmem:[%s510] sm:$0xff]
        %v894 = vld [vmem:[%s510 + $0x8] sm:$0xff]
        %v895 = vld [vmem:[%s510 + $0x10] sm:$0xff]
        %v896 = vld [vmem:[%s510 + $0x18] sm:$0xff]
        %v897 = vld [vmem:[%s510 + $0x20] sm:$0xff]
        %v898 = vld [vmem:[%s510 + $0x28] sm:$0xff]
        %v899 = vld [vmem:[%s510 + $0x30] sm:$0xff]
        %v900 = vld [vmem:[%s510 + $0x38] sm:$0xff]
        %v901 = vld [vmem:[%s510 + $0x40] sm:$0xff]
        %v902 = vld [vmem:[%s510 + $0x48] sm:$0xff]
        %v905 = vunpack.c.l.s4 1966171168
        %v906 = vunpack.c.0.s8 %v905
        %v907 = vlaneseq
        %v908 = vshrl.u32 %v907, 7
        %v909 = vsub.s32 %v906, %v908
        %v910 = vrot.slane %v783, %v909
        %v911 = vcombine.high %v910, %v910
        %v913 = vunpack.c.l.s4 1966171168
        %v914 = vunpack.c.0.s8 %v913
        %v915 = vlaneseq
        %v916 = vshrl.u32 %v915, 7
        %v917 = vsub.s32 %v914, %v916
        %v918 = vrot.slane %v910, %v917
        %v920 = vunpack.c.l.s4 1966171168
        %v921 = vunpack.c.0.s8 %v920
        %v922 = vlaneseq
        %v923 = vshrl.u32 %v922, 7
        %v924 = vsub.s32 %v921, %v923
        %v925 = vrot.slane %v911, %v924
        %v928 = vpack.c.bf16 %v918, %v918
        %v929 = vpack.c.bf16 %v925, %v925
        %v930 = vpack.c.bf16 %v884, %v883
        %v931 = vpack.c.bf16 %v886, %v885
        %v932 = vpack.c.bf16 %v887, %v887
        %v933 = vpack.c.bf16 %v889, %v888
        %v934 = vpack.c.bf16 %v891, %v890
        %v935 = vpack.c.bf16 %v892, %v892
        %936 = vmatprep.subr.bf16.mxu0 0
        %937 = vmatpush1.bf16.xpose.msra.mxu0 %v930
        %938 = vmatprep.subr.bf16.mxu0 0
        %939 = vmatpush1.bf16.xpose.msra.mxu0 %v931
        %940 = vmatprep.subr.bf16.mxu0 0
        %941 = vmatpush1.bf16.xpose.msra.mxu0 %v932
        %942 = vmatprep.subr.bf16.mxu0 0
        %943 = vmatpush1.bf16.xpose.msra.mxu0 0
        %944 = vmatprep.subr.bf16.mxu0 0
        %945 = vmatpush1.bf16.xpose.msra.mxu0 0
        %946 = vmatprep.subr.bf16.mxu0 0
        %947 = vmatpush1.bf16.xpose.msra.mxu0 0
        %948 = vmatprep.subr.bf16.mxu0 0
        %949 = vmatpush1.bf16.xpose.msra.mxu0 0
        %950 = vmatprep.subr.bf16.mxu0 0
        %951 = vmatpush1.bf16.xpose.msra.mxu0 0
        %952 = vmatprep.subr.bf16.mxu0 0
        %953 = vmatpush1.bf16.xpose.msra.mxu0 0
        %954 = vmatprep.subr.bf16.mxu0 0
        %955 = vmatpush1.bf16.xpose.msra.mxu0 0
        %956 = vmatprep.subr.bf16.mxu0 0
        %957 = vmatpush1.bf16.xpose.msra.mxu0 0
        %958 = vmatprep.subr.bf16.mxu0 0
        %959 = vmatpush1.bf16.xpose.msra.mxu0 0
        %960 = vmatprep.subr.bf16.mxu0 0
        %961 = vmatpush1.bf16.xpose.msra.mxu0 0
        %962 = vmatprep.subr.bf16.mxu0 0
        %963 = vmatpush1.bf16.xpose.msra.mxu0 0
        %964 = vmatprep.subr.bf16.mxu0 0
        %965 = vmatpush1.bf16.xpose.msra.mxu0 0
        %966 = vmatprep.subr.bf16.mxu0 0
        %967 = vmatpush1.bf16.xpose.msra.mxu0 0
        %968 = vmatprep.mubr.bf16.mxu0 0
        %969 = vmatmul.mubr.bf16.gmra.mrb[0].mxu0 %v928
        %v970 = vpop.f32.mrb[0].mxu0
        %v971 = vadd.f32 0.0, %v970
        %v972 = vpop.f32.mrb[0].mxu0
        %v973 = vpop.f32.mrb[0].mxu0
        %v974 = vpop.f32.mrb[0].mxu0
        %975 = vdwg.mxu0
        %976 = vmatprep.subr.bf16.mxu0 0
        %977 = vmatpush1.bf16.xpose.msra.mxu0 %v933
        %978 = vmatprep.subr.bf16.mxu0 0
        %979 = vmatpush1.bf16.xpose.msra.mxu0 %v934
        %980 = vmatprep.subr.bf16.mxu0 0
        %981 = vmatpush1.bf16.xpose.msra.mxu0 %v935
        %982 = vmatprep.subr.bf16.mxu0 0
        %983 = vmatpush1.bf16.xpose.msra.mxu0 0
        %984 = vmatprep.subr.bf16.mxu0 0
        %985 = vmatpush1.bf16.xpose.msra.mxu0 0
        %986 = vmatprep.subr.bf16.mxu0 0
        %987 = vmatpush1.bf16.xpose.msra.mxu0 0
        %988 = vmatprep.subr.bf16.mxu0 0
        %989 = vmatpush1.bf16.xpose.msra.mxu0 0
        %990 = vmatprep.subr.bf16.mxu0 0
        %991 = vmatpush1.bf16.xpose.msra.mxu0 0
        %992 = vmatprep.subr.bf16.mxu0 0
        %993 = vmatpush1.bf16.xpose.msra.mxu0 0
        %994 = vmatprep.subr.bf16.mxu0 0
        %995 = vmatpush1.bf16.xpose.msra.mxu0 0
        %996 = vmatprep.subr.bf16.mxu0 0
        %997 = vmatpush1.bf16.xpose.msra.mxu0 0
        %998 = vmatprep.subr.bf16.mxu0 0
        %999 = vmatpush1.bf16.xpose.msra.mxu0 0
        %1000 = vmatprep.subr.bf16.mxu0 0
        %1001 = vmatpush1.bf16.xpose.msra.mxu0 0
        %1002 = vmatprep.subr.bf16.mxu0 0
        %1003 = vmatpush1.bf16.xpose.msra.mxu0 0
        %1004 = vmatprep.subr.bf16.mxu0 0
        %1005 = vmatpush1.bf16.xpose.msra.mxu0 0
        %1006 = vmatprep.subr.bf16.mxu0 0
        %1007 = vmatpush1.bf16.xpose.msra.mxu0 0
        %1008 = vmatprep.mubr.bf16.mxu0 0
        %1009 = vmatmul.mubr.bf16.gmra.mrb[0].mxu0 %v929
        %v1010 = vpop.f32.mrb[0].mxu0
        %v1011 = vadd.f32 0.0, %v1010
        %v1012 = vpop.f32.mrb[0].mxu0
        %v1013 = vpop.f32.mrb[0].mxu0
        %v1014 = vpop.f32.mrb[0].mxu0
        %1015 = vdwg.mxu0
        %v1016 = vmul.f32 %v971, 0.125
        %v1017 = vmul.f32 %v1011, 0.125
        %vm1018 = vcmask 319488
        %v1019 = vsel %vm1018, %v1016, -inf
        %1020 = vmax.xlane.f32.xlu0 %v1019
        %v1021 = vpop.xlane.xlu0 %1020
        %v1022 = vsel %vm1018, %v1017, -inf
        %1023 = vmax.xlane.f32.xlu0 %v1022
        %v1024 = vpop.xlane.xlu0 %1023
        %v1025 = vsub.f32 %v1016, %v1021
        %v1026 = vsub.f32 %v1017, %v1024
        %v1027 = vmul.f32 %v1025, 1.442695
        %v1028 = vpow.pop %v1027
        %v1029 = vmul.f32 %v1026, 1.442695
        %v1030 = vpow.pop %v1029
        %v1031 = vsel %vm1018, %v1028, 0.0
        %1032 = vadd.xlane.f32.xlu0 %v1031
        %v1033 = vpop.xlane.xlu0 %1032
        %v1034 = vsel %vm1018, %v1030, 0.0
        %1035 = vadd.xlane.f32.xlu0 %v1034
        %v1036 = vpop.xlane.xlu0 %1035
        %v1037 = vrcp.pop %v1033
        %v1038 = vmul.f32 %v1028, %v1037
        %v1039 = vrcp.pop %v1036
        %v1040 = vmul.f32 %v1030, %v1039
        %v1041 = vpack.c.bf16 %v1038, %v1038
        %v1042 = vpack.c.bf16 %v1040, %v1040
        %v1043 = vpack.c.bf16 %v894, %v893
        %v1044 = vpack.c.bf16 %v896, %v895
        %v1045 = vpack.c.bf16 %v897, %v897
        %v1046 = vpack.c.bf16 %v899, %v898
        %v1047 = vpack.c.bf16 %v901, %v900
        %v1048 = vpack.c.bf16 %v902, %v902
        %vm1049 = vcmask 326656
        %v1051 = vsel %vm1049, %v1041, 0
        %vm1053 = vcmask 1043456
        %v1055 = vsel %vm1053, %v1045, 0
        %1057 = vmatprep.subr.bf16.mxu0 0
        %1058 = vmatpush1.bf16.msra.mxu0 %v1043
        %1059 = vmatprep.subr.bf16.mxu0 0
        %1060 = vmatpush1.bf16.msra.mxu0 %v1044
        %1061 = vmatprep.subr.bf16.mxu0 0
        %1062 = vmatpush1.bf16.msra.mxu0 %v1055
        %1063 = vmatprep.subr.bf16.mxu0 0
        %1064 = vmatpush1.bf16.msra.mxu0 0
        %1065 = vmatprep.subr.bf16.mxu0 0
        %1066 = vmatpush1.bf16.msra.mxu0 0
        %1067 = vmatprep.subr.bf16.mxu0 0
        %1068 = vmatpush1.bf16.msra.mxu0 0
        %1069 = vmatprep.subr.bf16.mxu0 0
        %1070 = vmatpush1.bf16.msra.mxu0 0
        %1071 = vmatprep.subr.bf16.mxu0 0
        %1072 = vmatpush1.bf16.msra.mxu0 0
        %1073 = vmatprep.subr.bf16.mxu0 0
        %1074 = vmatpush1.bf16.msra.mxu0 0
        %1075 = vmatprep.subr.bf16.mxu0 0
        %1076 = vmatpush1.bf16.msra.mxu0 0
        %1077 = vmatprep.subr.bf16.mxu0 0
        %1078 = vmatpush1.bf16.msra.mxu0 0
        %1079 = vmatprep.subr.bf16.mxu0 0
        %1080 = vmatpush1.bf16.msra.mxu0 0
        %1081 = vmatprep.subr.bf16.mxu0 0
        %1082 = vmatpush1.bf16.msra.mxu0 0
        %1083 = vmatprep.subr.bf16.mxu0 0
        %1084 = vmatpush1.bf16.msra.mxu0 0
        %1085 = vmatprep.subr.bf16.mxu0 0
        %1086 = vmatpush1.bf16.msra.mxu0 0
        %1087 = vmatprep.subr.bf16.mxu0 0
        %1088 = vmatpush1.bf16.msra.mxu0 0
        %1089 = vmatprep.mubr.bf16.mxu0 0
        %1090 = vmatmul.mubr.bf16.gmra.mrb[0].mxu0 %v1051
        %v1091 = vpop.f32.mrb[0].mxu0
        %v1092 = vadd.f32 0.0, %v1091
        %v1093 = vpop.f32.mrb[0].mxu0
        %v1094 = vpop.f32.mrb[0].mxu0
        %v1095 = vpop.f32.mrb[0].mxu0
        %1096 = vdwg.mxu0
        %v1098 = vsel %vm1049, %v1042, 0
        %v1101 = vsel %vm1053, %v1048, 0
        %1103 = vmatprep.subr.bf16.mxu0 0
        %1104 = vmatpush1.bf16.msra.mxu0 %v1046
        %1105 = vmatprep.subr.bf16.mxu0 0
        %1106 = vmatpush1.bf16.msra.mxu0 %v1047
        %1107 = vmatprep.subr.bf16.mxu0 0
        %1108 = vmatpush1.bf16.msra.mxu0 %v1101
        %1109 = vmatprep.subr.bf16.mxu0 0
        %1110 = vmatpush1.bf16.msra.mxu0 0
        %1111 = vmatprep.subr.bf16.mxu0 0
        %1112 = vmatpush1.bf16.msra.mxu0 0
        %1113 = vmatprep.subr.bf16.mxu0 0
        %1114 = vmatpush1.bf16.msra.mxu0 0
        %1115 = vmatprep.subr.bf16.mxu0 0
        %1116 = vmatpush1.bf16.msra.mxu0 0
        %1117 = vmatprep.subr.bf16.mxu0 0
        %1118 = vmatpush1.bf16.msra.mxu0 0
        %1119 = vmatprep.subr.bf16.mxu0 0
        %1120 = vmatpush1.bf16.msra.mxu0 0
        %1121 = vmatprep.subr.bf16.mxu0 0
        %1122 = vmatpush1.bf16.msra.mxu0 0
        %1123 = vmatprep.subr.bf16.mxu0 0
        %1124 = vmatpush1.bf16.msra.mxu0 0
        %1125 = vmatprep.subr.bf16.mxu0 0
        %1126 = vmatpush1.bf16.msra.mxu0 0
        %1127 = vmatprep.subr.bf16.mxu0 0
        %1128 = vmatpush1.bf16.msra.mxu0 0
        %1129 = vmatprep.subr.bf16.mxu0 0
        %1130 = vmatpush1.bf16.msra.mxu0 0
        %1131 = vmatprep.subr.bf16.mxu0 0
        %1132 = vmatpush1.bf16.msra.mxu0 0
        %1133 = vmatprep.subr.bf16.mxu0 0
        %1134 = vmatpush1.bf16.msra.mxu0 0
        %1135 = vmatprep.mubr.bf16.mxu0 0
        %1136 = vmatmul.mubr.bf16.gmra.mrb[0].mxu0 %v1098
        %v1137 = vpop.f32.mrb[0].mxu0
        %v1138 = vadd.f32 0.0, %v1137
        %v1139 = vpop.f32.mrb[0].mxu0
        %v1140 = vpop.f32.mrb[0].mxu0
        %v1141 = vpop.f32.mrb[0].mxu0
        %1142 = vdwg.mxu0
        %v1143 = vpack.c.bf16 %v1092, %v1092
        %v1144 = vpack.c.bf16 %v1138, %v1138
        %v1147 = vunpack.c.l.b16 %v1143
        %v1148 = vunpack.c.l.b16 %v1144
        %v1149 = vrot.slane %v1148, 7
        %v1150 = vsel %vm616, %v1149, %v1147
        %v1151 = vpack.c.b16 %v1150, %v1150
        %v1169 = vunpack.c.l.b16 %v591
        %v1170 = vunpack.c.l.b16 %v592
        %v1171 = vunpack.c.l.b16 %v593
        %v1172 = vunpack.c.l.b16 %v594
        %v1173 = vunpack.c.l.b16 %v595
        %v1174 = vunpack.c.l.b16 %v596
        %v1175 = vunpack.c.l.b16 %v597
        %v1176 = vunpack.c.l.b16 %v598
        %v1177 = vunpack.c.l.b16 %v599
        %v1178 = vunpack.c.l.b16 %v600
        %v1179 = vunpack.c.l.b16 %v601
        %v1180 = vunpack.c.l.b16 %v602
        %v1181 = vunpack.c.l.b16 %v603
        %v1182 = vunpack.c.l.b16 %v604
        %v1183 = vunpack.c.l.b16 %v605
        %v1184 = vunpack.c.l.b16 %v606
        %v1185 = vpack.c.b16 %v1170, %v1169
        %v1186 = vpack.c.b16 %v1172, %v1171
        %v1187 = vpack.c.b16 %v1174, %v1173
        %v1188 = vpack.c.b16 %v1176, %v1175
        %v1189 = vpack.c.b16 %v1178, %v1177
        %v1190 = vpack.c.b16 %v1180, %v1179
        %v1191 = vpack.c.b16 %v1182, %v1181
        %v1192 = vpack.c.b16 %v1184, %v1183
        %1201 = vmatprep.subr.bf16.mxu0 0
        %1202 = vmatpush1.bf16.msra.mxu0 %v1185
        %1203 = vmatprep.subr.bf16.mxu0 0
        %1204 = vmatpush1.bf16.msra.mxu0 %v1186
        %1205 = vmatprep.subr.bf16.mxu0 0
        %1206 = vmatpush1.bf16.msra.mxu0 %v1187
        %1207 = vmatprep.subr.bf16.mxu0 0
        %1208 = vmatpush1.bf16.msra.mxu0 %v1188
        %1209 = vmatprep.subr.bf16.mxu0 0
        %1210 = vmatpush1.bf16.msra.mxu0 %v1189
        %1211 = vmatprep.subr.bf16.mxu0 0
        %1212 = vmatpush1.bf16.msra.mxu0 %v1190
        %1213 = vmatprep.subr.bf16.mxu0 0
        %1214 = vmatpush1.bf16.msra.mxu0 %v1191
        %1215 = vmatprep.subr.bf16.mxu0 0
        %1216 = vmatpush1.bf16.msra.mxu0 %v1192
        %1217 = vmatprep.subr.bf16.mxu0 0
        %1218 = vmatpush1.bf16.msra.mxu0 0
        %1219 = vmatprep.subr.bf16.mxu0 0
        %1220 = vmatpush1.bf16.msra.mxu0 0
        %1221 = vmatprep.subr.bf16.mxu0 0
        %1222 = vmatpush1.bf16.msra.mxu0 0
        %1223 = vmatprep.subr.bf16.mxu0 0
        %1224 = vmatpush1.bf16.msra.mxu0 0
        %1225 = vmatprep.subr.bf16.mxu0 0
        %1226 = vmatpush1.bf16.msra.mxu0 0
        %1227 = vmatprep.subr.bf16.mxu0 0
        %1228 = vmatpush1.bf16.msra.mxu0 0
        %1229 = vmatprep.subr.bf16.mxu0 0
        %1230 = vmatpush1.bf16.msra.mxu0 0
        %1231 = vmatprep.subr.bf16.mxu0 0
        %1232 = vmatpush1.bf16.msra.mxu0 0
        %1233 = vmatprep.mubr.bf16.mxu0 0
        %1234 = vmatmul.mubr.bf16.gmra.mrb[0].mxu0 %v1151
        %v1235 = vpop.f32.mrb[0].mxu0
        %v1236 = vadd.f32 0.0, %v1235
        %v1237 = vpop.f32.mrb[0].mxu0
        %v1238 = vpop.f32.mrb[0].mxu0
        %v1239 = vpop.f32.mrb[0].mxu0
        %1240 = vdwg.mxu0
        %v1241 = vpack.c.bf16 %v1236, %v1236
        %1242 = vmatprep.subr.bf16.mxu0 %v701
        %1243 = vmatpush1.bf16.msra.mxu0 %v700
        %1244 = vmatprep.subr.bf16.mxu0 %v704
        %1245 = vmatpush1.bf16.msra.mxu0 %v703
        %1246 = vmatprep.subr.bf16.mxu0 %v707
        %1247 = vmatpush1.bf16.msra.mxu0 %v706
        %1248 = vmatprep.subr.bf16.mxu0 %v710
        %1249 = vmatpush1.bf16.msra.mxu0 %v709
        %1250 = vmatprep.subr.bf16.mxu0 %v713
        %1251 = vmatpush1.bf16.msra.mxu0 %v712
        %1252 = vmatprep.subr.bf16.mxu0 %v716
        %1253 = vmatpush1.bf16.msra.mxu0 %v715
        %1254 = vmatprep.subr.bf16.mxu0 %v719
        %1255 = vmatpush1.bf16.msra.mxu0 %v718
        %1256 = vmatprep.subr.bf16.mxu0 %v722
        %1257 = vmatpush1.bf16.msra.mxu0 %v721
        %1258 = vmatprep.subr.bf16.mxu0 0
        %1259 = vmatpush1.bf16.msra.mxu0 0
        %1260 = vmatprep.subr.bf16.mxu0 0
        %1261 = vmatpush1.bf16.msra.mxu0 0
        %1262 = vmatprep.subr.bf16.mxu0 0
        %1263 = vmatpush1.bf16.msra.mxu0 0
        %1264 = vmatprep.subr.bf16.mxu0 0
        %1265 = vmatpush1.bf16.msra.mxu0 0
        %1266 = vmatprep.subr.bf16.mxu0 0
        %1267 = vmatpush1.bf16.msra.mxu0 0
        %1268 = vmatprep.subr.bf16.mxu0 0
        %1269 = vmatpush1.bf16.msra.mxu0 0
        %1270 = vmatprep.subr.bf16.mxu0 0
        %1271 = vmatpush1.bf16.msra.mxu0 0
        %1272 = vmatprep.subr.bf16.mxu0 0
        %1273 = vmatpush1.bf16.msra.mxu0 0
        %1274 = vmatprep.mubr.bf16.mxu0 0
        %1275 = vmatmul.mubr.bf16.gmra.mrb[0].mxu0 %v1241
        %v1276 = vpop.f32.mrb[0].mxu0
        %v1277 = vadd.f32 0.0, %v1276
        %v1278 = vpop.f32.mrb[0].mxu0
        %v1279 = vadd.f32 0.0, %v1278
        %v1280 = vpop.f32.mrb[0].mxu0
        %v1281 = vpop.f32.mrb[0].mxu0
        %1282 = vdwg.mxu0
        %1283 = vmatprep.subr.bf16.mxu0 0
        %1284 = vmatpush1.bf16.msra.mxu0 %v702
        %1285 = vmatprep.subr.bf16.mxu0 0
        %1286 = vmatpush1.bf16.msra.mxu0 %v705
        %1287 = vmatprep.subr.bf16.mxu0 0
        %1288 = vmatpush1.bf16.msra.mxu0 %v708
        %1289 = vmatprep.subr.bf16.mxu0 0
        %1290 = vmatpush1.bf16.msra.mxu0 %v711
        %1291 = vmatprep.subr.bf16.mxu0 0
        %1292 = vmatpush1.bf16.msra.mxu0 %v714
        %1293 = vmatprep.subr.bf16.mxu0 0
        %1294 = vmatpush1.bf16.msra.mxu0 %v717
        %1295 = vmatprep.subr.bf16.mxu0 0
        %1296 = vmatpush1.bf16.msra.mxu0 %v720
        %1297 = vmatprep.subr.bf16.mxu0 0
        %1298 = vmatpush1.bf16.msra.mxu0 %v723
        %1299 = vmatprep.subr.bf16.mxu0 0
        %1300 = vmatpush1.bf16.msra.mxu0 0
        %1301 = vmatprep.subr.bf16.mxu0 0
        %1302 = vmatpush1.bf16.msra.mxu0 0
        %1303 = vmatprep.subr.bf16.mxu0 0
        %1304 = vmatpush1.bf16.msra.mxu0 0
        %1305 = vmatprep.subr.bf16.mxu0 0
        %1306 = vmatpush1.bf16.msra.mxu0 0
        %1307 = vmatprep.subr.bf16.mxu0 0
        %1308 = vmatpush1.bf16.msra.mxu0 0
        %1309 = vmatprep.subr.bf16.mxu0 0
        %1310 = vmatpush1.bf16.msra.mxu0 0
        %1311 = vmatprep.subr.bf16.mxu0 0
        %1312 = vmatpush1.bf16.msra.mxu0 0
        %1313 = vmatprep.subr.bf16.mxu0 0
        %1314 = vmatpush1.bf16.msra.mxu0 0
        %1315 = vmatprep.mubr.bf16.mxu0 0
        %1316 = vmatmul.mubr.bf16.gmra.mrb[0].mxu0 %v1241
        %v1317 = vpop.f32.mrb[0].mxu0
        %v1318 = vadd.f32 0.0, %v1317
        %v1319 = vpop.f32.mrb[0].mxu0
        %v1320 = vpop.f32.mrb[0].mxu0
        %v1321 = vpop.f32.mrb[0].mxu0
        %1322 = vdwg.mxu0
        %v1325 = vunpack.c.l.s4 1966171168
        %v1326 = vunpack.c.0.s8 %v1325
        %v1327 = vlaneseq
        %v1328 = vshrl.u32 %v1327, 7
        %v1329 = vsub.s32 %v1326, %v1328
        %v1330 = vrot.slane %v1279, %v1329
        %v1331 = vcombine.high %v1330, %v1330
        %v1333 = vunpack.c.l.s4 1966171168
        %v1334 = vunpack.c.0.s8 %v1333
        %v1335 = vlaneseq
        %v1336 = vshrl.u32 %v1335, 7
        %v1337 = vsub.s32 %v1334, %v1336
        %v1338 = vrot.slane %v1330, %v1337
        %v1340 = vunpack.c.l.s4 1966171168
        %v1341 = vunpack.c.0.s8 %v1340
        %v1342 = vlaneseq
        %v1343 = vshrl.u32 %v1342, 7
        %v1344 = vsub.s32 %v1341, %v1343
        %v1345 = vrot.slane %v1331, %v1344
        %1348 = vst [vmem:[%s503 + $0x21] sm:$0x1] %v1338
        %1349 = vst [vmem:[%s503 + $0x49] sm:$0x1] %v1345
        %v1352 = vunpack.c.l.s4 1966171168
        %v1353 = vunpack.c.0.s8 %v1352
        %v1354 = vlaneseq
        %v1355 = vshrl.u32 %v1354, 7
        %v1356 = vsub.s32 %v1353, %v1355
        %v1357 = vrot.slane %v1318, %v1356
        %v1358 = vcombine.high %v1357, %v1357
        %v1360 = vunpack.c.l.s4 1966171168
        %v1361 = vunpack.c.0.s8 %v1360
        %v1362 = vlaneseq
        %v1363 = vshrl.u32 %v1362, 7
        %v1364 = vsub.s32 %v1361, %v1363
        %v1365 = vrot.slane %v1357, %v1364
        %v1367 = vunpack.c.l.s4 1966171168
        %v1368 = vunpack.c.0.s8 %v1367
        %v1369 = vlaneseq
        %v1370 = vshrl.u32 %v1369, 7
        %v1371 = vsub.s32 %v1368, %v1370
        %v1372 = vrot.slane %v1358, %v1371
        %1375 = vst [vmem:[%s510 + $0x21] sm:$0x1] %v1365
        %1376 = vst [vmem:[%s510 + $0x49] sm:$0x1] %v1372
        %v1377 = vld [vmem:[%s503] sm:$0xff]
        %v1378 = vld [vmem:[%s503 + $0x8] sm:$0xff]
        %v1379 = vld [vmem:[%s503 + $0x10] sm:$0xff]
        %v1380 = vld [vmem:[%s503 + $0x18] sm:$0xff]
        %v1381 = vld [vmem:[%s503 + $0x20] sm:$0xff]
        %v1382 = vld [vmem:[%s503 + $0x28] sm:$0xff]
        %v1383 = vld [vmem:[%s503 + $0x30] sm:$0xff]
        %v1384 = vld [vmem:[%s503 + $0x38] sm:$0xff]
        %v1385 = vld [vmem:[%s503 + $0x40] sm:$0xff]
        %v1386 = vld [vmem:[%s503 + $0x48] sm:$0xff]
        %v1387 = vld [vmem:[%s510] sm:$0xff]
        %v1388 = vld [vmem:[%s510 + $0x8] sm:$0xff]
        %v1389 = vld [vmem:[%s510 + $0x10] sm:$0xff]
        %v1390 = vld [vmem:[%s510 + $0x18] sm:$0xff]
        %v1391 = vld [vmem:[%s510 + $0x20] sm:$0xff]
        %v1392 = vld [vmem:[%s510 + $0x28] sm:$0xff]
        %v1393 = vld [vmem:[%s510 + $0x30] sm:$0xff]
        %v1394 = vld [vmem:[%s510 + $0x38] sm:$0xff]
        %v1395 = vld [vmem:[%s510 + $0x40] sm:$0xff]
        %v1396 = vld [vmem:[%s510 + $0x48] sm:$0xff]
        %v1399 = vunpack.c.l.s4 1966171168
        %v1400 = vunpack.c.0.s8 %v1399
        %v1401 = vlaneseq
        %v1402 = vshrl.u32 %v1401, 7
        %v1403 = vsub.s32 %v1400, %v1402
        %v1404 = vrot.slane %v1277, %v1403
        %v1405 = vcombine.high %v1404, %v1404
        %v1407 = vunpack.c.l.s4 1966171168
        %v1408 = vunpack.c.0.s8 %v1407
        %v1409 = vlaneseq
        %v1410 = vshrl.u32 %v1409, 7
        %v1411 = vsub.s32 %v1408, %v1410
        %v1412 = vrot.slane %v1404, %v1411
        %v1414 = vunpack.c.l.s4 1966171168
        %v1415 = vunpack.c.0.s8 %v1414
        %v1416 = vlaneseq
        %v1417 = vshrl.u32 %v1416, 7
        %v1418 = vsub.s32 %v1415, %v1417
        %v1419 = vrot.slane %v1405, %v1418
        %v1422 = vpack.c.bf16 %v1412, %v1412
        %v1423 = vpack.c.bf16 %v1419, %v1419
        %v1424 = vpack.c.bf16 %v1378, %v1377
        %v1425 = vpack.c.bf16 %v1380, %v1379
        %v1426 = vpack.c.bf16 %v1381, %v1381
        %v1427 = vpack.c.bf16 %v1383, %v1382
        %v1428 = vpack.c.bf16 %v1385, %v1384
        %v1429 = vpack.c.bf16 %v1386, %v1386
        %1430 = vmatprep.subr.bf16.mxu0 0
        %1431 = vmatpush1.bf16.xpose.msra.mxu0 %v1424
        %1432 = vmatprep.subr.bf16.mxu0 0
        %1433 = vmatpush1.bf16.xpose.msra.mxu0 %v1425
        %1434 = vmatprep.subr.bf16.mxu0 0
        %1435 = vmatpush1.bf16.xpose.msra.mxu0 %v1426
        %1436 = vmatprep.subr.bf16.mxu0 0
        %1437 = vmatpush1.bf16.xpose.msra.mxu0 0
        %1438 = vmatprep.subr.bf16.mxu0 0
        %1439 = vmatpush1.bf16.xpose.msra.mxu0 0
        %1440 = vmatprep.subr.bf16.mxu0 0
        %1441 = vmatpush1.bf16.xpose.msra.mxu0 0
        %1442 = vmatprep.subr.bf16.mxu0 0
        %1443 = vmatpush1.bf16.xpose.msra.mxu0 0
        %1444 = vmatprep.subr.bf16.mxu0 0
        %1445 = vmatpush1.bf16.xpose.msra.mxu0 0
        %1446 = vmatprep.subr.bf16.mxu0 0
        %1447 = vmatpush1.bf16.xpose.msra.mxu0 0
        %1448 = vmatprep.subr.bf16.mxu0 0
        %1449 = vmatpush1.bf16.xpose.msra.mxu0 0
        %1450 = vmatprep.subr.bf16.mxu0 0
        %1451 = vmatpush1.bf16.xpose.msra.mxu0 0
        %1452 = vmatprep.subr.bf16.mxu0 0
        %1453 = vmatpush1.bf16.xpose.msra.mxu0 0
        %1454 = vmatprep.subr.bf16.mxu0 0
        %1455 = vmatpush1.bf16.xpose.msra.mxu0 0
        %1456 = vmatprep.subr.bf16.mxu0 0
        %1457 = vmatpush1.bf16.xpose.msra.mxu0 0
        %1458 = vmatprep.subr.bf16.mxu0 0
        %1459 = vmatpush1.bf16.xpose.msra.mxu0 0
        %1460 = vmatprep.subr.bf16.mxu0 0
        %1461 = vmatpush1.bf16.xpose.msra.mxu0 0
        %1462 = vmatprep.mubr.bf16.mxu0 0
        %1463 = vmatmul.mubr.bf16.gmra.mrb[0].mxu0 %v1422
        %v1464 = vpop.f32.mrb[0].mxu0
        %v1465 = vadd.f32 0.0, %v1464
        %v1466 = vpop.f32.mrb[0].mxu0
        %v1467 = vpop.f32.mrb[0].mxu0
        %v1468 = vpop.f32.mrb[0].mxu0
        %1469 = vdwg.mxu0
        %1470 = vmatprep.subr.bf16.mxu0 0
        %1471 = vmatpush1.bf16.xpose.msra.mxu0 %v1427
        %1472 = vmatprep.subr.bf16.mxu0 0
        %1473 = vmatpush1.bf16.xpose.msra.mxu0 %v1428
        %1474 = vmatprep.subr.bf16.mxu0 0
        %1475 = vmatpush1.bf16.xpose.msra.mxu0 %v1429
        %1476 = vmatprep.subr.bf16.mxu0 0
        %1477 = vmatpush1.bf16.xpose.msra.mxu0 0
        %1478 = vmatprep.subr.bf16.mxu0 0
        %1479 = vmatpush1.bf16.xpose.msra.mxu0 0
        %1480 = vmatprep.subr.bf16.mxu0 0
        %1481 = vmatpush1.bf16.xpose.msra.mxu0 0
        %1482 = vmatprep.subr.bf16.mxu0 0
        %1483 = vmatpush1.bf16.xpose.msra.mxu0 0
        %1484 = vmatprep.subr.bf16.mxu0 0
        %1485 = vmatpush1.bf16.xpose.msra.mxu0 0
        %1486 = vmatprep.subr.bf16.mxu0 0
        %1487 = vmatpush1.bf16.xpose.msra.mxu0 0
        %1488 = vmatprep.subr.bf16.mxu0 0
        %1489 = vmatpush1.bf16.xpose.msra.mxu0 0
        %1490 = vmatprep.subr.bf16.mxu0 0
        %1491 = vmatpush1.bf16.xpose.msra.mxu0 0
        %1492 = vmatprep.subr.bf16.mxu0 0
        %1493 = vmatpush1.bf16.xpose.msra.mxu0 0
        %1494 = vmatprep.subr.bf16.mxu0 0
        %1495 = vmatpush1.bf16.xpose.msra.mxu0 0
        %1496 = vmatprep.subr.bf16.mxu0 0
        %1497 = vmatpush1.bf16.xpose.msra.mxu0 0
        %1498 = vmatprep.subr.bf16.mxu0 0
        %1499 = vmatpush1.bf16.xpose.msra.mxu0 0
        %1500 = vmatprep.subr.bf16.mxu0 0
        %1501 = vmatpush1.bf16.xpose.msra.mxu0 0
        %1502 = vmatprep.mubr.bf16.mxu0 0
        %1503 = vmatmul.mubr.bf16.gmra.mrb[0].mxu0 %v1423
        %v1504 = vpop.f32.mrb[0].mxu0
        %v1505 = vadd.f32 0.0, %v1504
        %v1506 = vpop.f32.mrb[0].mxu0
        %v1507 = vpop.f32.mrb[0].mxu0
        %v1508 = vpop.f32.mrb[0].mxu0
        %1509 = vdwg.mxu0
        %v1510 = vmul.f32 %v1465, 0.125
        %v1511 = vmul.f32 %v1505, 0.125
        %v1512 = vsel %vm1018, %v1510, -inf
        %1513 = vmax.xlane.f32.xlu0 %v1512
        %v1514 = vpop.xlane.xlu0 %1513
        %v1515 = vsel %vm1018, %v1511, -inf
        %1516 = vmax.xlane.f32.xlu0 %v1515
        %v1517 = vpop.xlane.xlu0 %1516
        %v1518 = vsub.f32 %v1510, %v1514
        %v1519 = vsub.f32 %v1511, %v1517
        %v1520 = vmul.f32 %v1518, 1.442695
        %v1521 = vpow.pop %v1520
        %v1522 = vmul.f32 %v1519, 1.442695
        %v1523 = vpow.pop %v1522
        %v1524 = vsel %vm1018, %v1521, 0.0
        %1525 = vadd.xlane.f32.xlu0 %v1524
        %v1526 = vpop.xlane.xlu0 %1525
        %v1527 = vsel %vm1018, %v1523, 0.0
        %1528 = vadd.xlane.f32.xlu0 %v1527
        %v1529 = vpop.xlane.xlu0 %1528
        %v1530 = vrcp.pop %v1526
        %v1531 = vmul.f32 %v1521, %v1530
        %v1532 = vrcp.pop %v1529
        %v1533 = vmul.f32 %v1523, %v1532
        %v1534 = vpack.c.bf16 %v1531, %v1531
        %v1535 = vpack.c.bf16 %v1533, %v1533
        %v1536 = vpack.c.bf16 %v1388, %v1387
        %v1537 = vpack.c.bf16 %v1390, %v1389
        %v1538 = vpack.c.bf16 %v1391, %v1391
        %v1539 = vpack.c.bf16 %v1393, %v1392
        %v1540 = vpack.c.bf16 %v1395, %v1394
        %v1541 = vpack.c.bf16 %v1396, %v1396
        %v1543 = vsel %vm1049, %v1534, 0
        %v1546 = vsel %vm1053, %v1538, 0
        %1548 = vmatprep.subr.bf16.mxu0 0
        %1549 = vmatpush1.bf16.msra.mxu0 %v1536
        %1550 = vmatprep.subr.bf16.mxu0 0
        %1551 = vmatpush1.bf16.msra.mxu0 %v1537
        %1552 = vmatprep.subr.bf16.mxu0 0
        %1553 = vmatpush1.bf16.msra.mxu0 %v1546
        %1554 = vmatprep.subr.bf16.mxu0 0
        %1555 = vmatpush1.bf16.msra.mxu0 0
        %1556 = vmatprep.subr.bf16.mxu0 0
        %1557 = vmatpush1.bf16.msra.mxu0 0
        %1558 = vmatprep.subr.bf16.mxu0 0
        %1559 = vmatpush1.bf16.msra.mxu0 0
        %1560 = vmatprep.subr.bf16.mxu0 0
        %1561 = vmatpush1.bf16.msra.mxu0 0
        %1562 = vmatprep.subr.bf16.mxu0 0
        %1563 = vmatpush1.bf16.msra.mxu0 0
        %1564 = vmatprep.subr.bf16.mxu0 0
        %1565 = vmatpush1.bf16.msra.mxu0 0
        %1566 = vmatprep.subr.bf16.mxu0 0
        %1567 = vmatpush1.bf16.msra.mxu0 0
        %1568 = vmatprep.subr.bf16.mxu0 0
        %1569 = vmatpush1.bf16.msra.mxu0 0
        %1570 = vmatprep.subr.bf16.mxu0 0
        %1571 = vmatpush1.bf16.msra.mxu0 0
        %1572 = vmatprep.subr.bf16.mxu0 0
        %1573 = vmatpush1.bf16.msra.mxu0 0
        %1574 = vmatprep.subr.bf16.mxu0 0
        %1575 = vmatpush1.bf16.msra.mxu0 0
        %1576 = vmatprep.subr.bf16.mxu0 0
        %1577 = vmatpush1.bf16.msra.mxu0 0
        %1578 = vmatprep.subr.bf16.mxu0 0
        %1579 = vmatpush1.bf16.msra.mxu0 0
        %1580 = vmatprep.mubr.bf16.mxu0 0
        %1581 = vmatmul.mubr.bf16.gmra.mrb[0].mxu0 %v1543
        %v1582 = vpop.f32.mrb[0].mxu0
        %v1583 = vadd.f32 0.0, %v1582
        %v1584 = vpop.f32.mrb[0].mxu0
        %v1585 = vpop.f32.mrb[0].mxu0
        %v1586 = vpop.f32.mrb[0].mxu0
        %1587 = vdwg.mxu0
        %v1589 = vsel %vm1049, %v1535, 0
        %v1592 = vsel %vm1053, %v1541, 0
        %1594 = vmatprep.subr.bf16.mxu0 0
        %1595 = vmatpush1.bf16.msra.mxu0 %v1539
        %1596 = vmatprep.subr.bf16.mxu0 0
        %1597 = vmatpush1.bf16.msra.mxu0 %v1540
        %1598 = vmatprep.subr.bf16.mxu0 0
        %1599 = vmatpush1.bf16.msra.mxu0 %v1592
        %1600 = vmatprep.subr.bf16.mxu0 0
        %1601 = vmatpush1.bf16.msra.mxu0 0
        %1602 = vmatprep.subr.bf16.mxu0 0
        %1603 = vmatpush1.bf16.msra.mxu0 0
        %1604 = vmatprep.subr.bf16.mxu0 0
        %1605 = vmatpush1.bf16.msra.mxu0 0
        %1606 = vmatprep.subr.bf16.mxu0 0
        %1607 = vmatpush1.bf16.msra.mxu0 0
        %1608 = vmatprep.subr.bf16.mxu0 0
        %1609 = vmatpush1.bf16.msra.mxu0 0
        %1610 = vmatprep.subr.bf16.mxu0 0
        %1611 = vmatpush1.bf16.msra.mxu0 0
        %1612 = vmatprep.subr.bf16.mxu0 0
        %1613 = vmatpush1.bf16.msra.mxu0 0
        %1614 = vmatprep.subr.bf16.mxu0 0
        %1615 = vmatpush1.bf16.msra.mxu0 0
        %1616 = vmatprep.subr.bf16.mxu0 0
        %1617 = vmatpush1.bf16.msra.mxu0 0
        %1618 = vmatprep.subr.bf16.mxu0 0
        %1619 = vmatpush1.bf16.msra.mxu0 0
        %1620 = vmatprep.subr.bf16.mxu0 0
        %1621 = vmatpush1.bf16.msra.mxu0 0
        %1622 = vmatprep.subr.bf16.mxu0 0
        %1623 = vmatpush1.bf16.msra.mxu0 0
        %1624 = vmatprep.subr.bf16.mxu0 0
        %1625 = vmatpush1.bf16.msra.mxu0 0
        %1626 = vmatprep.mubr.bf16.mxu0 0
        %1627 = vmatmul.mubr.bf16.gmra.mrb[0].mxu0 %v1589
        %v1628 = vpop.f32.mrb[0].mxu0
        %v1629 = vadd.f32 0.0, %v1628
        %v1630 = vpop.f32.mrb[0].mxu0
        %v1631 = vpop.f32.mrb[0].mxu0
        %v1632 = vpop.f32.mrb[0].mxu0
        %1633 = vdwg.mxu0
        %v1634 = vpack.c.bf16 %v1583, %v1583
        %v1635 = vpack.c.bf16 %v1629, %v1629
        %v1638 = vunpack.c.l.b16 %v1634
        %v1639 = vunpack.c.l.b16 %v1635
        %v1640 = vrot.slane %v1639, 7
        %v1641 = vsel %vm616, %v1640, %v1638
        %v1642 = vpack.c.b16 %v1641, %v1641
        %1644 = vmatprep.subr.bf16.mxu0 0
        %1645 = vmatpush1.bf16.msra.mxu0 %v1185
        %1646 = vmatprep.subr.bf16.mxu0 0
        %1647 = vmatpush1.bf16.msra.mxu0 %v1186
        %1648 = vmatprep.subr.bf16.mxu0 0
        %1649 = vmatpush1.bf16.msra.mxu0 %v1187
        %1650 = vmatprep.subr.bf16.mxu0 0
        %1651 = vmatpush1.bf16.msra.mxu0 %v1188
        %1652 = vmatprep.subr.bf16.mxu0 0
        %1653 = vmatpush1.bf16.msra.mxu0 %v1189
        %1654 = vmatprep.subr.bf16.mxu0 0
        %1655 = vmatpush1.bf16.msra.mxu0 %v1190
        %1656 = vmatprep.subr.bf16.mxu0 0
        %1657 = vmatpush1.bf16.msra.mxu0 %v1191
        %1658 = vmatprep.subr.bf16.mxu0 0
        %1659 = vmatpush1.bf16.msra.mxu0 %v1192
        %1660 = vmatprep.subr.bf16.mxu0 0
        %1661 = vmatpush1.bf16.msra.mxu0 0
        %1662 = vmatprep.subr.bf16.mxu0 0
        %1663 = vmatpush1.bf16.msra.mxu0 0
        %1664 = vmatprep.subr.bf16.mxu0 0
        %1665 = vmatpush1.bf16.msra.mxu0 0
        %1666 = vmatprep.subr.bf16.mxu0 0
        %1667 = vmatpush1.bf16.msra.mxu0 0
        %1668 = vmatprep.subr.bf16.mxu0 0
        %1669 = vmatpush1.bf16.msra.mxu0 0
        %1670 = vmatprep.subr.bf16.mxu0 0
        %1671 = vmatpush1.bf16.msra.mxu0 0
        %1672 = vmatprep.subr.bf16.mxu0 0
        %1673 = vmatpush1.bf16.msra.mxu0 0
        %1674 = vmatprep.subr.bf16.mxu0 0
        %1675 = vmatpush1.bf16.msra.mxu0 0
        %1676 = vmatprep.mubr.bf16.mxu0 0
        %1677 = vmatmul.mubr.bf16.gmra.mrb[0].mxu0 %v1642
        %v1678 = vpop.f32.mrb[0].mxu0
        %v1679 = vadd.f32 0.0, %v1678
        %v1680 = vpop.f32.mrb[0].mxu0
        %v1681 = vpop.f32.mrb[0].mxu0
        %v1682 = vpop.f32.mrb[0].mxu0
        %1683 = vdwg.mxu0
        %v1684 = vpack.c.bf16 %v1679, %v1679
        %1685 = vmatprep.subr.bf16.mxu0 %v701
        %1686 = vmatpush1.bf16.msra.mxu0 %v700
        %1687 = vmatprep.subr.bf16.mxu0 %v704
        %1688 = vmatpush1.bf16.msra.mxu0 %v703
        %1689 = vmatprep.subr.bf16.mxu0 %v707
        %1690 = vmatpush1.bf16.msra.mxu0 %v706
        %1691 = vmatprep.subr.bf16.mxu0 %v710
        %1692 = vmatpush1.bf16.msra.mxu0 %v709
        %1693 = vmatprep.subr.bf16.mxu0 %v713
        %1694 = vmatpush1.bf16.msra.mxu0 %v712
        %1695 = vmatprep.subr.bf16.mxu0 %v716
        %1696 = vmatpush1.bf16.msra.mxu0 %v715
        %1697 = vmatprep.subr.bf16.mxu0 %v719
        %1698 = vmatpush1.bf16.msra.mxu0 %v718
        %1699 = vmatprep.subr.bf16.mxu0 %v722
        %1700 = vmatpush1.bf16.msra.mxu0 %v721
        %1701 = vmatprep.subr.bf16.mxu0 0
        %1702 = vmatpush1.bf16.msra.mxu0 0
        %1703 = vmatprep.subr.bf16.mxu0 0
        %1704 = vmatpush1.bf16.msra.mxu0 0
        %1705 = vmatprep.subr.bf16.mxu0 0
        %1706 = vmatpush1.bf16.msra.mxu0 0
        %1707 = vmatprep.subr.bf16.mxu0 0
        %1708 = vmatpush1.bf16.msra.mxu0 0
        %1709 = vmatprep.subr.bf16.mxu0 0
        %1710 = vmatpush1.bf16.msra.mxu0 0
        %1711 = vmatprep.subr.bf16.mxu0 0
        %1712 = vmatpush1.bf16.msra.mxu0 0
        %1713 = vmatprep.subr.bf16.mxu0 0
        %1714 = vmatpush1.bf16.msra.mxu0 0
        %1715 = vmatprep.subr.bf16.mxu0 0
        %1716 = vmatpush1.bf16.msra.mxu0 0
        %1717 = vmatprep.mubr.bf16.mxu0 0
        %1718 = vmatmul.mubr.bf16.gmra.mrb[0].mxu0 %v1684
        %v1719 = vpop.f32.mrb[0].mxu0
        %v1720 = vadd.f32 0.0, %v1719
        %v1721 = vpop.f32.mrb[0].mxu0
        %v1722 = vadd.f32 0.0, %v1721
        %v1723 = vpop.f32.mrb[0].mxu0
        %v1724 = vpop.f32.mrb[0].mxu0
        %1725 = vdwg.mxu0
        %1726 = vmatprep.subr.bf16.mxu0 0
        %1727 = vmatpush1.bf16.msra.mxu0 %v702
        %1728 = vmatprep.subr.bf16.mxu0 0
        %1729 = vmatpush1.bf16.msra.mxu0 %v705
        %1730 = vmatprep.subr.bf16.mxu0 0
        %1731 = vmatpush1.bf16.msra.mxu0 %v708
        %1732 = vmatprep.subr.bf16.mxu0 0
        %1733 = vmatpush1.bf16.msra.mxu0 %v711
        %1734 = vmatprep.subr.bf16.mxu0 0
        %1735 = vmatpush1.bf16.msra.mxu0 %v714
        %1736 = vmatprep.subr.bf16.mxu0 0
        %1737 = vmatpush1.bf16.msra.mxu0 %v717
        %1738 = vmatprep.subr.bf16.mxu0 0
        %1739 = vmatpush1.bf16.msra.mxu0 %v720
        %1740 = vmatprep.subr.bf16.mxu0 0
        %1741 = vmatpush1.bf16.msra.mxu0 %v723
        %1742 = vmatprep.subr.bf16.mxu0 0
        %1743 = vmatpush1.bf16.msra.mxu0 0
        %1744 = vmatprep.subr.bf16.mxu0 0
        %1745 = vmatpush1.bf16.msra.mxu0 0
        %1746 = vmatprep.subr.bf16.mxu0 0
        %1747 = vmatpush1.bf16.msra.mxu0 0
        %1748 = vmatprep.subr.bf16.mxu0 0
        %1749 = vmatpush1.bf16.msra.mxu0 0
        %1750 = vmatprep.subr.bf16.mxu0 0
        %1751 = vmatpush1.bf16.msra.mxu0 0
        %1752 = vmatprep.subr.bf16.mxu0 0
        %1753 = vmatpush1.bf16.msra.mxu0 0
        %1754 = vmatprep.subr.bf16.mxu0 0
        %1755 = vmatpush1.bf16.msra.mxu0 0
        %1756 = vmatprep.subr.bf16.mxu0 0
        %1757 = vmatpush1.bf16.msra.mxu0 0
        %1758 = vmatprep.mubr.bf16.mxu0 0
        %1759 = vmatmul.mubr.bf16.gmra.mrb[0].mxu0 %v1684
        %v1760 = vpop.f32.mrb[0].mxu0
        %v1761 = vadd.f32 0.0, %v1760
        %v1762 = vpop.f32.mrb[0].mxu0
        %v1763 = vpop.f32.mrb[0].mxu0
        %v1764 = vpop.f32.mrb[0].mxu0
        %1765 = vdwg.mxu0
        %v1768 = vunpack.c.l.s4 1966171168
        %v1769 = vunpack.c.0.s8 %v1768
        %v1770 = vlaneseq
        %v1771 = vshrl.u32 %v1770, 7
        %v1772 = vsub.s32 %v1769, %v1771
        %v1773 = vrot.slane %v1722, %v1772
        %v1774 = vcombine.high %v1773, %v1773
        %v1776 = vunpack.c.l.s4 1966171168
        %v1777 = vunpack.c.0.s8 %v1776
        %v1778 = vlaneseq
        %v1779 = vshrl.u32 %v1778, 7
        %v1780 = vsub.s32 %v1777, %v1779
        %v1781 = vrot.slane %v1773, %v1780
        %v1783 = vunpack.c.l.s4 1966171168
        %v1784 = vunpack.c.0.s8 %v1783
        %v1785 = vlaneseq
        %v1786 = vshrl.u32 %v1785, 7
        %v1787 = vsub.s32 %v1784, %v1786
        %v1788 = vrot.slane %v1774, %v1787
        %1791 = vst [vmem:[%s503 + $0x22] sm:$0x1] %v1781
        %1792 = vst [vmem:[%s503 + $0x4a] sm:$0x1] %v1788
        %v1795 = vunpack.c.l.s4 1966171168
        %v1796 = vunpack.c.0.s8 %v1795
        %v1797 = vlaneseq
        %v1798 = vshrl.u32 %v1797, 7
        %v1799 = vsub.s32 %v1796, %v1798
        %v1800 = vrot.slane %v1761, %v1799
        %v1801 = vcombine.high %v1800, %v1800
        %v1803 = vunpack.c.l.s4 1966171168
        %v1804 = vunpack.c.0.s8 %v1803
        %v1805 = vlaneseq
        %v1806 = vshrl.u32 %v1805, 7
        %v1807 = vsub.s32 %v1804, %v1806
        %v1808 = vrot.slane %v1800, %v1807
        %v1810 = vunpack.c.l.s4 1966171168
        %v1811 = vunpack.c.0.s8 %v1810
        %v1812 = vlaneseq
        %v1813 = vshrl.u32 %v1812, 7
        %v1814 = vsub.s32 %v1811, %v1813
        %v1815 = vrot.slane %v1801, %v1814
        %1818 = vst [vmem:[%s510 + $0x22] sm:$0x1] %v1808
        %1819 = vst [vmem:[%s510 + $0x4a] sm:$0x1] %v1815
        %v1820 = vld [vmem:[%s503] sm:$0xff]
        %v1821 = vld [vmem:[%s503 + $0x8] sm:$0xff]
        %v1822 = vld [vmem:[%s503 + $0x10] sm:$0xff]
        %v1823 = vld [vmem:[%s503 + $0x18] sm:$0xff]
        %v1824 = vld [vmem:[%s503 + $0x20] sm:$0xff]
        %v1825 = vld [vmem:[%s503 + $0x28] sm:$0xff]
        %v1826 = vld [vmem:[%s503 + $0x30] sm:$0xff]
        %v1827 = vld [vmem:[%s503 + $0x38] sm:$0xff]
        %v1828 = vld [vmem:[%s503 + $0x40] sm:$0xff]
        %v1829 = vld [vmem:[%s503 + $0x48] sm:$0xff]
        %v1830 = vld [vmem:[%s510] sm:$0xff]
        %v1831 = vld [vmem:[%s510 + $0x8] sm:$0xff]
        %v1832 = vld [vmem:[%s510 + $0x10] sm:$0xff]
        %v1833 = vld [vmem:[%s510 + $0x18] sm:$0xff]
        %v1834 = vld [vmem:[%s510 + $0x20] sm:$0xff]
        %v1835 = vld [vmem:[%s510 + $0x28] sm:$0xff]
        %v1836 = vld [vmem:[%s510 + $0x30] sm:$0xff]
        %v1837 = vld [vmem:[%s510 + $0x38] sm:$0xff]
        %v1838 = vld [vmem:[%s510 + $0x40] sm:$0xff]
        %v1839 = vld [vmem:[%s510 + $0x48] sm:$0xff]
        %v1842 = vunpack.c.l.s4 1966171168
        %v1843 = vunpack.c.0.s8 %v1842
        %v1844 = vlaneseq
        %v1845 = vshrl.u32 %v1844, 7
        %v1846 = vsub.s32 %v1843, %v1845
        %v1847 = vrot.slane %v1720, %v1846
        %v1848 = vcombine.high %v1847, %v1847
        %v1850 = vunpack.c.l.s4 1966171168
        %v1851 = vunpack.c.0.s8 %v1850
        %v1852 = vlaneseq
        %v1853 = vshrl.u32 %v1852, 7
        %v1854 = vsub.s32 %v1851, %v1853
        %v1855 = vrot.slane %v1847, %v1854
        %v1857 = vunpack.c.l.s4 1966171168
        %v1858 = vunpack.c.0.s8 %v1857
        %v1859 = vlaneseq
        %v1860 = vshrl.u32 %v1859, 7
        %v1861 = vsub.s32 %v1858, %v1860
        %v1862 = vrot.slane %v1848, %v1861
        %v1865 = vpack.c.bf16 %v1855, %v1855
        %v1866 = vpack.c.bf16 %v1862, %v1862
        %v1867 = vpack.c.bf16 %v1821, %v1820
        %v1868 = vpack.c.bf16 %v1823, %v1822
        %v1869 = vpack.c.bf16 %v1824, %v1824
        %v1870 = vpack.c.bf16 %v1826, %v1825
        %v1871 = vpack.c.bf16 %v1828, %v1827
        %v1872 = vpack.c.bf16 %v1829, %v1829
        %1873 = vmatprep.subr.bf16.mxu0 0
        %1874 = vmatpush1.bf16.xpose.msra.mxu0 %v1867
        %1875 = vmatprep.subr.bf16.mxu0 0
        %1876 = vmatpush1.bf16.xpose.msra.mxu0 %v1868
        %1877 = vmatprep.subr.bf16.mxu0 0
        %1878 = vmatpush1.bf16.xpose.msra.mxu0 %v1869
        %1879 = vmatprep.subr.bf16.mxu0 0
        %1880 = vmatpush1.bf16.xpose.msra.mxu0 0
        %1881 = vmatprep.subr.bf16.mxu0 0
        %1882 = vmatpush1.bf16.xpose.msra.mxu0 0
        %1883 = vmatprep.subr.bf16.mxu0 0
        %1884 = vmatpush1.bf16.xpose.msra.mxu0 0
        %1885 = vmatprep.subr.bf16.mxu0 0
        %1886 = vmatpush1.bf16.xpose.msra.mxu0 0
        %1887 = vmatprep.subr.bf16.mxu0 0
        %1888 = vmatpush1.bf16.xpose.msra.mxu0 0
        %1889 = vmatprep.subr.bf16.mxu0 0
        %1890 = vmatpush1.bf16.xpose.msra.mxu0 0
        %1891 = vmatprep.subr.bf16.mxu0 0
        %1892 = vmatpush1.bf16.xpose.msra.mxu0 0
        %1893 = vmatprep.subr.bf16.mxu0 0
        %1894 = vmatpush1.bf16.xpose.msra.mxu0 0
        %1895 = vmatprep.subr.bf16.mxu0 0
        %1896 = vmatpush1.bf16.xpose.msra.mxu0 0
        %1897 = vmatprep.subr.bf16.mxu0 0
        %1898 = vmatpush1.bf16.xpose.msra.mxu0 0
        %1899 = vmatprep.subr.bf16.mxu0 0
        %1900 = vmatpush1.bf16.xpose.msra.mxu0 0
        %1901 = vmatprep.subr.bf16.mxu0 0
        %1902 = vmatpush1.bf16.xpose.msra.mxu0 0
        %1903 = vmatprep.subr.bf16.mxu0 0
        %1904 = vmatpush1.bf16.xpose.msra.mxu0 0
        %1905 = vmatprep.mubr.bf16.mxu0 0
        %1906 = vmatmul.mubr.bf16.gmra.mrb[0].mxu0 %v1865
        %v1907 = vpop.f32.mrb[0].mxu0
        %v1908 = vadd.f32 0.0, %v1907
        %v1909 = vpop.f32.mrb[0].mxu0
        %v1910 = vpop.f32.mrb[0].mxu0
        %v1911 = vpop.f32.mrb[0].mxu0
        %1912 = vdwg.mxu0
        %1913 = vmatprep.subr.bf16.mxu0 0
        %1914 = vmatpush1.bf16.xpose.msra.mxu0 %v1870
        %1915 = vmatprep.subr.bf16.mxu0 0
        %1916 = vmatpush1.bf16.xpose.msra.mxu0 %v1871
        %1917 = vmatprep.subr.bf16.mxu0 0
        %1918 = vmatpush1.bf16.xpose.msra.mxu0 %v1872
        %1919 = vmatprep.subr.bf16.mxu0 0
        %1920 = vmatpush1.bf16.xpose.msra.mxu0 0
        %1921 = vmatprep.subr.bf16.mxu0 0
        %1922 = vmatpush1.bf16.xpose.msra.mxu0 0
        %1923 = vmatprep.subr.bf16.mxu0 0
        %1924 = vmatpush1.bf16.xpose.msra.mxu0 0
        %1925 = vmatprep.subr.bf16.mxu0 0
        %1926 = vmatpush1.bf16.xpose.msra.mxu0 0
        %1927 = vmatprep.subr.bf16.mxu0 0
        %1928 = vmatpush1.bf16.xpose.msra.mxu0 0
        %1929 = vmatprep.subr.bf16.mxu0 0
        %1930 = vmatpush1.bf16.xpose.msra.mxu0 0
        %1931 = vmatprep.subr.bf16.mxu0 0
        %1932 = vmatpush1.bf16.xpose.msra.mxu0 0
        %1933 = vmatprep.subr.bf16.mxu0 0
        %1934 = vmatpush1.bf16.xpose.msra.mxu0 0
        %1935 = vmatprep.subr.bf16.mxu0 0
        %1936 = vmatpush1.bf16.xpose.msra.mxu0 0
        %1937 = vmatprep.subr.bf16.mxu0 0
        %1938 = vmatpush1.bf16.xpose.msra.mxu0 0
        %1939 = vmatprep.subr.bf16.mxu0 0
        %1940 = vmatpush1.bf16.xpose.msra.mxu0 0
        %1941 = vmatprep.subr.bf16.mxu0 0
        %1942 = vmatpush1.bf16.xpose.msra.mxu0 0
        %1943 = vmatprep.subr.bf16.mxu0 0
        %1944 = vmatpush1.bf16.xpose.msra.mxu0 0
        %1945 = vmatprep.mubr.bf16.mxu0 0
        %1946 = vmatmul.mubr.bf16.gmra.mrb[0].mxu0 %v1866
        %v1947 = vpop.f32.mrb[0].mxu0
        %v1948 = vadd.f32 0.0, %v1947
        %v1949 = vpop.f32.mrb[0].mxu0
        %v1950 = vpop.f32.mrb[0].mxu0
        %v1951 = vpop.f32.mrb[0].mxu0
        %1952 = vdwg.mxu0
        %v1953 = vmul.f32 %v1908, 0.125
        %v1954 = vmul.f32 %v1948, 0.125
        %v1955 = vsel %vm1018, %v1953, -inf
        %1956 = vmax.xlane.f32.xlu0 %v1955
        %v1957 = vpop.xlane.xlu0 %1956
        %v1958 = vsel %vm1018, %v1954, -inf
        %1959 = vmax.xlane.f32.xlu0 %v1958
        %v1960 = vpop.xlane.xlu0 %1959
        %v1961 = vsub.f32 %v1953, %v1957
        %v1962 = vsub.f32 %v1954, %v1960
        %v1963 = vmul.f32 %v1961, 1.442695
        %v1964 = vpow.pop %v1963
        %v1965 = vmul.f32 %v1962, 1.442695
        %v1966 = vpow.pop %v1965
        %v1967 = vsel %vm1018, %v1964, 0.0
        %1968 = vadd.xlane.f32.xlu0 %v1967
        %v1969 = vpop.xlane.xlu0 %1968
        %v1970 = vsel %vm1018, %v1966, 0.0
        %1971 = vadd.xlane.f32.xlu0 %v1970
        %v1972 = vpop.xlane.xlu0 %1971
        %v1973 = vrcp.pop %v1969
        %v1974 = vmul.f32 %v1964, %v1973
        %v1975 = vrcp.pop %v1972
        %v1976 = vmul.f32 %v1966, %v1975
        %v1977 = vpack.c.bf16 %v1974, %v1974
        %v1978 = vpack.c.bf16 %v1976, %v1976
        %v1979 = vpack.c.bf16 %v1831, %v1830
        %v1980 = vpack.c.bf16 %v1833, %v1832
        %v1981 = vpack.c.bf16 %v1834, %v1834
        %v1982 = vpack.c.bf16 %v1836, %v1835
        %v1983 = vpack.c.bf16 %v1838, %v1837
        %v1984 = vpack.c.bf16 %v1839, %v1839
        %v1986 = vsel %vm1049, %v1977, 0
        %v1989 = vsel %vm1053, %v1981, 0
        %1991 = vmatprep.subr.bf16.mxu0 0
        %1992 = vmatpush1.bf16.msra.mxu0 %v1979
        %1993 = vmatprep.subr.bf16.mxu0 0
        %1994 = vmatpush1.bf16.msra.mxu0 %v1980
        %1995 = vmatprep.subr.bf16.mxu0 0
        %1996 = vmatpush1.bf16.msra.mxu0 %v1989
        %1997 = vmatprep.subr.bf16.mxu0 0
        %1998 = vmatpush1.bf16.msra.mxu0 0
        %1999 = vmatprep.subr.bf16.mxu0 0
        %2000 = vmatpush1.bf16.msra.mxu0 0
        %2001 = vmatprep.subr.bf16.mxu0 0
        %2002 = vmatpush1.bf16.msra.mxu0 0
        %2003 = vmatprep.subr.bf16.mxu0 0
        %2004 = vmatpush1.bf16.msra.mxu0 0
        %2005 = vmatprep.subr.bf16.mxu0 0
        %2006 = vmatpush1.bf16.msra.mxu0 0
        %2007 = vmatprep.subr.bf16.mxu0 0
        %2008 = vmatpush1.bf16.msra.mxu0 0
        %2009 = vmatprep.subr.bf16.mxu0 0
        %2010 = vmatpush1.bf16.msra.mxu0 0
        %2011 = vmatprep.subr.bf16.mxu0 0
        %2012 = vmatpush1.bf16.msra.mxu0 0
        %2013 = vmatprep.subr.bf16.mxu0 0
        %2014 = vmatpush1.bf16.msra.mxu0 0
        %2015 = vmatprep.subr.bf16.mxu0 0
        %2016 = vmatpush1.bf16.msra.mxu0 0
        %2017 = vmatprep.subr.bf16.mxu0 0
        %2018 = vmatpush1.bf16.msra.mxu0 0
        %2019 = vmatprep.subr.bf16.mxu0 0
        %2020 = vmatpush1.bf16.msra.mxu0 0
        %2021 = vmatprep.subr.bf16.mxu0 0
        %2022 = vmatpush1.bf16.msra.mxu0 0
        %2023 = vmatprep.mubr.bf16.mxu0 0
        %2024 = vmatmul.mubr.bf16.gmra.mrb[0].mxu0 %v1986
        %v2025 = vpop.f32.mrb[0].mxu0
        %v2026 = vadd.f32 0.0, %v2025
        %v2027 = vpop.f32.mrb[0].mxu0
        %v2028 = vpop.f32.mrb[0].mxu0
        %v2029 = vpop.f32.mrb[0].mxu0
        %2030 = vdwg.mxu0
        %v2032 = vsel %vm1049, %v1978, 0
        %v2035 = vsel %vm1053, %v1984, 0
        %2037 = vmatprep.subr.bf16.mxu0 0
        %2038 = vmatpush1.bf16.msra.mxu0 %v1982
        %2039 = vmatprep.subr.bf16.mxu0 0
        %2040 = vmatpush1.bf16.msra.mxu0 %v1983
        %2041 = vmatprep.subr.bf16.mxu0 0
        %2042 = vmatpush1.bf16.msra.mxu0 %v2035
        %2043 = vmatprep.subr.bf16.mxu0 0
        %2044 = vmatpush1.bf16.msra.mxu0 0
        %2045 = vmatprep.subr.bf16.mxu0 0
        %2046 = vmatpush1.bf16.msra.mxu0 0
        %2047 = vmatprep.subr.bf16.mxu0 0
        %2048 = vmatpush1.bf16.msra.mxu0 0
        %2049 = vmatprep.subr.bf16.mxu0 0
        %2050 = vmatpush1.bf16.msra.mxu0 0
        %2051 = vmatprep.subr.bf16.mxu0 0
        %2052 = vmatpush1.bf16.msra.mxu0 0
        %2053 = vmatprep.subr.bf16.mxu0 0
        %2054 = vmatpush1.bf16.msra.mxu0 0
        %2055 = vmatprep.subr.bf16.mxu0 0
        %2056 = vmatpush1.bf16.msra.mxu0 0
        %2057 = vmatprep.subr.bf16.mxu0 0
        %2058 = vmatpush1.bf16.msra.mxu0 0
        %2059 = vmatprep.subr.bf16.mxu0 0
        %2060 = vmatpush1.bf16.msra.mxu0 0
        %2061 = vmatprep.subr.bf16.mxu0 0
        %2062 = vmatpush1.bf16.msra.mxu0 0
        %2063 = vmatprep.subr.bf16.mxu0 0
        %2064 = vmatpush1.bf16.msra.mxu0 0
        %2065 = vmatprep.subr.bf16.mxu0 0
        %2066 = vmatpush1.bf16.msra.mxu0 0
        %2067 = vmatprep.subr.bf16.mxu0 0
        %2068 = vmatpush1.bf16.msra.mxu0 0
        %2069 = vmatprep.mubr.bf16.mxu0 0
        %2070 = vmatmul.mubr.bf16.gmra.mrb[0].mxu0 %v2032
        %v2071 = vpop.f32.mrb[0].mxu0
        %v2072 = vadd.f32 0.0, %v2071
        %v2073 = vpop.f32.mrb[0].mxu0
        %v2074 = vpop.f32.mrb[0].mxu0
        %v2075 = vpop.f32.mrb[0].mxu0
        %2076 = vdwg.mxu0
        %v2077 = vpack.c.bf16 %v2026, %v2026
        %v2078 = vpack.c.bf16 %v2072, %v2072
        %v2081 = vunpack.c.l.b16 %v2077
        %v2082 = vunpack.c.l.b16 %v2078
        %v2083 = vrot.slane %v2082, 7
        %v2084 = vsel %vm616, %v2083, %v2081
        %v2085 = vpack.c.b16 %v2084, %v2084
        %2087 = vmatprep.subr.bf16.mxu0 0
        %2088 = vmatpush1.bf16.msra.mxu0 %v1185
        %2089 = vmatprep.subr.bf16.mxu0 0
        %2090 = vmatpush1.bf16.msra.mxu0 %v1186
        %2091 = vmatprep.subr.bf16.mxu0 0
        %2092 = vmatpush1.bf16.msra.mxu0 %v1187
        %2093 = vmatprep.subr.bf16.mxu0 0
        %2094 = vmatpush1.bf16.msra.mxu0 %v1188
        %2095 = vmatprep.subr.bf16.mxu0 0
        %2096 = vmatpush1.bf16.msra.mxu0 %v1189
        %2097 = vmatprep.subr.bf16.mxu0 0
        %2098 = vmatpush1.bf16.msra.mxu0 %v1190
        %2099 = vmatprep.subr.bf16.mxu0 0
        %2100 = vmatpush1.bf16.msra.mxu0 %v1191
        %2101 = vmatprep.subr.bf16.mxu0 0
        %2102 = vmatpush1.bf16.msra.mxu0 %v1192
        %2103 = vmatprep.subr.bf16.mxu0 0
        %2104 = vmatpush1.bf16.msra.mxu0 0
        %2105 = vmatprep.subr.bf16.mxu0 0
        %2106 = vmatpush1.bf16.msra.mxu0 0
        %2107 = vmatprep.subr.bf16.mxu0 0
        %2108 = vmatpush1.bf16.msra.mxu0 0
        %2109 = vmatprep.subr.bf16.mxu0 0
        %2110 = vmatpush1.bf16.msra.mxu0 0
        %2111 = vmatprep.subr.bf16.mxu0 0
        %2112 = vmatpush1.bf16.msra.mxu0 0
        %2113 = vmatprep.subr.bf16.mxu0 0
        %2114 = vmatpush1.bf16.msra.mxu0 0
        %2115 = vmatprep.subr.bf16.mxu0 0
        %2116 = vmatpush1.bf16.msra.mxu0 0
        %2117 = vmatprep.subr.bf16.mxu0 0
        %2118 = vmatpush1.bf16.msra.mxu0 0
        %2119 = vmatprep.mubr.bf16.mxu0 0
        %2120 = vmatmul.mubr.bf16.gmra.mrb[0].mxu0 %v2085
        %v2121 = vpop.f32.mrb[0].mxu0
        %v2122 = vadd.f32 0.0, %v2121
        %v2123 = vpop.f32.mrb[0].mxu0
        %v2124 = vpop.f32.mrb[0].mxu0
        %v2125 = vpop.f32.mrb[0].mxu0
        %2126 = vdwg.mxu0
        %v2127 = vpack.c.bf16 %v2122, %v2122
        %2128 = vmatprep.subr.bf16.mxu0 %v701
        %2129 = vmatpush1.bf16.msra.mxu0 %v700
        %2130 = vmatprep.subr.bf16.mxu0 %v704
        %2131 = vmatpush1.bf16.msra.mxu0 %v703
        %2132 = vmatprep.subr.bf16.mxu0 %v707
        %2133 = vmatpush1.bf16.msra.mxu0 %v706
        %2134 = vmatprep.subr.bf16.mxu0 %v710
        %2135 = vmatpush1.bf16.msra.mxu0 %v709
        %2136 = vmatprep.subr.bf16.mxu0 %v713
        %2137 = vmatpush1.bf16.msra.mxu0 %v712
        %2138 = vmatprep.subr.bf16.mxu0 %v716
        %2139 = vmatpush1.bf16.msra.mxu0 %v715
        %2140 = vmatprep.subr.bf16.mxu0 %v719
        %2141 = vmatpush1.bf16.msra.mxu0 %v718
        %2142 = vmatprep.subr.bf16.mxu0 %v722
        %2143 = vmatpush1.bf16.msra.mxu0 %v721
        %2144 = vmatprep.subr.bf16.mxu0 0
        %2145 = vmatpush1.bf16.msra.mxu0 0
        %2146 = vmatprep.subr.bf16.mxu0 0
        %2147 = vmatpush1.bf16.msra.mxu0 0
        %2148 = vmatprep.subr.bf16.mxu0 0
        %2149 = vmatpush1.bf16.msra.mxu0 0
        %2150 = vmatprep.subr.bf16.mxu0 0
        %2151 = vmatpush1.bf16.msra.mxu0 0
        %2152 = vmatprep.subr.bf16.mxu0 0
        %2153 = vmatpush1.bf16.msra.mxu0 0
        %2154 = vmatprep.subr.bf16.mxu0 0
        %2155 = vmatpush1.bf16.msra.mxu0 0
        %2156 = vmatprep.subr.bf16.mxu0 0
        %2157 = vmatpush1.bf16.msra.mxu0 0
        %2158 = vmatprep.subr.bf16.mxu0 0
        %2159 = vmatpush1.bf16.msra.mxu0 0
        %2160 = vmatprep.mubr.bf16.mxu0 0
        %2161 = vmatmul.mubr.bf16.gmra.mrb[0].mxu0 %v2127
        %v2162 = vpop.f32.mrb[0].mxu0
        %v2163 = vadd.f32 0.0, %v2162
        %v2164 = vpop.f32.mrb[0].mxu0
        %v2165 = vadd.f32 0.0, %v2164
        %v2166 = vpop.f32.mrb[0].mxu0
        %v2167 = vpop.f32.mrb[0].mxu0
        %2168 = vdwg.mxu0
        %2169 = vmatprep.subr.bf16.mxu0 0
        %2170 = vmatpush1.bf16.msra.mxu0 %v702
        %2171 = vmatprep.subr.bf16.mxu0 0
        %2172 = vmatpush1.bf16.msra.mxu0 %v705
        %2173 = vmatprep.subr.bf16.mxu0 0
        %2174 = vmatpush1.bf16.msra.mxu0 %v708
        %2175 = vmatprep.subr.bf16.mxu0 0
        %2176 = vmatpush1.bf16.msra.mxu0 %v711
        %2177 = vmatprep.subr.bf16.mxu0 0
        %2178 = vmatpush1.bf16.msra.mxu0 %v714
        %2179 = vmatprep.subr.bf16.mxu0 0
        %2180 = vmatpush1.bf16.msra.mxu0 %v717
        %2181 = vmatprep.subr.bf16.mxu0 0
        %2182 = vmatpush1.bf16.msra.mxu0 %v720
        %2183 = vmatprep.subr.bf16.mxu0 0
        %2184 = vmatpush1.bf16.msra.mxu0 %v723
        %2185 = vmatprep.subr.bf16.mxu0 0
        %2186 = vmatpush1.bf16.msra.mxu0 0
        %2187 = vmatprep.subr.bf16.mxu0 0
        %2188 = vmatpush1.bf16.msra.mxu0 0
        %2189 = vmatprep.subr.bf16.mxu0 0
        %2190 = vmatpush1.bf16.msra.mxu0 0
        %2191 = vmatprep.subr.bf16.mxu0 0
        %2192 = vmatpush1.bf16.msra.mxu0 0
        %2193 = vmatprep.subr.bf16.mxu0 0
        %2194 = vmatpush1.bf16.msra.mxu0 0
        %2195 = vmatprep.subr.bf16.mxu0 0
        %2196 = vmatpush1.bf16.msra.mxu0 0
        %2197 = vmatprep.subr.bf16.mxu0 0
        %2198 = vmatpush1.bf16.msra.mxu0 0
        %2199 = vmatprep.subr.bf16.mxu0 0
        %2200 = vmatpush1.bf16.msra.mxu0 0
        %2201 = vmatprep.mubr.bf16.mxu0 0
        %2202 = vmatmul.mubr.bf16.gmra.mrb[0].mxu0 %v2127
        %v2203 = vpop.f32.mrb[0].mxu0
        %v2204 = vadd.f32 0.0, %v2203
        %v2205 = vpop.f32.mrb[0].mxu0
        %v2206 = vpop.f32.mrb[0].mxu0
        %v2207 = vpop.f32.mrb[0].mxu0
        %2208 = vdwg.mxu0
        %v2211 = vunpack.c.l.s4 1966171168
        %v2212 = vunpack.c.0.s8 %v2211
        %v2213 = vlaneseq
        %v2214 = vshrl.u32 %v2213, 7
        %v2215 = vsub.s32 %v2212, %v2214
        %v2216 = vrot.slane %v2165, %v2215
        %v2217 = vcombine.high %v2216, %v2216
        %v2219 = vunpack.c.l.s4 1966171168
        %v2220 = vunpack.c.0.s8 %v2219
        %v2221 = vlaneseq
        %v2222 = vshrl.u32 %v2221, 7
        %v2223 = vsub.s32 %v2220, %v2222
        %v2224 = vrot.slane %v2216, %v2223
        %v2226 = vunpack.c.l.s4 1966171168
        %v2227 = vunpack.c.0.s8 %v2226
        %v2228 = vlaneseq
        %v2229 = vshrl.u32 %v2228, 7
        %v2230 = vsub.s32 %v2227, %v2229
        %v2231 = vrot.slane %v2217, %v2230
        %2234 = vst [vmem:[%s503 + $0x23] sm:$0x1] %v2224
        %2235 = vst [vmem:[%s503 + $0x4b] sm:$0x1] %v2231
        %v2238 = vunpack.c.l.s4 1966171168
        %v2239 = vunpack.c.0.s8 %v2238
        %v2240 = vlaneseq
        %v2241 = vshrl.u32 %v2240, 7
        %v2242 = vsub.s32 %v2239, %v2241
        %v2243 = vrot.slane %v2204, %v2242
        %v2244 = vcombine.high %v2243, %v2243
        %v2246 = vunpack.c.l.s4 1966171168
        %v2247 = vunpack.c.0.s8 %v2246
        %v2248 = vlaneseq
        %v2249 = vshrl.u32 %v2248, 7
        %v2250 = vsub.s32 %v2247, %v2249
        %v2251 = vrot.slane %v2243, %v2250
        %v2253 = vunpack.c.l.s4 1966171168
        %v2254 = vunpack.c.0.s8 %v2253
        %v2255 = vlaneseq
        %v2256 = vshrl.u32 %v2255, 7
        %v2257 = vsub.s32 %v2254, %v2256
        %v2258 = vrot.slane %v2244, %v2257
        %2261 = vst [vmem:[%s510 + $0x23] sm:$0x1] %v2251
        %2262 = vst [vmem:[%s510 + $0x4b] sm:$0x1] %v2258
        %v2263 = vld [vmem:[%s503] sm:$0xff]
        %v2264 = vld [vmem:[%s503 + $0x8] sm:$0xff]
        %v2265 = vld [vmem:[%s503 + $0x10] sm:$0xff]
        %v2266 = vld [vmem:[%s503 + $0x18] sm:$0xff]
        %v2267 = vld [vmem:[%s503 + $0x20] sm:$0xff]
        %v2268 = vld [vmem:[%s503 + $0x28] sm:$0xff]
        %v2269 = vld [vmem:[%s503 + $0x30] sm:$0xff]
        %v2270 = vld [vmem:[%s503 + $0x38] sm:$0xff]
        %v2271 = vld [vmem:[%s503 + $0x40] sm:$0xff]
        %v2272 = vld [vmem:[%s503 + $0x48] sm:$0xff]
        %v2273 = vld [vmem:[%s510] sm:$0xff]
        %v2274 = vld [vmem:[%s510 + $0x8] sm:$0xff]
        %v2275 = vld [vmem:[%s510 + $0x10] sm:$0xff]
        %v2276 = vld [vmem:[%s510 + $0x18] sm:$0xff]
        %v2277 = vld [vmem:[%s510 + $0x20] sm:$0xff]
        %v2278 = vld [vmem:[%s510 + $0x28] sm:$0xff]
        %v2279 = vld [vmem:[%s510 + $0x30] sm:$0xff]
        %v2280 = vld [vmem:[%s510 + $0x38] sm:$0xff]
        %v2281 = vld [vmem:[%s510 + $0x40] sm:$0xff]
        %v2282 = vld [vmem:[%s510 + $0x48] sm:$0xff]
        %v2285 = vunpack.c.l.s4 1966171168
        %v2286 = vunpack.c.0.s8 %v2285
        %v2287 = vlaneseq
        %v2288 = vshrl.u32 %v2287, 7
        %v2289 = vsub.s32 %v2286, %v2288
        %v2290 = vrot.slane %v2163, %v2289
        %v2291 = vcombine.high %v2290, %v2290
        %v2293 = vunpack.c.l.s4 1966171168
        %v2294 = vunpack.c.0.s8 %v2293
        %v2295 = vlaneseq
        %v2296 = vshrl.u32 %v2295, 7
        %v2297 = vsub.s32 %v2294, %v2296
        %v2298 = vrot.slane %v2290, %v2297
        %v2300 = vunpack.c.l.s4 1966171168
        %v2301 = vunpack.c.0.s8 %v2300
        %v2302 = vlaneseq
        %v2303 = vshrl.u32 %v2302, 7
        %v2304 = vsub.s32 %v2301, %v2303
        %v2305 = vrot.slane %v2291, %v2304
        %v2308 = vpack.c.bf16 %v2298, %v2298
        %v2309 = vpack.c.bf16 %v2305, %v2305
        %v2310 = vpack.c.bf16 %v2264, %v2263
        %v2311 = vpack.c.bf16 %v2266, %v2265
        %v2312 = vpack.c.bf16 %v2267, %v2267
        %v2313 = vpack.c.bf16 %v2269, %v2268
        %v2314 = vpack.c.bf16 %v2271, %v2270
        %v2315 = vpack.c.bf16 %v2272, %v2272
        %2316 = vmatprep.subr.bf16.mxu0 0
        %2317 = vmatpush1.bf16.xpose.msra.mxu0 %v2310
        %2318 = vmatprep.subr.bf16.mxu0 0
        %2319 = vmatpush1.bf16.xpose.msra.mxu0 %v2311
        %2320 = vmatprep.subr.bf16.mxu0 0
        %2321 = vmatpush1.bf16.xpose.msra.mxu0 %v2312
        %2322 = vmatprep.subr.bf16.mxu0 0
        %2323 = vmatpush1.bf16.xpose.msra.mxu0 0
        %2324 = vmatprep.subr.bf16.mxu0 0
        %2325 = vmatpush1.bf16.xpose.msra.mxu0 0
        %2326 = vmatprep.subr.bf16.mxu0 0
        %2327 = vmatpush1.bf16.xpose.msra.mxu0 0
        %2328 = vmatprep.subr.bf16.mxu0 0
        %2329 = vmatpush1.bf16.xpose.msra.mxu0 0
        %2330 = vmatprep.subr.bf16.mxu0 0
        %2331 = vmatpush1.bf16.xpose.msra.mxu0 0
        %2332 = vmatprep.subr.bf16.mxu0 0
        %2333 = vmatpush1.bf16.xpose.msra.mxu0 0
        %2334 = vmatprep.subr.bf16.mxu0 0
        %2335 = vmatpush1.bf16.xpose.msra.mxu0 0
        %2336 = vmatprep.subr.bf16.mxu0 0
        %2337 = vmatpush1.bf16.xpose.msra.mxu0 0
        %2338 = vmatprep.subr.bf16.mxu0 0
        %2339 = vmatpush1.bf16.xpose.msra.mxu0 0
        %2340 = vmatprep.subr.bf16.mxu0 0
        %2341 = vmatpush1.bf16.xpose.msra.mxu0 0
        %2342 = vmatprep.subr.bf16.mxu0 0
        %2343 = vmatpush1.bf16.xpose.msra.mxu0 0
        %2344 = vmatprep.subr.bf16.mxu0 0
        %2345 = vmatpush1.bf16.xpose.msra.mxu0 0
        %2346 = vmatprep.subr.bf16.mxu0 0
        %2347 = vmatpush1.bf16.xpose.msra.mxu0 0
        %2348 = vmatprep.mubr.bf16.mxu0 0
        %2349 = vmatmul.mubr.bf16.gmra.mrb[0].mxu0 %v2308
        %v2350 = vpop.f32.mrb[0].mxu0
        %v2351 = vadd.f32 0.0, %v2350
        %v2352 = vpop.f32.mrb[0].mxu0
        %v2353 = vpop.f32.mrb[0].mxu0
        %v2354 = vpop.f32.mrb[0].mxu0
        %2355 = vdwg.mxu0
        %2356 = vmatprep.subr.bf16.mxu0 0
        %2357 = vmatpush1.bf16.xpose.msra.mxu0 %v2313
        %2358 = vmatprep.subr.bf16.mxu0 0
        %2359 = vmatpush1.bf16.xpose.msra.mxu0 %v2314
        %2360 = vmatprep.subr.bf16.mxu0 0
        %2361 = vmatpush1.bf16.xpose.msra.mxu0 %v2315
        %2362 = vmatprep.subr.bf16.mxu0 0
        %2363 = vmatpush1.bf16.xpose.msra.mxu0 0
        %2364 = vmatprep.subr.bf16.mxu0 0
        %2365 = vmatpush1.bf16.xpose.msra.mxu0 0
        %2366 = vmatprep.subr.bf16.mxu0 0
        %2367 = vmatpush1.bf16.xpose.msra.mxu0 0
        %2368 = vmatprep.subr.bf16.mxu0 0
        %2369 = vmatpush1.bf16.xpose.msra.mxu0 0
        %2370 = vmatprep.subr.bf16.mxu0 0
        %2371 = vmatpush1.bf16.xpose.msra.mxu0 0
        %2372 = vmatprep.subr.bf16.mxu0 0
        %2373 = vmatpush1.bf16.xpose.msra.mxu0 0
        %2374 = vmatprep.subr.bf16.mxu0 0
        %2375 = vmatpush1.bf16.xpose.msra.mxu0 0
        %2376 = vmatprep.subr.bf16.mxu0 0
        %2377 = vmatpush1.bf16.xpose.msra.mxu0 0
        %2378 = vmatprep.subr.bf16.mxu0 0
        %2379 = vmatpush1.bf16.xpose.msra.mxu0 0
        %2380 = vmatprep.subr.bf16.mxu0 0
        %2381 = vmatpush1.bf16.xpose.msra.mxu0 0
        %2382 = vmatprep.subr.bf16.mxu0 0
        %2383 = vmatpush1.bf16.xpose.msra.mxu0 0
        %2384 = vmatprep.subr.bf16.mxu0 0
        %2385 = vmatpush1.bf16.xpose.msra.mxu0 0
        %2386 = vmatprep.subr.bf16.mxu0 0
        %2387 = vmatpush1.bf16.xpose.msra.mxu0 0
        %2388 = vmatprep.mubr.bf16.mxu0 0
        %2389 = vmatmul.mubr.bf16.gmra.mrb[0].mxu0 %v2309
        %v2390 = vpop.f32.mrb[0].mxu0
        %v2391 = vadd.f32 0.0, %v2390
        %v2392 = vpop.f32.mrb[0].mxu0
        %v2393 = vpop.f32.mrb[0].mxu0
        %v2394 = vpop.f32.mrb[0].mxu0
        %2395 = vdwg.mxu0
        %v2396 = vmul.f32 %v2351, 0.125
        %v2397 = vmul.f32 %v2391, 0.125
        %v2398 = vsel %vm1018, %v2396, -inf
        %2399 = vmax.xlane.f32.xlu0 %v2398
        %v2400 = vpop.xlane.xlu0 %2399
        %v2401 = vsel %vm1018, %v2397, -inf
        %2402 = vmax.xlane.f32.xlu0 %v2401
        %v2403 = vpop.xlane.xlu0 %2402
        %v2404 = vsub.f32 %v2396, %v2400
        %v2405 = vsub.f32 %v2397, %v2403
        %v2406 = vmul.f32 %v2404, 1.442695
        %v2407 = vpow.pop %v2406
        %v2408 = vmul.f32 %v2405, 1.442695
        %v2409 = vpow.pop %v2408
        %v2410 = vsel %vm1018, %v2407, 0.0
        %2411 = vadd.xlane.f32.xlu0 %v2410
        %v2412 = vpop.xlane.xlu0 %2411
        %v2413 = vsel %vm1018, %v2409, 0.0
        %2414 = vadd.xlane.f32.xlu0 %v2413
        %v2415 = vpop.xlane.xlu0 %2414
        %v2416 = vrcp.pop %v2412
        %v2417 = vmul.f32 %v2407, %v2416
        %v2418 = vrcp.pop %v2415
        %v2419 = vmul.f32 %v2409, %v2418
        %v2420 = vpack.c.bf16 %v2417, %v2417
        %v2421 = vpack.c.bf16 %v2419, %v2419
        %v2422 = vpack.c.bf16 %v2274, %v2273
        %v2423 = vpack.c.bf16 %v2276, %v2275
        %v2424 = vpack.c.bf16 %v2277, %v2277
        %v2425 = vpack.c.bf16 %v2279, %v2278
        %v2426 = vpack.c.bf16 %v2281, %v2280
        %v2427 = vpack.c.bf16 %v2282, %v2282
        %v2429 = vsel %vm1049, %v2420, 0
        %v2432 = vsel %vm1053, %v2424, 0
        %2434 = vmatprep.subr.bf16.mxu0 0
        %2435 = vmatpush1.bf16.msra.mxu0 %v2422
        %2436 = vmatprep.subr.bf16.mxu0 0
        %2437 = vmatpush1.bf16.msra.mxu0 %v2423
        %2438 = vmatprep.subr.bf16.mxu0 0
        %2439 = vmatpush1.bf16.msra.mxu0 %v2432
        %2440 = vmatprep.subr.bf16.mxu0 0
        %2441 = vmatpush1.bf16.msra.mxu0 0
        %2442 = vmatprep.subr.bf16.mxu0 0
        %2443 = vmatpush1.bf16.msra.mxu0 0
        %2444 = vmatprep.subr.bf16.mxu0 0
        %2445 = vmatpush1.bf16.msra.mxu0 0
        %2446 = vmatprep.subr.bf16.mxu0 0
        %2447 = vmatpush1.bf16.msra.mxu0 0
        %2448 = vmatprep.subr.bf16.mxu0 0
        %2449 = vmatpush1.bf16.msra.mxu0 0
        %2450 = vmatprep.subr.bf16.mxu0 0
        %2451 = vmatpush1.bf16.msra.mxu0 0
        %2452 = vmatprep.subr.bf16.mxu0 0
        %2453 = vmatpush1.bf16.msra.mxu0 0
        %2454 = vmatprep.subr.bf16.mxu0 0
        %2455 = vmatpush1.bf16.msra.mxu0 0
        %2456 = vmatprep.subr.bf16.mxu0 0
        %2457 = vmatpush1.bf16.msra.mxu0 0
        %2458 = vmatprep.subr.bf16.mxu0 0
        %2459 = vmatpush1.bf16.msra.mxu0 0
        %2460 = vmatprep.subr.bf16.mxu0 0
        %2461 = vmatpush1.bf16.msra.mxu0 0
        %2462 = vmatprep.subr.bf16.mxu0 0
        %2463 = vmatpush1.bf16.msra.mxu0 0
        %2464 = vmatprep.subr.bf16.mxu0 0
        %2465 = vmatpush1.bf16.msra.mxu0 0
        %2466 = vmatprep.mubr.bf16.mxu0 0
        %2467 = vmatmul.mubr.bf16.gmra.mrb[0].mxu0 %v2429
        %v2468 = vpop.f32.mrb[0].mxu0
        %v2469 = vadd.f32 0.0, %v2468
        %v2470 = vpop.f32.mrb[0].mxu0
        %v2471 = vpop.f32.mrb[0].mxu0
        %v2472 = vpop.f32.mrb[0].mxu0
        %2473 = vdwg.mxu0
        %v2475 = vsel %vm1049, %v2421, 0
        %v2478 = vsel %vm1053, %v2427, 0
        %2480 = vmatprep.subr.bf16.mxu0 0
        %2481 = vmatpush1.bf16.msra.mxu0 %v2425
        %2482 = vmatprep.subr.bf16.mxu0 0
        %2483 = vmatpush1.bf16.msra.mxu0 %v2426
        %2484 = vmatprep.subr.bf16.mxu0 0
        %2485 = vmatpush1.bf16.msra.mxu0 %v2478
        %2486 = vmatprep.subr.bf16.mxu0 0
        %2487 = vmatpush1.bf16.msra.mxu0 0
        %2488 = vmatprep.subr.bf16.mxu0 0
        %2489 = vmatpush1.bf16.msra.mxu0 0
        %2490 = vmatprep.subr.bf16.mxu0 0
        %2491 = vmatpush1.bf16.msra.mxu0 0
        %2492 = vmatprep.subr.bf16.mxu0 0
        %2493 = vmatpush1.bf16.msra.mxu0 0
        %2494 = vmatprep.subr.bf16.mxu0 0
        %2495 = vmatpush1.bf16.msra.mxu0 0
        %2496 = vmatprep.subr.bf16.mxu0 0
        %2497 = vmatpush1.bf16.msra.mxu0 0
        %2498 = vmatprep.subr.bf16.mxu0 0
        %2499 = vmatpush1.bf16.msra.mxu0 0
        %2500 = vmatprep.subr.bf16.mxu0 0
        %2501 = vmatpush1.bf16.msra.mxu0 0
        %2502 = vmatprep.subr.bf16.mxu0 0
        %2503 = vmatpush1.bf16.msra.mxu0 0
        %2504 = vmatprep.subr.bf16.mxu0 0
        %2505 = vmatpush1.bf16.msra.mxu0 0
        %2506 = vmatprep.subr.bf16.mxu0 0
        %2507 = vmatpush1.bf16.msra.mxu0 0
        %2508 = vmatprep.subr.bf16.mxu0 0
        %2509 = vmatpush1.bf16.msra.mxu0 0
        %2510 = vmatprep.subr.bf16.mxu0 0
        %2511 = vmatpush1.bf16.msra.mxu0 0
        %2512 = vmatprep.mubr.bf16.mxu0 0
        %2513 = vmatmul.mubr.bf16.gmra.mrb[0].mxu0 %v2475
        %v2514 = vpop.f32.mrb[0].mxu0
        %v2515 = vadd.f32 0.0, %v2514
        %v2516 = vpop.f32.mrb[0].mxu0
        %v2517 = vpop.f32.mrb[0].mxu0
        %v2518 = vpop.f32.mrb[0].mxu0
        %2519 = vdwg.mxu0
        %v2520 = vpack.c.bf16 %v2469, %v2469
        %v2521 = vpack.c.bf16 %v2515, %v2515
        %v2524 = vunpack.c.l.b16 %v2520
        %v2525 = vunpack.c.l.b16 %v2521
        %v2526 = vrot.slane %v2525, 7
        %v2527 = vsel %vm616, %v2526, %v2524
        %v2528 = vpack.c.b16 %v2527, %v2527
        %2530 = vmatprep.subr.bf16.mxu0 0
        %2531 = vmatpush1.bf16.msra.mxu0 %v1185
        %2532 = vmatprep.subr.bf16.mxu0 0
        %2533 = vmatpush1.bf16.msra.mxu0 %v1186
        %2534 = vmatprep.subr.bf16.mxu0 0
        %2535 = vmatpush1.bf16.msra.mxu0 %v1187
        %2536 = vmatprep.subr.bf16.mxu0 0
        %2537 = vmatpush1.bf16.msra.mxu0 %v1188
        %2538 = vmatprep.subr.bf16.mxu0 0
        %2539 = vmatpush1.bf16.msra.mxu0 %v1189
        %2540 = vmatprep.subr.bf16.mxu0 0
        %2541 = vmatpush1.bf16.msra.mxu0 %v1190
        %2542 = vmatprep.subr.bf16.mxu0 0
        %2543 = vmatpush1.bf16.msra.mxu0 %v1191
        %2544 = vmatprep.subr.bf16.mxu0 0
        %2545 = vmatpush1.bf16.msra.mxu0 %v1192
        %2546 = vmatprep.subr.bf16.mxu0 0
        %2547 = vmatpush1.bf16.msra.mxu0 0
        %2548 = vmatprep.subr.bf16.mxu0 0
        %2549 = vmatpush1.bf16.msra.mxu0 0
        %2550 = vmatprep.subr.bf16.mxu0 0
        %2551 = vmatpush1.bf16.msra.mxu0 0
        %2552 = vmatprep.subr.bf16.mxu0 0
        %2553 = vmatpush1.bf16.msra.mxu0 0
        %2554 = vmatprep.subr.bf16.mxu0 0
        %2555 = vmatpush1.bf16.msra.mxu0 0
        %2556 = vmatprep.subr.bf16.mxu0 0
        %2557 = vmatpush1.bf16.msra.mxu0 0
        %2558 = vmatprep.subr.bf16.mxu0 0
        %2559 = vmatpush1.bf16.msra.mxu0 0
        %2560 = vmatprep.subr.bf16.mxu0 0
        %2561 = vmatpush1.bf16.msra.mxu0 0
        %2562 = vmatprep.mubr.bf16.mxu0 0
        %2563 = vmatmul.mubr.bf16.gmra.mrb[0].mxu0 %v2528
        %v2564 = vpop.f32.mrb[0].mxu0
        %v2565 = vadd.f32 0.0, %v2564
        %v2566 = vpop.f32.mrb[0].mxu0
        %v2567 = vpop.f32.mrb[0].mxu0
        %v2568 = vpop.f32.mrb[0].mxu0
        %2569 = vdwg.mxu0
        %v2570 = vpack.c.bf16 %v2565, %v2565
        %2571 = vmatprep.subr.bf16.mxu0 %v701
        %2572 = vmatpush1.bf16.msra.mxu0 %v700
        %2573 = vmatprep.subr.bf16.mxu0 %v704
        %2574 = vmatpush1.bf16.msra.mxu0 %v703
        %2575 = vmatprep.subr.bf16.mxu0 %v707
        %2576 = vmatpush1.bf16.msra.mxu0 %v706
        %2577 = vmatprep.subr.bf16.mxu0 %v710
        %2578 = vmatpush1.bf16.msra.mxu0 %v709
        %2579 = vmatprep.subr.bf16.mxu0 %v713
        %2580 = vmatpush1.bf16.msra.mxu0 %v712
        %2581 = vmatprep.subr.bf16.mxu0 %v716
        %2582 = vmatpush1.bf16.msra.mxu0 %v715
        %2583 = vmatprep.subr.bf16.mxu0 %v719
        %2584 = vmatpush1.bf16.msra.mxu0 %v718
        %2585 = vmatprep.subr.bf16.mxu0 %v722
        %2586 = vmatpush1.bf16.msra.mxu0 %v721
        %2587 = vmatprep.subr.bf16.mxu0 0
        %2588 = vmatpush1.bf16.msra.mxu0 0
        %2589 = vmatprep.subr.bf16.mxu0 0
        %2590 = vmatpush1.bf16.msra.mxu0 0
        %2591 = vmatprep.subr.bf16.mxu0 0
        %2592 = vmatpush1.bf16.msra.mxu0 0
        %2593 = vmatprep.subr.bf16.mxu0 0
        %2594 = vmatpush1.bf16.msra.mxu0 0
        %2595 = vmatprep.subr.bf16.mxu0 0
        %2596 = vmatpush1.bf16.msra.mxu0 0
        %2597 = vmatprep.subr.bf16.mxu0 0
        %2598 = vmatpush1.bf16.msra.mxu0 0
        %2599 = vmatprep.subr.bf16.mxu0 0
        %2600 = vmatpush1.bf16.msra.mxu0 0
        %2601 = vmatprep.subr.bf16.mxu0 0
        %2602 = vmatpush1.bf16.msra.mxu0 0
        %2603 = vmatprep.mubr.bf16.mxu0 0
        %2604 = vmatmul.mubr.bf16.gmra.mrb[0].mxu0 %v2570
        %v2605 = vpop.f32.mrb[0].mxu0
        %v2606 = vadd.f32 0.0, %v2605
        %v2607 = vpop.f32.mrb[0].mxu0
        %v2608 = vadd.f32 0.0, %v2607
        %v2609 = vpop.f32.mrb[0].mxu0
        %v2610 = vpop.f32.mrb[0].mxu0
        %2611 = vdwg.mxu0
        %2612 = vmatprep.subr.bf16.mxu0 0
        %2613 = vmatpush1.bf16.msra.mxu0 %v702
        %2614 = vmatprep.subr.bf16.mxu0 0
        %2615 = vmatpush1.bf16.msra.mxu0 %v705
        %2616 = vmatprep.subr.bf16.mxu0 0
        %2617 = vmatpush1.bf16.msra.mxu0 %v708
        %2618 = vmatprep.subr.bf16.mxu0 0
        %2619 = vmatpush1.bf16.msra.mxu0 %v711
        %2620 = vmatprep.subr.bf16.mxu0 0
        %2621 = vmatpush1.bf16.msra.mxu0 %v714
        %2622 = vmatprep.subr.bf16.mxu0 0
        %2623 = vmatpush1.bf16.msra.mxu0 %v717
        %2624 = vmatprep.subr.bf16.mxu0 0
        %2625 = vmatpush1.bf16.msra.mxu0 %v720
        %2626 = vmatprep.subr.bf16.mxu0 0
        %2627 = vmatpush1.bf16.msra.mxu0 %v723
        %2628 = vmatprep.subr.bf16.mxu0 0
        %2629 = vmatpush1.bf16.msra.mxu0 0
        %2630 = vmatprep.subr.bf16.mxu0 0
        %2631 = vmatpush1.bf16.msra.mxu0 0
        %2632 = vmatprep.subr.bf16.mxu0 0
        %2633 = vmatpush1.bf16.msra.mxu0 0
        %2634 = vmatprep.subr.bf16.mxu0 0
        %2635 = vmatpush1.bf16.msra.mxu0 0
        %2636 = vmatprep.subr.bf16.mxu0 0
        %2637 = vmatpush1.bf16.msra.mxu0 0
        %2638 = vmatprep.subr.bf16.mxu0 0
        %2639 = vmatpush1.bf16.msra.mxu0 0
        %2640 = vmatprep.subr.bf16.mxu0 0
        %2641 = vmatpush1.bf16.msra.mxu0 0
        %2642 = vmatprep.subr.bf16.mxu0 0
        %2643 = vmatpush1.bf16.msra.mxu0 0
        %2644 = vmatprep.mubr.bf16.mxu0 0
        %2645 = vmatmul.mubr.bf16.gmra.mrb[0].mxu0 %v2570
        %v2646 = vpop.f32.mrb[0].mxu0
        %v2647 = vadd.f32 0.0, %v2646
        %v2648 = vpop.f32.mrb[0].mxu0
        %v2649 = vpop.f32.mrb[0].mxu0
        %v2650 = vpop.f32.mrb[0].mxu0
        %2651 = vdwg.mxu0
        %v2654 = vunpack.c.l.s4 1966171168
        %v2655 = vunpack.c.0.s8 %v2654
        %v2656 = vlaneseq
        %v2657 = vshrl.u32 %v2656, 7
        %v2658 = vsub.s32 %v2655, %v2657
        %v2659 = vrot.slane %v2608, %v2658
        %v2660 = vcombine.high %v2659, %v2659
        %v2662 = vunpack.c.l.s4 1966171168
        %v2663 = vunpack.c.0.s8 %v2662
        %v2664 = vlaneseq
        %v2665 = vshrl.u32 %v2664, 7
        %v2666 = vsub.s32 %v2663, %v2665
        %v2667 = vrot.slane %v2659, %v2666
        %v2669 = vunpack.c.l.s4 1966171168
        %v2670 = vunpack.c.0.s8 %v2669
        %v2671 = vlaneseq
        %v2672 = vshrl.u32 %v2671, 7
        %v2673 = vsub.s32 %v2670, %v2672
        %v2674 = vrot.slane %v2660, %v2673
        %2677 = vst [vmem:[%s503 + $0x24] sm:$0x1] %v2667
        %2678 = vst [vmem:[%s503 + $0x4c] sm:$0x1] %v2674
        %v2681 = vunpack.c.l.s4 1966171168
        %v2682 = vunpack.c.0.s8 %v2681
        %v2683 = vlaneseq
        %v2684 = vshrl.u32 %v2683, 7
        %v2685 = vsub.s32 %v2682, %v2684
        %v2686 = vrot.slane %v2647, %v2685
        %v2687 = vcombine.high %v2686, %v2686
        %v2689 = vunpack.c.l.s4 1966171168
        %v2690 = vunpack.c.0.s8 %v2689
        %v2691 = vlaneseq
        %v2692 = vshrl.u32 %v2691, 7
        %v2693 = vsub.s32 %v2690, %v2692
        %v2694 = vrot.slane %v2686, %v2693
        %v2696 = vunpack.c.l.s4 1966171168
        %v2697 = vunpack.c.0.s8 %v2696
        %v2698 = vlaneseq
        %v2699 = vshrl.u32 %v2698, 7
        %v2700 = vsub.s32 %v2697, %v2699
        %v2701 = vrot.slane %v2687, %v2700
        %2704 = vst [vmem:[%s510 + $0x24] sm:$0x1] %v2694
        %2705 = vst [vmem:[%s510 + $0x4c] sm:$0x1] %v2701
        %v2706 = vld [vmem:[%s503] sm:$0xff]
        %v2707 = vld [vmem:[%s503 + $0x8] sm:$0xff]
        %v2708 = vld [vmem:[%s503 + $0x10] sm:$0xff]
        %v2709 = vld [vmem:[%s503 + $0x18] sm:$0xff]
        %v2710 = vld [vmem:[%s503 + $0x20] sm:$0xff]
        %v2711 = vld [vmem:[%s503 + $0x28] sm:$0xff]
        %v2712 = vld [vmem:[%s503 + $0x30] sm:$0xff]
        %v2713 = vld [vmem:[%s503 + $0x38] sm:$0xff]
        %v2714 = vld [vmem:[%s503 + $0x40] sm:$0xff]
        %v2715 = vld [vmem:[%s503 + $0x48] sm:$0xff]
        %v2716 = vld [vmem:[%s510] sm:$0xff]
        %v2717 = vld [vmem:[%s510 + $0x8] sm:$0xff]
        %v2718 = vld [vmem:[%s510 + $0x10] sm:$0xff]
        %v2719 = vld [vmem:[%s510 + $0x18] sm:$0xff]
        %v2720 = vld [vmem:[%s510 + $0x20] sm:$0xff]
        %v2721 = vld [vmem:[%s510 + $0x28] sm:$0xff]
        %v2722 = vld [vmem:[%s510 + $0x30] sm:$0xff]
        %v2723 = vld [vmem:[%s510 + $0x38] sm:$0xff]
        %v2724 = vld [vmem:[%s510 + $0x40] sm:$0xff]
        %v2725 = vld [vmem:[%s510 + $0x48] sm:$0xff]
        %v2728 = vunpack.c.l.s4 1966171168
        %v2729 = vunpack.c.0.s8 %v2728
        %v2730 = vlaneseq
        %v2731 = vshrl.u32 %v2730, 7
        %v2732 = vsub.s32 %v2729, %v2731
        %v2733 = vrot.slane %v2606, %v2732
        %v2734 = vcombine.high %v2733, %v2733
        %v2736 = vunpack.c.l.s4 1966171168
        %v2737 = vunpack.c.0.s8 %v2736
        %v2738 = vlaneseq
        %v2739 = vshrl.u32 %v2738, 7
        %v2740 = vsub.s32 %v2737, %v2739
        %v2741 = vrot.slane %v2733, %v2740
        %v2743 = vunpack.c.l.s4 1966171168
        %v2744 = vunpack.c.0.s8 %v2743
        %v2745 = vlaneseq
        %v2746 = vshrl.u32 %v2745, 7
        %v2747 = vsub.s32 %v2744, %v2746
        %v2748 = vrot.slane %v2734, %v2747
        %v2751 = vpack.c.bf16 %v2741, %v2741
        %v2752 = vpack.c.bf16 %v2748, %v2748
        %v2753 = vpack.c.bf16 %v2707, %v2706
        %v2754 = vpack.c.bf16 %v2709, %v2708
        %v2755 = vpack.c.bf16 %v2710, %v2710
        %v2756 = vpack.c.bf16 %v2712, %v2711
        %v2757 = vpack.c.bf16 %v2714, %v2713
        %v2758 = vpack.c.bf16 %v2715, %v2715
        %2759 = vmatprep.subr.bf16.mxu0 0
        %2760 = vmatpush1.bf16.xpose.msra.mxu0 %v2753
        %2761 = vmatprep.subr.bf16.mxu0 0
        %2762 = vmatpush1.bf16.xpose.msra.mxu0 %v2754
        %2763 = vmatprep.subr.bf16.mxu0 0
        %2764 = vmatpush1.bf16.xpose.msra.mxu0 %v2755
        %2765 = vmatprep.subr.bf16.mxu0 0
        %2766 = vmatpush1.bf16.xpose.msra.mxu0 0
        %2767 = vmatprep.subr.bf16.mxu0 0
        %2768 = vmatpush1.bf16.xpose.msra.mxu0 0
        %2769 = vmatprep.subr.bf16.mxu0 0
        %2770 = vmatpush1.bf16.xpose.msra.mxu0 0
        %2771 = vmatprep.subr.bf16.mxu0 0
        %2772 = vmatpush1.bf16.xpose.msra.mxu0 0
        %2773 = vmatprep.subr.bf16.mxu0 0
        %2774 = vmatpush1.bf16.xpose.msra.mxu0 0
        %2775 = vmatprep.subr.bf16.mxu0 0
        %2776 = vmatpush1.bf16.xpose.msra.mxu0 0
        %2777 = vmatprep.subr.bf16.mxu0 0
        %2778 = vmatpush1.bf16.xpose.msra.mxu0 0
        %2779 = vmatprep.subr.bf16.mxu0 0
        %2780 = vmatpush1.bf16.xpose.msra.mxu0 0
        %2781 = vmatprep.subr.bf16.mxu0 0
        %2782 = vmatpush1.bf16.xpose.msra.mxu0 0
        %2783 = vmatprep.subr.bf16.mxu0 0
        %2784 = vmatpush1.bf16.xpose.msra.mxu0 0
        %2785 = vmatprep.subr.bf16.mxu0 0
        %2786 = vmatpush1.bf16.xpose.msra.mxu0 0
        %2787 = vmatprep.subr.bf16.mxu0 0
        %2788 = vmatpush1.bf16.xpose.msra.mxu0 0
        %2789 = vmatprep.subr.bf16.mxu0 0
        %2790 = vmatpush1.bf16.xpose.msra.mxu0 0
        %2791 = vmatprep.mubr.bf16.mxu0 0
        %2792 = vmatmul.mubr.bf16.gmra.mrb[0].mxu0 %v2751
        %v2793 = vpop.f32.mrb[0].mxu0
        %v2794 = vadd.f32 0.0, %v2793
        %v2795 = vpop.f32.mrb[0].mxu0
        %v2796 = vpop.f32.mrb[0].mxu0
        %v2797 = vpop.f32.mrb[0].mxu0
        %2798 = vdwg.mxu0
        %2799 = vmatprep.subr.bf16.mxu0 0
        %2800 = vmatpush1.bf16.xpose.msra.mxu0 %v2756
        %2801 = vmatprep.subr.bf16.mxu0 0
        %2802 = vmatpush1.bf16.xpose.msra.mxu0 %v2757
        %2803 = vmatprep.subr.bf16.mxu0 0
        %2804 = vmatpush1.bf16.xpose.msra.mxu0 %v2758
        %2805 = vmatprep.subr.bf16.mxu0 0
        %2806 = vmatpush1.bf16.xpose.msra.mxu0 0
        %2807 = vmatprep.subr.bf16.mxu0 0
        %2808 = vmatpush1.bf16.xpose.msra.mxu0 0
        %2809 = vmatprep.subr.bf16.mxu0 0
        %2810 = vmatpush1.bf16.xpose.msra.mxu0 0
        %2811 = vmatprep.subr.bf16.mxu0 0
        %2812 = vmatpush1.bf16.xpose.msra.mxu0 0
        %2813 = vmatprep.subr.bf16.mxu0 0
        %2814 = vmatpush1.bf16.xpose.msra.mxu0 0
        %2815 = vmatprep.subr.bf16.mxu0 0
        %2816 = vmatpush1.bf16.xpose.msra.mxu0 0
        %2817 = vmatprep.subr.bf16.mxu0 0
        %2818 = vmatpush1.bf16.xpose.msra.mxu0 0
        %2819 = vmatprep.subr.bf16.mxu0 0
        %2820 = vmatpush1.bf16.xpose.msra.mxu0 0
        %2821 = vmatprep.subr.bf16.mxu0 0
        %2822 = vmatpush1.bf16.xpose.msra.mxu0 0
        %2823 = vmatprep.subr.bf16.mxu0 0
        %2824 = vmatpush1.bf16.xpose.msra.mxu0 0
        %2825 = vmatprep.subr.bf16.mxu0 0
        %2826 = vmatpush1.bf16.xpose.msra.mxu0 0
        %2827 = vmatprep.subr.bf16.mxu0 0
        %2828 = vmatpush1.bf16.xpose.msra.mxu0 0
        %2829 = vmatprep.subr.bf16.mxu0 0
        %2830 = vmatpush1.bf16.xpose.msra.mxu0 0
        %2831 = vmatprep.mubr.bf16.mxu0 0
        %2832 = vmatmul.mubr.bf16.gmra.mrb[0].mxu0 %v2752
        %v2833 = vpop.f32.mrb[0].mxu0
        %v2834 = vadd.f32 0.0, %v2833
        %v2835 = vpop.f32.mrb[0].mxu0
        %v2836 = vpop.f32.mrb[0].mxu0
        %v2837 = vpop.f32.mrb[0].mxu0
        %2838 = vdwg.mxu0
        %v2839 = vmul.f32 %v2794, 0.125
        %v2840 = vmul.f32 %v2834, 0.125
        %v2841 = vsel %vm1018, %v2839, -inf
        %2842 = vmax.xlane.f32.xlu0 %v2841
        %v2843 = vpop.xlane.xlu0 %2842
        %v2844 = vsel %vm1018, %v2840, -inf
        %2845 = vmax.xlane.f32.xlu0 %v2844
        %v2846 = vpop.xlane.xlu0 %2845
        %v2847 = vsub.f32 %v2839, %v2843
        %v2848 = vsub.f32 %v2840, %v2846
        %v2849 = vmul.f32 %v2847, 1.442695
        %v2850 = vpow.pop %v2849
        %v2851 = vmul.f32 %v2848, 1.442695
        %v2852 = vpow.pop %v2851
        %v2853 = vsel %vm1018, %v2850, 0.0
        %2854 = vadd.xlane.f32.xlu0 %v2853
        %v2855 = vpop.xlane.xlu0 %2854
        %v2856 = vsel %vm1018, %v2852, 0.0
        %2857 = vadd.xlane.f32.xlu0 %v2856
        %v2858 = vpop.xlane.xlu0 %2857
        %v2859 = vrcp.pop %v2855
        %v2860 = vmul.f32 %v2850, %v2859
        %v2861 = vrcp.pop %v2858
        %v2862 = vmul.f32 %v2852, %v2861
        %v2863 = vpack.c.bf16 %v2860, %v2860
        %v2864 = vpack.c.bf16 %v2862, %v2862
        %v2865 = vpack.c.bf16 %v2717, %v2716
        %v2866 = vpack.c.bf16 %v2719, %v2718
        %v2867 = vpack.c.bf16 %v2720, %v2720
        %v2868 = vpack.c.bf16 %v2722, %v2721
        %v2869 = vpack.c.bf16 %v2724, %v2723
        %v2870 = vpack.c.bf16 %v2725, %v2725
        %v2872 = vsel %vm1049, %v2863, 0
        %v2875 = vsel %vm1053, %v2867, 0
        %2877 = vmatprep.subr.bf16.mxu0 0
        %2878 = vmatpush1.bf16.msra.mxu0 %v2865
        %2879 = vmatprep.subr.bf16.mxu0 0
        %2880 = vmatpush1.bf16.msra.mxu0 %v2866
        %2881 = vmatprep.subr.bf16.mxu0 0
        %2882 = vmatpush1.bf16.msra.mxu0 %v2875
        %2883 = vmatprep.subr.bf16.mxu0 0
        %2884 = vmatpush1.bf16.msra.mxu0 0
        %2885 = vmatprep.subr.bf16.mxu0 0
        %2886 = vmatpush1.bf16.msra.mxu0 0
        %2887 = vmatprep.subr.bf16.mxu0 0
        %2888 = vmatpush1.bf16.msra.mxu0 0
        %2889 = vmatprep.subr.bf16.mxu0 0
        %2890 = vmatpush1.bf16.msra.mxu0 0
        %2891 = vmatprep.subr.bf16.mxu0 0
        %2892 = vmatpush1.bf16.msra.mxu0 0
        %2893 = vmatprep.subr.bf16.mxu0 0
        %2894 = vmatpush1.bf16.msra.mxu0 0
        %2895 = vmatprep.subr.bf16.mxu0 0
        %2896 = vmatpush1.bf16.msra.mxu0 0
        %2897 = vmatprep.subr.bf16.mxu0 0
        %2898 = vmatpush1.bf16.msra.mxu0 0
        %2899 = vmatprep.subr.bf16.mxu0 0
        %2900 = vmatpush1.bf16.msra.mxu0 0
        %2901 = vmatprep.subr.bf16.mxu0 0
        %2902 = vmatpush1.bf16.msra.mxu0 0
        %2903 = vmatprep.subr.bf16.mxu0 0
        %2904 = vmatpush1.bf16.msra.mxu0 0
        %2905 = vmatprep.subr.bf16.mxu0 0
        %2906 = vmatpush1.bf16.msra.mxu0 0
        %2907 = vmatprep.subr.bf16.mxu0 0
        %2908 = vmatpush1.bf16.msra.mxu0 0
        %2909 = vmatprep.mubr.bf16.mxu0 0
        %2910 = vmatmul.mubr.bf16.gmra.mrb[0].mxu0 %v2872
        %v2911 = vpop.f32.mrb[0].mxu0
        %v2912 = vadd.f32 0.0, %v2911
        %v2913 = vpop.f32.mrb[0].mxu0
        %v2914 = vpop.f32.mrb[0].mxu0
        %v2915 = vpop.f32.mrb[0].mxu0
        %2916 = vdwg.mxu0
        %v2918 = vsel %vm1049, %v2864, 0
        %v2921 = vsel %vm1053, %v2870, 0
        %2923 = vmatprep.subr.bf16.mxu0 0
        %2924 = vmatpush1.bf16.msra.mxu0 %v2868
        %2925 = vmatprep.subr.bf16.mxu0 0
        %2926 = vmatpush1.bf16.msra.mxu0 %v2869
        %2927 = vmatprep.subr.bf16.mxu0 0
        %2928 = vmatpush1.bf16.msra.mxu0 %v2921
        %2929 = vmatprep.subr.bf16.mxu0 0
        %2930 = vmatpush1.bf16.msra.mxu0 0
        %2931 = vmatprep.subr.bf16.mxu0 0
        %2932 = vmatpush1.bf16.msra.mxu0 0
        %2933 = vmatprep.subr.bf16.mxu0 0
        %2934 = vmatpush1.bf16.msra.mxu0 0
        %2935 = vmatprep.subr.bf16.mxu0 0
        %2936 = vmatpush1.bf16.msra.mxu0 0
        %2937 = vmatprep.subr.bf16.mxu0 0
        %2938 = vmatpush1.bf16.msra.mxu0 0
        %2939 = vmatprep.subr.bf16.mxu0 0
        %2940 = vmatpush1.bf16.msra.mxu0 0
        %2941 = vmatprep.subr.bf16.mxu0 0
        %2942 = vmatpush1.bf16.msra.mxu0 0
        %2943 = vmatprep.subr.bf16.mxu0 0
        %2944 = vmatpush1.bf16.msra.mxu0 0
        %2945 = vmatprep.subr.bf16.mxu0 0
        %2946 = vmatpush1.bf16.msra.mxu0 0
        %2947 = vmatprep.subr.bf16.mxu0 0
        %2948 = vmatpush1.bf16.msra.mxu0 0
        %2949 = vmatprep.subr.bf16.mxu0 0
        %2950 = vmatpush1.bf16.msra.mxu0 0
        %2951 = vmatprep.subr.bf16.mxu0 0
        %2952 = vmatpush1.bf16.msra.mxu0 0
        %2953 = vmatprep.subr.bf16.mxu0 0
        %2954 = vmatpush1.bf16.msra.mxu0 0
        %2955 = vmatprep.mubr.bf16.mxu0 0
        %2956 = vmatmul.mubr.bf16.gmra.mrb[0].mxu0 %v2918
        %v2957 = vpop.f32.mrb[0].mxu0
        %v2958 = vadd.f32 0.0, %v2957
        %v2959 = vpop.f32.mrb[0].mxu0
        %v2960 = vpop.f32.mrb[0].mxu0
        %v2961 = vpop.f32.mrb[0].mxu0
        %2962 = vdwg.mxu0
        %v2963 = vpack.c.bf16 %v2912, %v2912
        %v2964 = vpack.c.bf16 %v2958, %v2958
        %v2967 = vunpack.c.l.b16 %v2963
        %v2968 = vunpack.c.l.b16 %v2964
        %v2969 = vrot.slane %v2968, 7
        %v2970 = vsel %vm616, %v2969, %v2967
        %v2971 = vpack.c.b16 %v2970, %v2970
        %2973 = vmatprep.subr.bf16.mxu0 0
        %2974 = vmatpush1.bf16.msra.mxu0 %v1185
        %2975 = vmatprep.subr.bf16.mxu0 0
        %2976 = vmatpush1.bf16.msra.mxu0 %v1186
        %2977 = vmatprep.subr.bf16.mxu0 0
        %2978 = vmatpush1.bf16.msra.mxu0 %v1187
        %2979 = vmatprep.subr.bf16.mxu0 0
        %2980 = vmatpush1.bf16.msra.mxu0 %v1188
        %2981 = vmatprep.subr.bf16.mxu0 0
        %2982 = vmatpush1.bf16.msra.mxu0 %v1189
        %2983 = vmatprep.subr.bf16.mxu0 0
        %2984 = vmatpush1.bf16.msra.mxu0 %v1190
        %2985 = vmatprep.subr.bf16.mxu0 0
        %2986 = vmatpush1.bf16.msra.mxu0 %v1191
        %2987 = vmatprep.subr.bf16.mxu0 0
        %2988 = vmatpush1.bf16.msra.mxu0 %v1192
        %2989 = vmatprep.subr.bf16.mxu0 0
        %2990 = vmatpush1.bf16.msra.mxu0 0
        %2991 = vmatprep.subr.bf16.mxu0 0
        %2992 = vmatpush1.bf16.msra.mxu0 0
        %2993 = vmatprep.subr.bf16.mxu0 0
        %2994 = vmatpush1.bf16.msra.mxu0 0
        %2995 = vmatprep.subr.bf16.mxu0 0
        %2996 = vmatpush1.bf16.msra.mxu0 0
        %2997 = vmatprep.subr.bf16.mxu0 0
        %2998 = vmatpush1.bf16.msra.mxu0 0
        %2999 = vmatprep.subr.bf16.mxu0 0
        %3000 = vmatpush1.bf16.msra.mxu0 0
        %3001 = vmatprep.subr.bf16.mxu0 0
        %3002 = vmatpush1.bf16.msra.mxu0 0
        %3003 = vmatprep.subr.bf16.mxu0 0
        %3004 = vmatpush1.bf16.msra.mxu0 0
        %3005 = vmatprep.mubr.bf16.mxu0 0
        %3006 = vmatmul.mubr.bf16.gmra.mrb[0].mxu0 %v2971
        %v3007 = vpop.f32.mrb[0].mxu0
        %v3008 = vadd.f32 0.0, %v3007
        %v3009 = vpop.f32.mrb[0].mxu0
        %v3010 = vpop.f32.mrb[0].mxu0
        %v3011 = vpop.f32.mrb[0].mxu0
        %3012 = vdwg.mxu0
        %v3013 = vpack.c.bf16 %v3008, %v3008
        %3014 = vmatprep.subr.bf16.mxu0 %v701
        %3015 = vmatpush1.bf16.msra.mxu0 %v700
        %3016 = vmatprep.subr.bf16.mxu0 %v704
        %3017 = vmatpush1.bf16.msra.mxu0 %v703
        %3018 = vmatprep.subr.bf16.mxu0 %v707
        %3019 = vmatpush1.bf16.msra.mxu0 %v706
        %3020 = vmatprep.subr.bf16.mxu0 %v710
        %3021 = vmatpush1.bf16.msra.mxu0 %v709
        %3022 = vmatprep.subr.bf16.mxu0 %v713
        %3023 = vmatpush1.bf16.msra.mxu0 %v712
        %3024 = vmatprep.subr.bf16.mxu0 %v716
        %3025 = vmatpush1.bf16.msra.mxu0 %v715
        %3026 = vmatprep.subr.bf16.mxu0 %v719
        %3027 = vmatpush1.bf16.msra.mxu0 %v718
        %3028 = vmatprep.subr.bf16.mxu0 %v722
        %3029 = vmatpush1.bf16.msra.mxu0 %v721
        %3030 = vmatprep.subr.bf16.mxu0 0
        %3031 = vmatpush1.bf16.msra.mxu0 0
        %3032 = vmatprep.subr.bf16.mxu0 0
        %3033 = vmatpush1.bf16.msra.mxu0 0
        %3034 = vmatprep.subr.bf16.mxu0 0
        %3035 = vmatpush1.bf16.msra.mxu0 0
        %3036 = vmatprep.subr.bf16.mxu0 0
        %3037 = vmatpush1.bf16.msra.mxu0 0
        %3038 = vmatprep.subr.bf16.mxu0 0
        %3039 = vmatpush1.bf16.msra.mxu0 0
        %3040 = vmatprep.subr.bf16.mxu0 0
        %3041 = vmatpush1.bf16.msra.mxu0 0
        %3042 = vmatprep.subr.bf16.mxu0 0
        %3043 = vmatpush1.bf16.msra.mxu0 0
        %3044 = vmatprep.subr.bf16.mxu0 0
        %3045 = vmatpush1.bf16.msra.mxu0 0
        %3046 = vmatprep.mubr.bf16.mxu0 0
        %3047 = vmatmul.mubr.bf16.gmra.mrb[0].mxu0 %v3013
        %v3048 = vpop.f32.mrb[0].mxu0
        %v3049 = vadd.f32 0.0, %v3048
        %v3050 = vpop.f32.mrb[0].mxu0
        %v3051 = vadd.f32 0.0, %v3050
        %v3052 = vpop.f32.mrb[0].mxu0
        %v3053 = vpop.f32.mrb[0].mxu0
        %3054 = vdwg.mxu0
        %3055 = vmatprep.subr.bf16.mxu0 0
        %3056 = vmatpush1.bf16.msra.mxu0 %v702
        %3057 = vmatprep.subr.bf16.mxu0 0
        %3058 = vmatpush1.bf16.msra.mxu0 %v705
        %3059 = vmatprep.subr.bf16.mxu0 0
        %3060 = vmatpush1.bf16.msra.mxu0 %v708
        %3061 = vmatprep.subr.bf16.mxu0 0
        %3062 = vmatpush1.bf16.msra.mxu0 %v711
        %3063 = vmatprep.subr.bf16.mxu0 0
        %3064 = vmatpush1.bf16.msra.mxu0 %v714
        %3065 = vmatprep.subr.bf16.mxu0 0
        %3066 = vmatpush1.bf16.msra.mxu0 %v717
        %3067 = vmatprep.subr.bf16.mxu0 0
        %3068 = vmatpush1.bf16.msra.mxu0 %v720
        %3069 = vmatprep.subr.bf16.mxu0 0
        %3070 = vmatpush1.bf16.msra.mxu0 %v723
        %3071 = vmatprep.subr.bf16.mxu0 0
        %3072 = vmatpush1.bf16.msra.mxu0 0
        %3073 = vmatprep.subr.bf16.mxu0 0
        %3074 = vmatpush1.bf16.msra.mxu0 0
        %3075 = vmatprep.subr.bf16.mxu0 0
        %3076 = vmatpush1.bf16.msra.mxu0 0
        %3077 = vmatprep.subr.bf16.mxu0 0
        %3078 = vmatpush1.bf16.msra.mxu0 0
        %3079 = vmatprep.subr.bf16.mxu0 0
        %3080 = vmatpush1.bf16.msra.mxu0 0
        %3081 = vmatprep.subr.bf16.mxu0 0
        %3082 = vmatpush1.bf16.msra.mxu0 0
        %3083 = vmatprep.subr.bf16.mxu0 0
        %3084 = vmatpush1.bf16.msra.mxu0 0
        %3085 = vmatprep.subr.bf16.mxu0 0
        %3086 = vmatpush1.bf16.msra.mxu0 0
        %3087 = vmatprep.mubr.bf16.mxu0 0
        %3088 = vmatmul.mubr.bf16.gmra.mrb[0].mxu0 %v3013
        %v3089 = vpop.f32.mrb[0].mxu0
        %v3090 = vadd.f32 0.0, %v3089
        %v3091 = vpop.f32.mrb[0].mxu0
        %v3092 = vpop.f32.mrb[0].mxu0
        %v3093 = vpop.f32.mrb[0].mxu0
        %3094 = vdwg.mxu0
        %v3097 = vunpack.c.l.s4 1966171168
        %v3098 = vunpack.c.0.s8 %v3097
        %v3099 = vlaneseq
        %v3100 = vshrl.u32 %v3099, 7
        %v3101 = vsub.s32 %v3098, %v3100
        %v3102 = vrot.slane %v3051, %v3101
        %v3103 = vcombine.high %v3102, %v3102
        %v3105 = vunpack.c.l.s4 1966171168
        %v3106 = vunpack.c.0.s8 %v3105
        %v3107 = vlaneseq
        %v3108 = vshrl.u32 %v3107, 7
        %v3109 = vsub.s32 %v3106, %v3108
        %v3110 = vrot.slane %v3102, %v3109
        %v3112 = vunpack.c.l.s4 1966171168
        %v3113 = vunpack.c.0.s8 %v3112
        %v3114 = vlaneseq
        %v3115 = vshrl.u32 %v3114, 7
        %v3116 = vsub.s32 %v3113, %v3115
        %v3117 = vrot.slane %v3103, %v3116
        %3120 = vst [vmem:[%s503 + $0x25] sm:$0x1] %v3110
        %3121 = vst [vmem:[%s503 + $0x4d] sm:$0x1] %v3117
        %v3124 = vunpack.c.l.s4 1966171168
        %v3125 = vunpack.c.0.s8 %v3124
        %v3126 = vlaneseq
        %v3127 = vshrl.u32 %v3126, 7
        %v3128 = vsub.s32 %v3125, %v3127
        %v3129 = vrot.slane %v3090, %v3128
        %v3130 = vcombine.high %v3129, %v3129
        %v3132 = vunpack.c.l.s4 1966171168
        %v3133 = vunpack.c.0.s8 %v3132
        %v3134 = vlaneseq
        %v3135 = vshrl.u32 %v3134, 7
        %v3136 = vsub.s32 %v3133, %v3135
        %v3137 = vrot.slane %v3129, %v3136
        %v3139 = vunpack.c.l.s4 1966171168
        %v3140 = vunpack.c.0.s8 %v3139
        %v3141 = vlaneseq
        %v3142 = vshrl.u32 %v3141, 7
        %v3143 = vsub.s32 %v3140, %v3142
        %v3144 = vrot.slane %v3130, %v3143
        %3147 = vst [vmem:[%s510 + $0x25] sm:$0x1] %v3137
        %3148 = vst [vmem:[%s510 + $0x4d] sm:$0x1] %v3144
        %v3149 = vld [vmem:[%s503] sm:$0xff]
        %v3150 = vld [vmem:[%s503 + $0x8] sm:$0xff]
        %v3151 = vld [vmem:[%s503 + $0x10] sm:$0xff]
        %v3152 = vld [vmem:[%s503 + $0x18] sm:$0xff]
        %v3153 = vld [vmem:[%s503 + $0x20] sm:$0xff]
        %v3154 = vld [vmem:[%s503 + $0x28] sm:$0xff]
        %v3155 = vld [vmem:[%s503 + $0x30] sm:$0xff]
        %v3156 = vld [vmem:[%s503 + $0x38] sm:$0xff]
        %v3157 = vld [vmem:[%s503 + $0x40] sm:$0xff]
        %v3158 = vld [vmem:[%s503 + $0x48] sm:$0xff]
        %v3159 = vld [vmem:[%s510] sm:$0xff]
        %v3160 = vld [vmem:[%s510 + $0x8] sm:$0xff]
        %v3161 = vld [vmem:[%s510 + $0x10] sm:$0xff]
        %v3162 = vld [vmem:[%s510 + $0x18] sm:$0xff]
        %v3163 = vld [vmem:[%s510 + $0x20] sm:$0xff]
        %v3164 = vld [vmem:[%s510 + $0x28] sm:$0xff]
        %v3165 = vld [vmem:[%s510 + $0x30] sm:$0xff]
        %v3166 = vld [vmem:[%s510 + $0x38] sm:$0xff]
        %v3167 = vld [vmem:[%s510 + $0x40] sm:$0xff]
        %v3168 = vld [vmem:[%s510 + $0x48] sm:$0xff]
        %v3171 = vunpack.c.l.s4 1966171168
        %v3172 = vunpack.c.0.s8 %v3171
        %v3173 = vlaneseq
        %v3174 = vshrl.u32 %v3173, 7
        %v3175 = vsub.s32 %v3172, %v3174
        %v3176 = vrot.slane %v3049, %v3175
        %v3177 = vcombine.high %v3176, %v3176
        %v3179 = vunpack.c.l.s4 1966171168
        %v3180 = vunpack.c.0.s8 %v3179
        %v3181 = vlaneseq
        %v3182 = vshrl.u32 %v3181, 7
        %v3183 = vsub.s32 %v3180, %v3182
        %v3184 = vrot.slane %v3176, %v3183
        %v3186 = vunpack.c.l.s4 1966171168
        %v3187 = vunpack.c.0.s8 %v3186
        %v3188 = vlaneseq
        %v3189 = vshrl.u32 %v3188, 7
        %v3190 = vsub.s32 %v3187, %v3189
        %v3191 = vrot.slane %v3177, %v3190
        %v3194 = vpack.c.bf16 %v3184, %v3184
        %v3195 = vpack.c.bf16 %v3191, %v3191
        %v3196 = vpack.c.bf16 %v3150, %v3149
        %v3197 = vpack.c.bf16 %v3152, %v3151
        %v3198 = vpack.c.bf16 %v3153, %v3153
        %v3199 = vpack.c.bf16 %v3155, %v3154
        %v3200 = vpack.c.bf16 %v3157, %v3156
        %v3201 = vpack.c.bf16 %v3158, %v3158
        %3202 = vmatprep.subr.bf16.mxu0 0
        %3203 = vmatpush1.bf16.xpose.msra.mxu0 %v3196
        %3204 = vmatprep.subr.bf16.mxu0 0
        %3205 = vmatpush1.bf16.xpose.msra.mxu0 %v3197
        %3206 = vmatprep.subr.bf16.mxu0 0
        %3207 = vmatpush1.bf16.xpose.msra.mxu0 %v3198
        %3208 = vmatprep.subr.bf16.mxu0 0
        %3209 = vmatpush1.bf16.xpose.msra.mxu0 0
        %3210 = vmatprep.subr.bf16.mxu0 0
        %3211 = vmatpush1.bf16.xpose.msra.mxu0 0
        %3212 = vmatprep.subr.bf16.mxu0 0
        %3213 = vmatpush1.bf16.xpose.msra.mxu0 0
        %3214 = vmatprep.subr.bf16.mxu0 0
        %3215 = vmatpush1.bf16.xpose.msra.mxu0 0
        %3216 = vmatprep.subr.bf16.mxu0 0
        %3217 = vmatpush1.bf16.xpose.msra.mxu0 0
        %3218 = vmatprep.subr.bf16.mxu0 0
        %3219 = vmatpush1.bf16.xpose.msra.mxu0 0
        %3220 = vmatprep.subr.bf16.mxu0 0
        %3221 = vmatpush1.bf16.xpose.msra.mxu0 0
        %3222 = vmatprep.subr.bf16.mxu0 0
        %3223 = vmatpush1.bf16.xpose.msra.mxu0 0
        %3224 = vmatprep.subr.bf16.mxu0 0
        %3225 = vmatpush1.bf16.xpose.msra.mxu0 0
        %3226 = vmatprep.subr.bf16.mxu0 0
        %3227 = vmatpush1.bf16.xpose.msra.mxu0 0
        %3228 = vmatprep.subr.bf16.mxu0 0
        %3229 = vmatpush1.bf16.xpose.msra.mxu0 0
        %3230 = vmatprep.subr.bf16.mxu0 0
        %3231 = vmatpush1.bf16.xpose.msra.mxu0 0
        %3232 = vmatprep.subr.bf16.mxu0 0
        %3233 = vmatpush1.bf16.xpose.msra.mxu0 0
        %3234 = vmatprep.mubr.bf16.mxu0 0
        %3235 = vmatmul.mubr.bf16.gmra.mrb[0].mxu0 %v3194
        %v3236 = vpop.f32.mrb[0].mxu0
        %v3237 = vadd.f32 0.0, %v3236
        %v3238 = vpop.f32.mrb[0].mxu0
        %v3239 = vpop.f32.mrb[0].mxu0
        %v3240 = vpop.f32.mrb[0].mxu0
        %3241 = vdwg.mxu0
        %3242 = vmatprep.subr.bf16.mxu0 0
        %3243 = vmatpush1.bf16.xpose.msra.mxu0 %v3199
        %3244 = vmatprep.subr.bf16.mxu0 0
        %3245 = vmatpush1.bf16.xpose.msra.mxu0 %v3200
        %3246 = vmatprep.subr.bf16.mxu0 0
        %3247 = vmatpush1.bf16.xpose.msra.mxu0 %v3201
        %3248 = vmatprep.subr.bf16.mxu0 0
        %3249 = vmatpush1.bf16.xpose.msra.mxu0 0
        %3250 = vmatprep.subr.bf16.mxu0 0
        %3251 = vmatpush1.bf16.xpose.msra.mxu0 0
        %3252 = vmatprep.subr.bf16.mxu0 0
        %3253 = vmatpush1.bf16.xpose.msra.mxu0 0
        %3254 = vmatprep.subr.bf16.mxu0 0
        %3255 = vmatpush1.bf16.xpose.msra.mxu0 0
        %3256 = vmatprep.subr.bf16.mxu0 0
        %3257 = vmatpush1.bf16.xpose.msra.mxu0 0
        %3258 = vmatprep.subr.bf16.mxu0 0
        %3259 = vmatpush1.bf16.xpose.msra.mxu0 0
        %3260 = vmatprep.subr.bf16.mxu0 0
        %3261 = vmatpush1.bf16.xpose.msra.mxu0 0
        %3262 = vmatprep.subr.bf16.mxu0 0
        %3263 = vmatpush1.bf16.xpose.msra.mxu0 0
        %3264 = vmatprep.subr.bf16.mxu0 0
        %3265 = vmatpush1.bf16.xpose.msra.mxu0 0
        %3266 = vmatprep.subr.bf16.mxu0 0
        %3267 = vmatpush1.bf16.xpose.msra.mxu0 0
        %3268 = vmatprep.subr.bf16.mxu0 0
        %3269 = vmatpush1.bf16.xpose.msra.mxu0 0
        %3270 = vmatprep.subr.bf16.mxu0 0
        %3271 = vmatpush1.bf16.xpose.msra.mxu0 0
        %3272 = vmatprep.subr.bf16.mxu0 0
        %3273 = vmatpush1.bf16.xpose.msra.mxu0 0
        %3274 = vmatprep.mubr.bf16.mxu0 0
        %3275 = vmatmul.mubr.bf16.gmra.mrb[0].mxu0 %v3195
        %v3276 = vpop.f32.mrb[0].mxu0
        %v3277 = vadd.f32 0.0, %v3276
        %v3278 = vpop.f32.mrb[0].mxu0
        %v3279 = vpop.f32.mrb[0].mxu0
        %v3280 = vpop.f32.mrb[0].mxu0
        %3281 = vdwg.mxu0
        %v3282 = vmul.f32 %v3237, 0.125
        %v3283 = vmul.f32 %v3277, 0.125
        %v3284 = vsel %vm1018, %v3282, -inf
        %3285 = vmax.xlane.f32.xlu0 %v3284
        %v3286 = vpop.xlane.xlu0 %3285
        %v3287 = vsel %vm1018, %v3283, -inf
        %3288 = vmax.xlane.f32.xlu0 %v3287
        %v3289 = vpop.xlane.xlu0 %3288
        %v3290 = vsub.f32 %v3282, %v3286
        %v3291 = vsub.f32 %v3283, %v3289
        %v3292 = vmul.f32 %v3290, 1.442695
        %v3293 = vpow.pop %v3292
        %v3294 = vmul.f32 %v3291, 1.442695
        %v3295 = vpow.pop %v3294
        %v3296 = vsel %vm1018, %v3293, 0.0
        %3297 = vadd.xlane.f32.xlu0 %v3296
        %v3298 = vpop.xlane.xlu0 %3297
        %v3299 = vsel %vm1018, %v3295, 0.0
        %3300 = vadd.xlane.f32.xlu0 %v3299
        %v3301 = vpop.xlane.xlu0 %3300
        %v3302 = vrcp.pop %v3298
        %v3303 = vmul.f32 %v3293, %v3302
        %v3304 = vrcp.pop %v3301
        %v3305 = vmul.f32 %v3295, %v3304
        %v3306 = vpack.c.bf16 %v3303, %v3303
        %v3307 = vpack.c.bf16 %v3305, %v3305
        %v3308 = vpack.c.bf16 %v3160, %v3159
        %v3309 = vpack.c.bf16 %v3162, %v3161
        %v3310 = vpack.c.bf16 %v3163, %v3163
        %v3311 = vpack.c.bf16 %v3165, %v3164
        %v3312 = vpack.c.bf16 %v3167, %v3166
        %v3313 = vpack.c.bf16 %v3168, %v3168
        %v3315 = vsel %vm1049, %v3306, 0
        %v3318 = vsel %vm1053, %v3310, 0
        %3320 = vmatprep.subr.bf16.mxu0 0
        %3321 = vmatpush1.bf16.msra.mxu0 %v3308
        %3322 = vmatprep.subr.bf16.mxu0 0
        %3323 = vmatpush1.bf16.msra.mxu0 %v3309
        %3324 = vmatprep.subr.bf16.mxu0 0
        %3325 = vmatpush1.bf16.msra.mxu0 %v3318
        %3326 = vmatprep.subr.bf16.mxu0 0
        %3327 = vmatpush1.bf16.msra.mxu0 0
        %3328 = vmatprep.subr.bf16.mxu0 0
        %3329 = vmatpush1.bf16.msra.mxu0 0
        %3330 = vmatprep.subr.bf16.mxu0 0
        %3331 = vmatpush1.bf16.msra.mxu0 0
        %3332 = vmatprep.subr.bf16.mxu0 0
        %3333 = vmatpush1.bf16.msra.mxu0 0
        %3334 = vmatprep.subr.bf16.mxu0 0
        %3335 = vmatpush1.bf16.msra.mxu0 0
        %3336 = vmatprep.subr.bf16.mxu0 0
        %3337 = vmatpush1.bf16.msra.mxu0 0
        %3338 = vmatprep.subr.bf16.mxu0 0
        %3339 = vmatpush1.bf16.msra.mxu0 0
        %3340 = vmatprep.subr.bf16.mxu0 0
        %3341 = vmatpush1.bf16.msra.mxu0 0
        %3342 = vmatprep.subr.bf16.mxu0 0
        %3343 = vmatpush1.bf16.msra.mxu0 0
        %3344 = vmatprep.subr.bf16.mxu0 0
        %3345 = vmatpush1.bf16.msra.mxu0 0
        %3346 = vmatprep.subr.bf16.mxu0 0
        %3347 = vmatpush1.bf16.msra.mxu0 0
        %3348 = vmatprep.subr.bf16.mxu0 0
        %3349 = vmatpush1.bf16.msra.mxu0 0
        %3350 = vmatprep.subr.bf16.mxu0 0
        %3351 = vmatpush1.bf16.msra.mxu0 0
        %3352 = vmatprep.mubr.bf16.mxu0 0
        %3353 = vmatmul.mubr.bf16.gmra.mrb[0].mxu0 %v3315
        %v3354 = vpop.f32.mrb[0].mxu0
        %v3355 = vadd.f32 0.0, %v3354
        %v3356 = vpop.f32.mrb[0].mxu0
        %v3357 = vpop.f32.mrb[0].mxu0
        %v3358 = vpop.f32.mrb[0].mxu0
        %3359 = vdwg.mxu0
        %v3361 = vsel %vm1049, %v3307, 0
        %v3364 = vsel %vm1053, %v3313, 0
        %3366 = vmatprep.subr.bf16.mxu0 0
        %3367 = vmatpush1.bf16.msra.mxu0 %v3311
        %3368 = vmatprep.subr.bf16.mxu0 0
        %3369 = vmatpush1.bf16.msra.mxu0 %v3312
        %3370 = vmatprep.subr.bf16.mxu0 0
        %3371 = vmatpush1.bf16.msra.mxu0 %v3364
        %3372 = vmatprep.subr.bf16.mxu0 0
        %3373 = vmatpush1.bf16.msra.mxu0 0
        %3374 = vmatprep.subr.bf16.mxu0 0
        %3375 = vmatpush1.bf16.msra.mxu0 0
        %3376 = vmatprep.subr.bf16.mxu0 0
        %3377 = vmatpush1.bf16.msra.mxu0 0
        %3378 = vmatprep.subr.bf16.mxu0 0
        %3379 = vmatpush1.bf16.msra.mxu0 0
        %3380 = vmatprep.subr.bf16.mxu0 0
        %3381 = vmatpush1.bf16.msra.mxu0 0
        %3382 = vmatprep.subr.bf16.mxu0 0
        %3383 = vmatpush1.bf16.msra.mxu0 0
        %3384 = vmatprep.subr.bf16.mxu0 0
        %3385 = vmatpush1.bf16.msra.mxu0 0
        %3386 = vmatprep.subr.bf16.mxu0 0
        %3387 = vmatpush1.bf16.msra.mxu0 0
        %3388 = vmatprep.subr.bf16.mxu0 0
        %3389 = vmatpush1.bf16.msra.mxu0 0
        %3390 = vmatprep.subr.bf16.mxu0 0
        %3391 = vmatpush1.bf16.msra.mxu0 0
        %3392 = vmatprep.subr.bf16.mxu0 0
        %3393 = vmatpush1.bf16.msra.mxu0 0
        %3394 = vmatprep.subr.bf16.mxu0 0
        %3395 = vmatpush1.bf16.msra.mxu0 0
        %3396 = vmatprep.subr.bf16.mxu0 0
        %3397 = vmatpush1.bf16.msra.mxu0 0
        %3398 = vmatprep.mubr.bf16.mxu0 0
        %3399 = vmatmul.mubr.bf16.gmra.mrb[0].mxu0 %v3361
        %v3400 = vpop.f32.mrb[0].mxu0
        %v3401 = vadd.f32 0.0, %v3400
        %v3402 = vpop.f32.mrb[0].mxu0
        %v3403 = vpop.f32.mrb[0].mxu0
        %v3404 = vpop.f32.mrb[0].mxu0
        %3405 = vdwg.mxu0
        %v3406 = vpack.c.bf16 %v3355, %v3355
        %v3407 = vpack.c.bf16 %v3401, %v3401
        %v3410 = vunpack.c.l.b16 %v3406
        %v3411 = vunpack.c.l.b16 %v3407
        %v3412 = vrot.slane %v3411, 7
        %v3413 = vsel %vm616, %v3412, %v3410
        %v3414 = vpack.c.b16 %v3413, %v3413
        %3416 = vmatprep.subr.bf16.mxu0 0
        %3417 = vmatpush1.bf16.msra.mxu0 %v1185
        %3418 = vmatprep.subr.bf16.mxu0 0
        %3419 = vmatpush1.bf16.msra.mxu0 %v1186
        %3420 = vmatprep.subr.bf16.mxu0 0
        %3421 = vmatpush1.bf16.msra.mxu0 %v1187
        %3422 = vmatprep.subr.bf16.mxu0 0
        %3423 = vmatpush1.bf16.msra.mxu0 %v1188
        %3424 = vmatprep.subr.bf16.mxu0 0
        %3425 = vmatpush1.bf16.msra.mxu0 %v1189
        %3426 = vmatprep.subr.bf16.mxu0 0
        %3427 = vmatpush1.bf16.msra.mxu0 %v1190
        %3428 = vmatprep.subr.bf16.mxu0 0
        %3429 = vmatpush1.bf16.msra.mxu0 %v1191
        %3430 = vmatprep.subr.bf16.mxu0 0
        %3431 = vmatpush1.bf16.msra.mxu0 %v1192
        %3432 = vmatprep.subr.bf16.mxu0 0
        %3433 = vmatpush1.bf16.msra.mxu0 0
        %3434 = vmatprep.subr.bf16.mxu0 0
        %3435 = vmatpush1.bf16.msra.mxu0 0
        %3436 = vmatprep.subr.bf16.mxu0 0
        %3437 = vmatpush1.bf16.msra.mxu0 0
        %3438 = vmatprep.subr.bf16.mxu0 0
        %3439 = vmatpush1.bf16.msra.mxu0 0
        %3440 = vmatprep.subr.bf16.mxu0 0
        %3441 = vmatpush1.bf16.msra.mxu0 0
        %3442 = vmatprep.subr.bf16.mxu0 0
        %3443 = vmatpush1.bf16.msra.mxu0 0
        %3444 = vmatprep.subr.bf16.mxu0 0
        %3445 = vmatpush1.bf16.msra.mxu0 0
        %3446 = vmatprep.subr.bf16.mxu0 0
        %3447 = vmatpush1.bf16.msra.mxu0 0
        %3448 = vmatprep.mubr.bf16.mxu0 0
        %3449 = vmatmul.mubr.bf16.gmra.mrb[0].mxu0 %v3414
        %v3450 = vpop.f32.mrb[0].mxu0
        %v3451 = vadd.f32 0.0, %v3450
        %v3452 = vpop.f32.mrb[0].mxu0
        %v3453 = vpop.f32.mrb[0].mxu0
        %v3454 = vpop.f32.mrb[0].mxu0
        %3455 = vdwg.mxu0
        %v3456 = vpack.c.bf16 %v3451, %v3451
        %3457 = vmatprep.subr.bf16.mxu0 %v701
        %3458 = vmatpush1.bf16.msra.mxu0 %v700
        %3459 = vmatprep.subr.bf16.mxu0 %v704
        %3460 = vmatpush1.bf16.msra.mxu0 %v703
        %3461 = vmatprep.subr.bf16.mxu0 %v707
        %3462 = vmatpush1.bf16.msra.mxu0 %v706
        %3463 = vmatprep.subr.bf16.mxu0 %v710
        %3464 = vmatpush1.bf16.msra.mxu0 %v709
        %3465 = vmatprep.subr.bf16.mxu0 %v713
        %3466 = vmatpush1.bf16.msra.mxu0 %v712
        %3467 = vmatprep.subr.bf16.mxu0 %v716
        %3468 = vmatpush1.bf16.msra.mxu0 %v715
        %3469 = vmatprep.subr.bf16.mxu0 %v719
        %3470 = vmatpush1.bf16.msra.mxu0 %v718
        %3471 = vmatprep.subr.bf16.mxu0 %v722
        %3472 = vmatpush1.bf16.msra.mxu0 %v721
        %3473 = vmatprep.subr.bf16.mxu0 0
        %3474 = vmatpush1.bf16.msra.mxu0 0
        %3475 = vmatprep.subr.bf16.mxu0 0
        %3476 = vmatpush1.bf16.msra.mxu0 0
        %3477 = vmatprep.subr.bf16.mxu0 0
        %3478 = vmatpush1.bf16.msra.mxu0 0
        %3479 = vmatprep.subr.bf16.mxu0 0
        %3480 = vmatpush1.bf16.msra.mxu0 0
        %3481 = vmatprep.subr.bf16.mxu0 0
        %3482 = vmatpush1.bf16.msra.mxu0 0
        %3483 = vmatprep.subr.bf16.mxu0 0
        %3484 = vmatpush1.bf16.msra.mxu0 0
        %3485 = vmatprep.subr.bf16.mxu0 0
        %3486 = vmatpush1.bf16.msra.mxu0 0
        %3487 = vmatprep.subr.bf16.mxu0 0
        %3488 = vmatpush1.bf16.msra.mxu0 0
        %3489 = vmatprep.mubr.bf16.mxu0 0
        %3490 = vmatmul.mubr.bf16.gmra.mrb[0].mxu0 %v3456
        %v3491 = vpop.f32.mrb[0].mxu0
        %v3492 = vadd.f32 0.0, %v3491
        %v3493 = vpop.f32.mrb[0].mxu0
        %v3494 = vadd.f32 0.0, %v3493
        %v3495 = vpop.f32.mrb[0].mxu0
        %v3496 = vpop.f32.mrb[0].mxu0
        %3497 = vdwg.mxu0
        %3498 = vmatprep.subr.bf16.mxu0 0
        %3499 = vmatpush1.bf16.msra.mxu0 %v702
        %3500 = vmatprep.subr.bf16.mxu0 0
        %3501 = vmatpush1.bf16.msra.mxu0 %v705
        %3502 = vmatprep.subr.bf16.mxu0 0
        %3503 = vmatpush1.bf16.msra.mxu0 %v708
        %3504 = vmatprep.subr.bf16.mxu0 0
        %3505 = vmatpush1.bf16.msra.mxu0 %v711
        %3506 = vmatprep.subr.bf16.mxu0 0
        %3507 = vmatpush1.bf16.msra.mxu0 %v714
        %3508 = vmatprep.subr.bf16.mxu0 0
        %3509 = vmatpush1.bf16.msra.mxu0 %v717
        %3510 = vmatprep.subr.bf16.mxu0 0
        %3511 = vmatpush1.bf16.msra.mxu0 %v720
        %3512 = vmatprep.subr.bf16.mxu0 0
        %3513 = vmatpush1.bf16.msra.mxu0 %v723
        %3514 = vmatprep.subr.bf16.mxu0 0
        %3515 = vmatpush1.bf16.msra.mxu0 0
        %3516 = vmatprep.subr.bf16.mxu0 0
        %3517 = vmatpush1.bf16.msra.mxu0 0
        %3518 = vmatprep.subr.bf16.mxu0 0
        %3519 = vmatpush1.bf16.msra.mxu0 0
        %3520 = vmatprep.subr.bf16.mxu0 0
        %3521 = vmatpush1.bf16.msra.mxu0 0
        %3522 = vmatprep.subr.bf16.mxu0 0
        %3523 = vmatpush1.bf16.msra.mxu0 0
        %3524 = vmatprep.subr.bf16.mxu0 0
        %3525 = vmatpush1.bf16.msra.mxu0 0
        %3526 = vmatprep.subr.bf16.mxu0 0
        %3527 = vmatpush1.bf16.msra.mxu0 0
        %3528 = vmatprep.subr.bf16.mxu0 0
        %3529 = vmatpush1.bf16.msra.mxu0 0
        %3530 = vmatprep.mubr.bf16.mxu0 0
        %3531 = vmatmul.mubr.bf16.gmra.mrb[0].mxu0 %v3456
        %v3532 = vpop.f32.mrb[0].mxu0
        %v3533 = vadd.f32 0.0, %v3532
        %v3534 = vpop.f32.mrb[0].mxu0
        %v3535 = vpop.f32.mrb[0].mxu0
        %v3536 = vpop.f32.mrb[0].mxu0
        %3537 = vdwg.mxu0
        %v3540 = vunpack.c.l.s4 1966171168
        %v3541 = vunpack.c.0.s8 %v3540
        %v3542 = vlaneseq
        %v3543 = vshrl.u32 %v3542, 7
        %v3544 = vsub.s32 %v3541, %v3543
        %v3545 = vrot.slane %v3494, %v3544
        %v3546 = vcombine.high %v3545, %v3545
        %v3548 = vunpack.c.l.s4 1966171168
        %v3549 = vunpack.c.0.s8 %v3548
        %v3550 = vlaneseq
        %v3551 = vshrl.u32 %v3550, 7
        %v3552 = vsub.s32 %v3549, %v3551
        %v3553 = vrot.slane %v3545, %v3552
        %v3555 = vunpack.c.l.s4 1966171168
        %v3556 = vunpack.c.0.s8 %v3555
        %v3557 = vlaneseq
        %v3558 = vshrl.u32 %v3557, 7
        %v3559 = vsub.s32 %v3556, %v3558
        %v3560 = vrot.slane %v3546, %v3559
        %3563 = vst [vmem:[%s503 + $0x26] sm:$0x1] %v3553
        %3564 = vst [vmem:[%s503 + $0x4e] sm:$0x1] %v3560
        %v3567 = vunpack.c.l.s4 1966171168
        %v3568 = vunpack.c.0.s8 %v3567
        %v3569 = vlaneseq
        %v3570 = vshrl.u32 %v3569, 7
        %v3571 = vsub.s32 %v3568, %v3570
        %v3572 = vrot.slane %v3533, %v3571
        %v3573 = vcombine.high %v3572, %v3572
        %v3575 = vunpack.c.l.s4 1966171168
        %v3576 = vunpack.c.0.s8 %v3575
        %v3577 = vlaneseq
        %v3578 = vshrl.u32 %v3577, 7
        %v3579 = vsub.s32 %v3576, %v3578
        %v3580 = vrot.slane %v3572, %v3579
        %v3582 = vunpack.c.l.s4 1966171168
        %v3583 = vunpack.c.0.s8 %v3582
        %v3584 = vlaneseq
        %v3585 = vshrl.u32 %v3584, 7
        %v3586 = vsub.s32 %v3583, %v3585
        %v3587 = vrot.slane %v3573, %v3586
        %3590 = vst [vmem:[%s510 + $0x26] sm:$0x1] %v3580
        %3591 = vst [vmem:[%s510 + $0x4e] sm:$0x1] %v3587
        %v3592 = vld [vmem:[%s503] sm:$0xff]
        %v3593 = vld [vmem:[%s503 + $0x8] sm:$0xff]
        %v3594 = vld [vmem:[%s503 + $0x10] sm:$0xff]
        %v3595 = vld [vmem:[%s503 + $0x18] sm:$0xff]
        %v3596 = vld [vmem:[%s503 + $0x20] sm:$0xff]
        %v3597 = vld [vmem:[%s503 + $0x28] sm:$0xff]
        %v3598 = vld [vmem:[%s503 + $0x30] sm:$0xff]
        %v3599 = vld [vmem:[%s503 + $0x38] sm:$0xff]
        %v3600 = vld [vmem:[%s503 + $0x40] sm:$0xff]
        %v3601 = vld [vmem:[%s503 + $0x48] sm:$0xff]
        %v3602 = vld [vmem:[%s510] sm:$0xff]
        %v3603 = vld [vmem:[%s510 + $0x8] sm:$0xff]
        %v3604 = vld [vmem:[%s510 + $0x10] sm:$0xff]
        %v3605 = vld [vmem:[%s510 + $0x18] sm:$0xff]
        %v3606 = vld [vmem:[%s510 + $0x20] sm:$0xff]
        %v3607 = vld [vmem:[%s510 + $0x28] sm:$0xff]
        %v3608 = vld [vmem:[%s510 + $0x30] sm:$0xff]
        %v3609 = vld [vmem:[%s510 + $0x38] sm:$0xff]
        %v3610 = vld [vmem:[%s510 + $0x40] sm:$0xff]
        %v3611 = vld [vmem:[%s510 + $0x48] sm:$0xff]
        %v3614 = vunpack.c.l.s4 1966171168
        %v3615 = vunpack.c.0.s8 %v3614
        %v3616 = vlaneseq
        %v3617 = vshrl.u32 %v3616, 7
        %v3618 = vsub.s32 %v3615, %v3617
        %v3619 = vrot.slane %v3492, %v3618
        %v3620 = vcombine.high %v3619, %v3619
        %v3622 = vunpack.c.l.s4 1966171168
        %v3623 = vunpack.c.0.s8 %v3622
        %v3624 = vlaneseq
        %v3625 = vshrl.u32 %v3624, 7
        %v3626 = vsub.s32 %v3623, %v3625
        %v3627 = vrot.slane %v3619, %v3626
        %v3629 = vunpack.c.l.s4 1966171168
        %v3630 = vunpack.c.0.s8 %v3629
        %v3631 = vlaneseq
        %v3632 = vshrl.u32 %v3631, 7
        %v3633 = vsub.s32 %v3630, %v3632
        %v3634 = vrot.slane %v3620, %v3633
        %v3637 = vpack.c.bf16 %v3627, %v3627
        %v3638 = vpack.c.bf16 %v3634, %v3634
        %v3639 = vpack.c.bf16 %v3593, %v3592
        %v3640 = vpack.c.bf16 %v3595, %v3594
        %v3641 = vpack.c.bf16 %v3596, %v3596
        %v3642 = vpack.c.bf16 %v3598, %v3597
        %v3643 = vpack.c.bf16 %v3600, %v3599
        %v3644 = vpack.c.bf16 %v3601, %v3601
        %3645 = vmatprep.subr.bf16.mxu0 0
        %3646 = vmatpush1.bf16.xpose.msra.mxu0 %v3639
        %3647 = vmatprep.subr.bf16.mxu0 0
        %3648 = vmatpush1.bf16.xpose.msra.mxu0 %v3640
        %3649 = vmatprep.subr.bf16.mxu0 0
        %3650 = vmatpush1.bf16.xpose.msra.mxu0 %v3641
        %3651 = vmatprep.subr.bf16.mxu0 0
        %3652 = vmatpush1.bf16.xpose.msra.mxu0 0
        %3653 = vmatprep.subr.bf16.mxu0 0
        %3654 = vmatpush1.bf16.xpose.msra.mxu0 0
        %3655 = vmatprep.subr.bf16.mxu0 0
        %3656 = vmatpush1.bf16.xpose.msra.mxu0 0
        %3657 = vmatprep.subr.bf16.mxu0 0
        %3658 = vmatpush1.bf16.xpose.msra.mxu0 0
        %3659 = vmatprep.subr.bf16.mxu0 0
        %3660 = vmatpush1.bf16.xpose.msra.mxu0 0
        %3661 = vmatprep.subr.bf16.mxu0 0
        %3662 = vmatpush1.bf16.xpose.msra.mxu0 0
        %3663 = vmatprep.subr.bf16.mxu0 0
        %3664 = vmatpush1.bf16.xpose.msra.mxu0 0
        %3665 = vmatprep.subr.bf16.mxu0 0
        %3666 = vmatpush1.bf16.xpose.msra.mxu0 0
        %3667 = vmatprep.subr.bf16.mxu0 0
        %3668 = vmatpush1.bf16.xpose.msra.mxu0 0
        %3669 = vmatprep.subr.bf16.mxu0 0
        %3670 = vmatpush1.bf16.xpose.msra.mxu0 0
        %3671 = vmatprep.subr.bf16.mxu0 0
        %3672 = vmatpush1.bf16.xpose.msra.mxu0 0
        %3673 = vmatprep.subr.bf16.mxu0 0
        %3674 = vmatpush1.bf16.xpose.msra.mxu0 0
        %3675 = vmatprep.subr.bf16.mxu0 0
        %3676 = vmatpush1.bf16.xpose.msra.mxu0 0
        %3677 = vmatprep.mubr.bf16.mxu0 0
        %3678 = vmatmul.mubr.bf16.gmra.mrb[0].mxu0 %v3637
        %v3679 = vpop.f32.mrb[0].mxu0
        %v3680 = vadd.f32 0.0, %v3679
        %v3681 = vpop.f32.mrb[0].mxu0
        %v3682 = vpop.f32.mrb[0].mxu0
        %v3683 = vpop.f32.mrb[0].mxu0
        %3684 = vdwg.mxu0
        %3685 = vmatprep.subr.bf16.mxu0 0
        %3686 = vmatpush1.bf16.xpose.msra.mxu0 %v3642
        %3687 = vmatprep.subr.bf16.mxu0 0
        %3688 = vmatpush1.bf16.xpose.msra.mxu0 %v3643
        %3689 = vmatprep.subr.bf16.mxu0 0
        %3690 = vmatpush1.bf16.xpose.msra.mxu0 %v3644
        %3691 = vmatprep.subr.bf16.mxu0 0
        %3692 = vmatpush1.bf16.xpose.msra.mxu0 0
        %3693 = vmatprep.subr.bf16.mxu0 0
        %3694 = vmatpush1.bf16.xpose.msra.mxu0 0
        %3695 = vmatprep.subr.bf16.mxu0 0
        %3696 = vmatpush1.bf16.xpose.msra.mxu0 0
        %3697 = vmatprep.subr.bf16.mxu0 0
        %3698 = vmatpush1.bf16.xpose.msra.mxu0 0
        %3699 = vmatprep.subr.bf16.mxu0 0
        %3700 = vmatpush1.bf16.xpose.msra.mxu0 0
        %3701 = vmatprep.subr.bf16.mxu0 0
        %3702 = vmatpush1.bf16.xpose.msra.mxu0 0
        %3703 = vmatprep.subr.bf16.mxu0 0
        %3704 = vmatpush1.bf16.xpose.msra.mxu0 0
        %3705 = vmatprep.subr.bf16.mxu0 0
        %3706 = vmatpush1.bf16.xpose.msra.mxu0 0
        %3707 = vmatprep.subr.bf16.mxu0 0
        %3708 = vmatpush1.bf16.xpose.msra.mxu0 0
        %3709 = vmatprep.subr.bf16.mxu0 0
        %3710 = vmatpush1.bf16.xpose.msra.mxu0 0
        %3711 = vmatprep.subr.bf16.mxu0 0
        %3712 = vmatpush1.bf16.xpose.msra.mxu0 0
        %3713 = vmatprep.subr.bf16.mxu0 0
        %3714 = vmatpush1.bf16.xpose.msra.mxu0 0
        %3715 = vmatprep.subr.bf16.mxu0 0
        %3716 = vmatpush1.bf16.xpose.msra.mxu0 0
        %3717 = vmatprep.mubr.bf16.mxu0 0
        %3718 = vmatmul.mubr.bf16.gmra.mrb[0].mxu0 %v3638
        %v3719 = vpop.f32.mrb[0].mxu0
        %v3720 = vadd.f32 0.0, %v3719
        %v3721 = vpop.f32.mrb[0].mxu0
        %v3722 = vpop.f32.mrb[0].mxu0
        %v3723 = vpop.f32.mrb[0].mxu0
        %3724 = vdwg.mxu0
        %v3725 = vmul.f32 %v3680, 0.125
        %v3726 = vmul.f32 %v3720, 0.125
        %v3727 = vsel %vm1018, %v3725, -inf
        %3728 = vmax.xlane.f32.xlu0 %v3727
        %v3729 = vpop.xlane.xlu0 %3728
        %v3730 = vsel %vm1018, %v3726, -inf
        %3731 = vmax.xlane.f32.xlu0 %v3730
        %v3732 = vpop.xlane.xlu0 %3731
        %v3733 = vsub.f32 %v3725, %v3729
        %v3734 = vsub.f32 %v3726, %v3732
        %v3735 = vmul.f32 %v3733, 1.442695
        %v3736 = vpow.pop %v3735
        %v3737 = vmul.f32 %v3734, 1.442695
        %v3738 = vpow.pop %v3737
        %v3739 = vsel %vm1018, %v3736, 0.0
        %3740 = vadd.xlane.f32.xlu0 %v3739
        %v3741 = vpop.xlane.xlu0 %3740
        %v3742 = vsel %vm1018, %v3738, 0.0
        %3743 = vadd.xlane.f32.xlu0 %v3742
        %v3744 = vpop.xlane.xlu0 %3743
        %v3745 = vrcp.pop %v3741
        %v3746 = vmul.f32 %v3736, %v3745
        %v3747 = vrcp.pop %v3744
        %v3748 = vmul.f32 %v3738, %v3747
        %v3749 = vpack.c.bf16 %v3746, %v3746
        %v3750 = vpack.c.bf16 %v3748, %v3748
        %v3751 = vpack.c.bf16 %v3603, %v3602
        %v3752 = vpack.c.bf16 %v3605, %v3604
        %v3753 = vpack.c.bf16 %v3606, %v3606
        %v3754 = vpack.c.bf16 %v3608, %v3607
        %v3755 = vpack.c.bf16 %v3610, %v3609
        %v3756 = vpack.c.bf16 %v3611, %v3611
        %v3758 = vsel %vm1049, %v3749, 0
        %v3761 = vsel %vm1053, %v3753, 0
        %3763 = vmatprep.subr.bf16.mxu0 0
        %3764 = vmatpush1.bf16.msra.mxu0 %v3751
        %3765 = vmatprep.subr.bf16.mxu0 0
        %3766 = vmatpush1.bf16.msra.mxu0 %v3752
        %3767 = vmatprep.subr.bf16.mxu0 0
        %3768 = vmatpush1.bf16.msra.mxu0 %v3761
        %3769 = vmatprep.subr.bf16.mxu0 0
        %3770 = vmatpush1.bf16.msra.mxu0 0
        %3771 = vmatprep.subr.bf16.mxu0 0
        %3772 = vmatpush1.bf16.msra.mxu0 0
        %3773 = vmatprep.subr.bf16.mxu0 0
        %3774 = vmatpush1.bf16.msra.mxu0 0
        %3775 = vmatprep.subr.bf16.mxu0 0
        %3776 = vmatpush1.bf16.msra.mxu0 0
        %3777 = vmatprep.subr.bf16.mxu0 0
        %3778 = vmatpush1.bf16.msra.mxu0 0
        %3779 = vmatprep.subr.bf16.mxu0 0
        %3780 = vmatpush1.bf16.msra.mxu0 0
        %3781 = vmatprep.subr.bf16.mxu0 0
        %3782 = vmatpush1.bf16.msra.mxu0 0
        %3783 = vmatprep.subr.bf16.mxu0 0
        %3784 = vmatpush1.bf16.msra.mxu0 0
        %3785 = vmatprep.subr.bf16.mxu0 0
        %3786 = vmatpush1.bf16.msra.mxu0 0
        %3787 = vmatprep.subr.bf16.mxu0 0
        %3788 = vmatpush1.bf16.msra.mxu0 0
        %3789 = vmatprep.subr.bf16.mxu0 0
        %3790 = vmatpush1.bf16.msra.mxu0 0
        %3791 = vmatprep.subr.bf16.mxu0 0
        %3792 = vmatpush1.bf16.msra.mxu0 0
        %3793 = vmatprep.subr.bf16.mxu0 0
        %3794 = vmatpush1.bf16.msra.mxu0 0
        %3795 = vmatprep.mubr.bf16.mxu0 0
        %3796 = vmatmul.mubr.bf16.gmra.mrb[0].mxu0 %v3758
        %v3797 = vpop.f32.mrb[0].mxu0
        %v3798 = vadd.f32 0.0, %v3797
        %v3799 = vpop.f32.mrb[0].mxu0
        %v3800 = vpop.f32.mrb[0].mxu0
        %v3801 = vpop.f32.mrb[0].mxu0
        %3802 = vdwg.mxu0
        %v3804 = vsel %vm1049, %v3750, 0
        %v3807 = vsel %vm1053, %v3756, 0
        %3809 = vmatprep.subr.bf16.mxu0 0
        %3810 = vmatpush1.bf16.msra.mxu0 %v3754
        %3811 = vmatprep.subr.bf16.mxu0 0
        %3812 = vmatpush1.bf16.msra.mxu0 %v3755
        %3813 = vmatprep.subr.bf16.mxu0 0
        %3814 = vmatpush1.bf16.msra.mxu0 %v3807
        %3815 = vmatprep.subr.bf16.mxu0 0
        %3816 = vmatpush1.bf16.msra.mxu0 0
        %3817 = vmatprep.subr.bf16.mxu0 0
        %3818 = vmatpush1.bf16.msra.mxu0 0
        %3819 = vmatprep.subr.bf16.mxu0 0
        %3820 = vmatpush1.bf16.msra.mxu0 0
        %3821 = vmatprep.subr.bf16.mxu0 0
        %3822 = vmatpush1.bf16.msra.mxu0 0
        %3823 = vmatprep.subr.bf16.mxu0 0
        %3824 = vmatpush1.bf16.msra.mxu0 0
        %3825 = vmatprep.subr.bf16.mxu0 0
        %3826 = vmatpush1.bf16.msra.mxu0 0
        %3827 = vmatprep.subr.bf16.mxu0 0
        %3828 = vmatpush1.bf16.msra.mxu0 0
        %3829 = vmatprep.subr.bf16.mxu0 0
        %3830 = vmatpush1.bf16.msra.mxu0 0
        %3831 = vmatprep.subr.bf16.mxu0 0
        %3832 = vmatpush1.bf16.msra.mxu0 0
        %3833 = vmatprep.subr.bf16.mxu0 0
        %3834 = vmatpush1.bf16.msra.mxu0 0
        %3835 = vmatprep.subr.bf16.mxu0 0
        %3836 = vmatpush1.bf16.msra.mxu0 0
        %3837 = vmatprep.subr.bf16.mxu0 0
        %3838 = vmatpush1.bf16.msra.mxu0 0
        %3839 = vmatprep.subr.bf16.mxu0 0
        %3840 = vmatpush1.bf16.msra.mxu0 0
        %3841 = vmatprep.mubr.bf16.mxu0 0
        %3842 = vmatmul.mubr.bf16.gmra.mrb[0].mxu0 %v3804
        %v3843 = vpop.f32.mrb[0].mxu0
        %v3844 = vadd.f32 0.0, %v3843
        %v3845 = vpop.f32.mrb[0].mxu0
        %v3846 = vpop.f32.mrb[0].mxu0
        %v3847 = vpop.f32.mrb[0].mxu0
        %3848 = vdwg.mxu0
        %v3849 = vpack.c.bf16 %v3798, %v3798
        %v3850 = vpack.c.bf16 %v3844, %v3844
        %v3853 = vunpack.c.l.b16 %v3849
        %v3854 = vunpack.c.l.b16 %v3850
        %v3855 = vrot.slane %v3854, 7
        %v3856 = vsel %vm616, %v3855, %v3853
        %v3857 = vpack.c.b16 %v3856, %v3856
        %3859 = vmatprep.subr.bf16.mxu0 0
        %3860 = vmatpush1.bf16.msra.mxu0 %v1185
        %3861 = vmatprep.subr.bf16.mxu0 0
        %3862 = vmatpush1.bf16.msra.mxu0 %v1186
        %3863 = vmatprep.subr.bf16.mxu0 0
        %3864 = vmatpush1.bf16.msra.mxu0 %v1187
        %3865 = vmatprep.subr.bf16.mxu0 0
        %3866 = vmatpush1.bf16.msra.mxu0 %v1188
        %3867 = vmatprep.subr.bf16.mxu0 0
        %3868 = vmatpush1.bf16.msra.mxu0 %v1189
        %3869 = vmatprep.subr.bf16.mxu0 0
        %3870 = vmatpush1.bf16.msra.mxu0 %v1190
        %3871 = vmatprep.subr.bf16.mxu0 0
        %3872 = vmatpush1.bf16.msra.mxu0 %v1191
        %3873 = vmatprep.subr.bf16.mxu0 0
        %3874 = vmatpush1.bf16.msra.mxu0 %v1192
        %3875 = vmatprep.subr.bf16.mxu0 0
        %3876 = vmatpush1.bf16.msra.mxu0 0
        %3877 = vmatprep.subr.bf16.mxu0 0
        %3878 = vmatpush1.bf16.msra.mxu0 0
        %3879 = vmatprep.subr.bf16.mxu0 0
        %3880 = vmatpush1.bf16.msra.mxu0 0
        %3881 = vmatprep.subr.bf16.mxu0 0
        %3882 = vmatpush1.bf16.msra.mxu0 0
        %3883 = vmatprep.subr.bf16.mxu0 0
        %3884 = vmatpush1.bf16.msra.mxu0 0
        %3885 = vmatprep.subr.bf16.mxu0 0
        %3886 = vmatpush1.bf16.msra.mxu0 0
        %3887 = vmatprep.subr.bf16.mxu0 0
        %3888 = vmatpush1.bf16.msra.mxu0 0
        %3889 = vmatprep.subr.bf16.mxu0 0
        %3890 = vmatpush1.bf16.msra.mxu0 0
        %3891 = vmatprep.mubr.bf16.mxu0 0
        %3892 = vmatmul.mubr.bf16.gmra.mrb[0].mxu0 %v3857
        %v3893 = vpop.f32.mrb[0].mxu0
        %v3894 = vadd.f32 0.0, %v3893
        %v3895 = vpop.f32.mrb[0].mxu0
        %v3896 = vpop.f32.mrb[0].mxu0
        %v3897 = vpop.f32.mrb[0].mxu0
        %3898 = vdwg.mxu0
        %v3899 = vpack.c.bf16 %v3894, %v3894
        %3900 = vmatprep.subr.bf16.mxu0 %v701
        %3901 = vmatpush1.bf16.msra.mxu0 %v700
        %3902 = vmatprep.subr.bf16.mxu0 %v704
        %3903 = vmatpush1.bf16.msra.mxu0 %v703
        %3904 = vmatprep.subr.bf16.mxu0 %v707
        %3905 = vmatpush1.bf16.msra.mxu0 %v706
        %3906 = vmatprep.subr.bf16.mxu0 %v710
        %3907 = vmatpush1.bf16.msra.mxu0 %v709
        %3908 = vmatprep.subr.bf16.mxu0 %v713
        %3909 = vmatpush1.bf16.msra.mxu0 %v712
        %3910 = vmatprep.subr.bf16.mxu0 %v716
        %3911 = vmatpush1.bf16.msra.mxu0 %v715
        %3912 = vmatprep.subr.bf16.mxu0 %v719
        %3913 = vmatpush1.bf16.msra.mxu0 %v718
        %3914 = vmatprep.subr.bf16.mxu0 %v722
        %3915 = vmatpush1.bf16.msra.mxu0 %v721
        %3916 = vmatprep.subr.bf16.mxu0 0
        %3917 = vmatpush1.bf16.msra.mxu0 0
        %3918 = vmatprep.subr.bf16.mxu0 0
        %3919 = vmatpush1.bf16.msra.mxu0 0
        %3920 = vmatprep.subr.bf16.mxu0 0
        %3921 = vmatpush1.bf16.msra.mxu0 0
        %3922 = vmatprep.subr.bf16.mxu0 0
        %3923 = vmatpush1.bf16.msra.mxu0 0
        %3924 = vmatprep.subr.bf16.mxu0 0
        %3925 = vmatpush1.bf16.msra.mxu0 0
        %3926 = vmatprep.subr.bf16.mxu0 0
        %3927 = vmatpush1.bf16.msra.mxu0 0
        %3928 = vmatprep.subr.bf16.mxu0 0
        %3929 = vmatpush1.bf16.msra.mxu0 0
        %3930 = vmatprep.subr.bf16.mxu0 0
        %3931 = vmatpush1.bf16.msra.mxu0 0
        %3932 = vmatprep.mubr.bf16.mxu0 0
        %3933 = vmatmul.mubr.bf16.gmra.mrb[0].mxu0 %v3899
        %v3934 = vpop.f32.mrb[0].mxu0
        %v3935 = vadd.f32 0.0, %v3934
        %v3936 = vpop.f32.mrb[0].mxu0
        %v3937 = vadd.f32 0.0, %v3936
        %v3938 = vpop.f32.mrb[0].mxu0
        %v3939 = vpop.f32.mrb[0].mxu0
        %3940 = vdwg.mxu0
        %3941 = vmatprep.subr.bf16.mxu0 0
        %3942 = vmatpush1.bf16.msra.mxu0 %v702
        %3943 = vmatprep.subr.bf16.mxu0 0
        %3944 = vmatpush1.bf16.msra.mxu0 %v705
        %3945 = vmatprep.subr.bf16.mxu0 0
        %3946 = vmatpush1.bf16.msra.mxu0 %v708
        %3947 = vmatprep.subr.bf16.mxu0 0
        %3948 = vmatpush1.bf16.msra.mxu0 %v711
        %3949 = vmatprep.subr.bf16.mxu0 0
        %3950 = vmatpush1.bf16.msra.mxu0 %v714
        %3951 = vmatprep.subr.bf16.mxu0 0
        %3952 = vmatpush1.bf16.msra.mxu0 %v717
        %3953 = vmatprep.subr.bf16.mxu0 0
        %3954 = vmatpush1.bf16.msra.mxu0 %v720
        %3955 = vmatprep.subr.bf16.mxu0 0
        %3956 = vmatpush1.bf16.msra.mxu0 %v723
        %3957 = vmatprep.subr.bf16.mxu0 0
        %3958 = vmatpush1.bf16.msra.mxu0 0
        %3959 = vmatprep.subr.bf16.mxu0 0
        %3960 = vmatpush1.bf16.msra.mxu0 0
        %3961 = vmatprep.subr.bf16.mxu0 0
        %3962 = vmatpush1.bf16.msra.mxu0 0
        %3963 = vmatprep.subr.bf16.mxu0 0
        %3964 = vmatpush1.bf16.msra.mxu0 0
        %3965 = vmatprep.subr.bf16.mxu0 0
        %3966 = vmatpush1.bf16.msra.mxu0 0
        %3967 = vmatprep.subr.bf16.mxu0 0
        %3968 = vmatpush1.bf16.msra.mxu0 0
        %3969 = vmatprep.subr.bf16.mxu0 0
        %3970 = vmatpush1.bf16.msra.mxu0 0
        %3971 = vmatprep.subr.bf16.mxu0 0
        %3972 = vmatpush1.bf16.msra.mxu0 0
        %3973 = vmatprep.mubr.bf16.mxu0 0
        %3974 = vmatmul.mubr.bf16.gmra.mrb[0].mxu0 %v3899
        %v3975 = vpop.f32.mrb[0].mxu0
        %v3976 = vadd.f32 0.0, %v3975
        %v3977 = vpop.f32.mrb[0].mxu0
        %v3978 = vpop.f32.mrb[0].mxu0
        %v3979 = vpop.f32.mrb[0].mxu0
        %3980 = vdwg.mxu0
        %v3983 = vunpack.c.l.s4 1966171168
        %v3984 = vunpack.c.0.s8 %v3983
        %v3985 = vlaneseq
        %v3986 = vshrl.u32 %v3985, 7
        %v3987 = vsub.s32 %v3984, %v3986
        %v3988 = vrot.slane %v3937, %v3987
        %v3989 = vcombine.high %v3988, %v3988
        %v3991 = vunpack.c.l.s4 1966171168
        %v3992 = vunpack.c.0.s8 %v3991
        %v3993 = vlaneseq
        %v3994 = vshrl.u32 %v3993, 7
        %v3995 = vsub.s32 %v3992, %v3994
        %v3996 = vrot.slane %v3988, %v3995
        %v3998 = vunpack.c.l.s4 1966171168
        %v3999 = vunpack.c.0.s8 %v3998
        %v4000 = vlaneseq
        %v4001 = vshrl.u32 %v4000, 7
        %v4002 = vsub.s32 %v3999, %v4001
        %v4003 = vrot.slane %v3989, %v4002
        %4006 = vst [vmem:[%s503 + $0x27] sm:$0x1] %v3996
        %4007 = vst [vmem:[%s503 + $0x4f] sm:$0x1] %v4003
        %v4010 = vunpack.c.l.s4 1966171168
        %v4011 = vunpack.c.0.s8 %v4010
        %v4012 = vlaneseq
        %v4013 = vshrl.u32 %v4012, 7
        %v4014 = vsub.s32 %v4011, %v4013
        %v4015 = vrot.slane %v3976, %v4014
        %v4016 = vcombine.high %v4015, %v4015
        %v4018 = vunpack.c.l.s4 1966171168
        %v4019 = vunpack.c.0.s8 %v4018
        %v4020 = vlaneseq
        %v4021 = vshrl.u32 %v4020, 7
        %v4022 = vsub.s32 %v4019, %v4021
        %v4023 = vrot.slane %v4015, %v4022
        %v4025 = vunpack.c.l.s4 1966171168
        %v4026 = vunpack.c.0.s8 %v4025
        %v4027 = vlaneseq
        %v4028 = vshrl.u32 %v4027, 7
        %v4029 = vsub.s32 %v4026, %v4028
        %v4030 = vrot.slane %v4016, %v4029
        %4033 = vst [vmem:[%s510 + $0x27] sm:$0x1] %v4023
        %4034 = vst [vmem:[%s510 + $0x4f] sm:$0x1] %v4030
        %v4035 = vld [vmem:[%s503] sm:$0xff]
        %v4036 = vld [vmem:[%s503 + $0x8] sm:$0xff]
        %v4037 = vld [vmem:[%s503 + $0x10] sm:$0xff]
        %v4038 = vld [vmem:[%s503 + $0x18] sm:$0xff]
        %v4039 = vld [vmem:[%s503 + $0x20] sm:$0xff]
        %v4040 = vld [vmem:[%s503 + $0x28] sm:$0xff]
        %v4041 = vld [vmem:[%s503 + $0x30] sm:$0xff]
        %v4042 = vld [vmem:[%s503 + $0x38] sm:$0xff]
        %v4043 = vld [vmem:[%s503 + $0x40] sm:$0xff]
        %v4044 = vld [vmem:[%s503 + $0x48] sm:$0xff]
        %v4045 = vld [vmem:[%s510] sm:$0xff]
        %v4046 = vld [vmem:[%s510 + $0x8] sm:$0xff]
        %v4047 = vld [vmem:[%s510 + $0x10] sm:$0xff]
        %v4048 = vld [vmem:[%s510 + $0x18] sm:$0xff]
        %v4049 = vld [vmem:[%s510 + $0x20] sm:$0xff]
        %v4050 = vld [vmem:[%s510 + $0x28] sm:$0xff]
        %v4051 = vld [vmem:[%s510 + $0x30] sm:$0xff]
        %v4052 = vld [vmem:[%s510 + $0x38] sm:$0xff]
        %v4053 = vld [vmem:[%s510 + $0x40] sm:$0xff]
        %v4054 = vld [vmem:[%s510 + $0x48] sm:$0xff]
        %v4057 = vunpack.c.l.s4 1966171168
        %v4058 = vunpack.c.0.s8 %v4057
        %v4059 = vlaneseq
        %v4060 = vshrl.u32 %v4059, 7
        %v4061 = vsub.s32 %v4058, %v4060
        %v4062 = vrot.slane %v3935, %v4061
        %v4063 = vcombine.high %v4062, %v4062
        %v4065 = vunpack.c.l.s4 1966171168
        %v4066 = vunpack.c.0.s8 %v4065
        %v4067 = vlaneseq
        %v4068 = vshrl.u32 %v4067, 7
        %v4069 = vsub.s32 %v4066, %v4068
        %v4070 = vrot.slane %v4062, %v4069
        %v4072 = vunpack.c.l.s4 1966171168
        %v4073 = vunpack.c.0.s8 %v4072
        %v4074 = vlaneseq
        %v4075 = vshrl.u32 %v4074, 7
        %v4076 = vsub.s32 %v4073, %v4075
        %v4077 = vrot.slane %v4063, %v4076
        %v4080 = vpack.c.bf16 %v4070, %v4070
        %v4081 = vpack.c.bf16 %v4077, %v4077
        %v4082 = vpack.c.bf16 %v4036, %v4035
        %v4083 = vpack.c.bf16 %v4038, %v4037
        %v4084 = vpack.c.bf16 %v4039, %v4039
        %v4085 = vpack.c.bf16 %v4041, %v4040
        %v4086 = vpack.c.bf16 %v4043, %v4042
        %v4087 = vpack.c.bf16 %v4044, %v4044
        %4088 = vmatprep.subr.bf16.mxu0 0
        %4089 = vmatpush1.bf16.xpose.msra.mxu0 %v4082
        %4090 = vmatprep.subr.bf16.mxu0 0
        %4091 = vmatpush1.bf16.xpose.msra.mxu0 %v4083
        %4092 = vmatprep.subr.bf16.mxu0 0
        %4093 = vmatpush1.bf16.xpose.msra.mxu0 %v4084
        %4094 = vmatprep.subr.bf16.mxu0 0
        %4095 = vmatpush1.bf16.xpose.msra.mxu0 0
        %4096 = vmatprep.subr.bf16.mxu0 0
        %4097 = vmatpush1.bf16.xpose.msra.mxu0 0
        %4098 = vmatprep.subr.bf16.mxu0 0
        %4099 = vmatpush1.bf16.xpose.msra.mxu0 0
        %4100 = vmatprep.subr.bf16.mxu0 0
        %4101 = vmatpush1.bf16.xpose.msra.mxu0 0
        %4102 = vmatprep.subr.bf16.mxu0 0
        %4103 = vmatpush1.bf16.xpose.msra.mxu0 0
        %4104 = vmatprep.subr.bf16.mxu0 0
        %4105 = vmatpush1.bf16.xpose.msra.mxu0 0
        %4106 = vmatprep.subr.bf16.mxu0 0
        %4107 = vmatpush1.bf16.xpose.msra.mxu0 0
        %4108 = vmatprep.subr.bf16.mxu0 0
        %4109 = vmatpush1.bf16.xpose.msra.mxu0 0
        %4110 = vmatprep.subr.bf16.mxu0 0
        %4111 = vmatpush1.bf16.xpose.msra.mxu0 0
        %4112 = vmatprep.subr.bf16.mxu0 0
        %4113 = vmatpush1.bf16.xpose.msra.mxu0 0
        %4114 = vmatprep.subr.bf16.mxu0 0
        %4115 = vmatpush1.bf16.xpose.msra.mxu0 0
        %4116 = vmatprep.subr.bf16.mxu0 0
        %4117 = vmatpush1.bf16.xpose.msra.mxu0 0
        %4118 = vmatprep.subr.bf16.mxu0 0
        %4119 = vmatpush1.bf16.xpose.msra.mxu0 0
        %4120 = vmatprep.mubr.bf16.mxu0 0
        %4121 = vmatmul.mubr.bf16.gmra.mrb[0].mxu0 %v4080
        %v4122 = vpop.f32.mrb[0].mxu0
        %v4123 = vadd.f32 0.0, %v4122
        %v4124 = vpop.f32.mrb[0].mxu0
        %v4125 = vpop.f32.mrb[0].mxu0
        %v4126 = vpop.f32.mrb[0].mxu0
        %4127 = vdwg.mxu0
        %4128 = vmatprep.subr.bf16.mxu0 0
        %4129 = vmatpush1.bf16.xpose.msra.mxu0 %v4085
        %4130 = vmatprep.subr.bf16.mxu0 0
        %4131 = vmatpush1.bf16.xpose.msra.mxu0 %v4086
        %4132 = vmatprep.subr.bf16.mxu0 0
        %4133 = vmatpush1.bf16.xpose.msra.mxu0 %v4087
        %4134 = vmatprep.subr.bf16.mxu0 0
        %4135 = vmatpush1.bf16.xpose.msra.mxu0 0
        %4136 = vmatprep.subr.bf16.mxu0 0
        %4137 = vmatpush1.bf16.xpose.msra.mxu0 0
        %4138 = vmatprep.subr.bf16.mxu0 0
        %4139 = vmatpush1.bf16.xpose.msra.mxu0 0
        %4140 = vmatprep.subr.bf16.mxu0 0
        %4141 = vmatpush1.bf16.xpose.msra.mxu0 0
        %4142 = vmatprep.subr.bf16.mxu0 0
        %4143 = vmatpush1.bf16.xpose.msra.mxu0 0
        %4144 = vmatprep.subr.bf16.mxu0 0
        %4145 = vmatpush1.bf16.xpose.msra.mxu0 0
        %4146 = vmatprep.subr.bf16.mxu0 0
        %4147 = vmatpush1.bf16.xpose.msra.mxu0 0
        %4148 = vmatprep.subr.bf16.mxu0 0
        %4149 = vmatpush1.bf16.xpose.msra.mxu0 0
        %4150 = vmatprep.subr.bf16.mxu0 0
        %4151 = vmatpush1.bf16.xpose.msra.mxu0 0
        %4152 = vmatprep.subr.bf16.mxu0 0
        %4153 = vmatpush1.bf16.xpose.msra.mxu0 0
        %4154 = vmatprep.subr.bf16.mxu0 0
        %4155 = vmatpush1.bf16.xpose.msra.mxu0 0
        %4156 = vmatprep.subr.bf16.mxu0 0
        %4157 = vmatpush1.bf16.xpose.msra.mxu0 0
        %4158 = vmatprep.subr.bf16.mxu0 0
        %4159 = vmatpush1.bf16.xpose.msra.mxu0 0
        %4160 = vmatprep.mubr.bf16.mxu0 0
        %4161 = vmatmul.mubr.bf16.gmra.mrb[0].mxu0 %v4081
        %v4162 = vpop.f32.mrb[0].mxu0
        %v4163 = vadd.f32 0.0, %v4162
        %v4164 = vpop.f32.mrb[0].mxu0
        %v4165 = vpop.f32.mrb[0].mxu0
        %v4166 = vpop.f32.mrb[0].mxu0
        %4167 = vdwg.mxu0
        %v4168 = vmul.f32 %v4123, 0.125
        %v4169 = vmul.f32 %v4163, 0.125
        %v4170 = vsel %vm1018, %v4168, -inf
        %4171 = vmax.xlane.f32.xlu0 %v4170
        %v4172 = vpop.xlane.xlu0 %4171
        %v4173 = vsel %vm1018, %v4169, -inf
        %4174 = vmax.xlane.f32.xlu0 %v4173
        %v4175 = vpop.xlane.xlu0 %4174
        %v4176 = vsub.f32 %v4168, %v4172
        %v4177 = vsub.f32 %v4169, %v4175
        %v4178 = vmul.f32 %v4176, 1.442695
        %v4179 = vpow.pop %v4178
        %v4180 = vmul.f32 %v4177, 1.442695
        %v4181 = vpow.pop %v4180
        %v4182 = vsel %vm1018, %v4179, 0.0
        %4183 = vadd.xlane.f32.xlu0 %v4182
        %v4184 = vpop.xlane.xlu0 %4183
        %v4185 = vsel %vm1018, %v4181, 0.0
        %4186 = vadd.xlane.f32.xlu0 %v4185
        %v4187 = vpop.xlane.xlu0 %4186
        %v4188 = vrcp.pop %v4184
        %v4189 = vmul.f32 %v4179, %v4188
        %v4190 = vrcp.pop %v4187
        %v4191 = vmul.f32 %v4181, %v4190
        %v4192 = vpack.c.bf16 %v4189, %v4189
        %v4193 = vpack.c.bf16 %v4191, %v4191
        %v4194 = vpack.c.bf16 %v4046, %v4045
        %v4195 = vpack.c.bf16 %v4048, %v4047
        %v4196 = vpack.c.bf16 %v4049, %v4049
        %v4197 = vpack.c.bf16 %v4051, %v4050
        %v4198 = vpack.c.bf16 %v4053, %v4052
        %v4199 = vpack.c.bf16 %v4054, %v4054
        %v4201 = vsel %vm1049, %v4192, 0
        %v4204 = vsel %vm1053, %v4196, 0
        %4206 = vmatprep.subr.bf16.mxu0 0
        %4207 = vmatpush1.bf16.msra.mxu0 %v4194
        %4208 = vmatprep.subr.bf16.mxu0 0
        %4209 = vmatpush1.bf16.msra.mxu0 %v4195
        %4210 = vmatprep.subr.bf16.mxu0 0
        %4211 = vmatpush1.bf16.msra.mxu0 %v4204
        %4212 = vmatprep.subr.bf16.mxu0 0
        %4213 = vmatpush1.bf16.msra.mxu0 0
        %4214 = vmatprep.subr.bf16.mxu0 0
        %4215 = vmatpush1.bf16.msra.mxu0 0
        %4216 = vmatprep.subr.bf16.mxu0 0
        %4217 = vmatpush1.bf16.msra.mxu0 0
        %4218 = vmatprep.subr.bf16.mxu0 0
        %4219 = vmatpush1.bf16.msra.mxu0 0
        %4220 = vmatprep.subr.bf16.mxu0 0
        %4221 = vmatpush1.bf16.msra.mxu0 0
        %4222 = vmatprep.subr.bf16.mxu0 0
        %4223 = vmatpush1.bf16.msra.mxu0 0
        %4224 = vmatprep.subr.bf16.mxu0 0
        %4225 = vmatpush1.bf16.msra.mxu0 0
        %4226 = vmatprep.subr.bf16.mxu0 0
        %4227 = vmatpush1.bf16.msra.mxu0 0
        %4228 = vmatprep.subr.bf16.mxu0 0
        %4229 = vmatpush1.bf16.msra.mxu0 0
        %4230 = vmatprep.subr.bf16.mxu0 0
        %4231 = vmatpush1.bf16.msra.mxu0 0
        %4232 = vmatprep.subr.bf16.mxu0 0
        %4233 = vmatpush1.bf16.msra.mxu0 0
        %4234 = vmatprep.subr.bf16.mxu0 0
        %4235 = vmatpush1.bf16.msra.mxu0 0
        %4236 = vmatprep.subr.bf16.mxu0 0
        %4237 = vmatpush1.bf16.msra.mxu0 0
        %4238 = vmatprep.mubr.bf16.mxu0 0
        %4239 = vmatmul.mubr.bf16.gmra.mrb[0].mxu0 %v4201
        %v4240 = vpop.f32.mrb[0].mxu0
        %v4241 = vadd.f32 0.0, %v4240
        %v4242 = vpop.f32.mrb[0].mxu0
        %v4243 = vpop.f32.mrb[0].mxu0
        %v4244 = vpop.f32.mrb[0].mxu0
        %4245 = vdwg.mxu0
        %v4247 = vsel %vm1049, %v4193, 0
        %v4250 = vsel %vm1053, %v4199, 0
        %4252 = vmatprep.subr.bf16.mxu0 0
        %4253 = vmatpush1.bf16.msra.mxu0 %v4197
        %4254 = vmatprep.subr.bf16.mxu0 0
        %4255 = vmatpush1.bf16.msra.mxu0 %v4198
        %4256 = vmatprep.subr.bf16.mxu0 0
        %4257 = vmatpush1.bf16.msra.mxu0 %v4250
        %4258 = vmatprep.subr.bf16.mxu0 0
        %4259 = vmatpush1.bf16.msra.mxu0 0
        %4260 = vmatprep.subr.bf16.mxu0 0
        %4261 = vmatpush1.bf16.msra.mxu0 0
        %4262 = vmatprep.subr.bf16.mxu0 0
        %4263 = vmatpush1.bf16.msra.mxu0 0
        %4264 = vmatprep.subr.bf16.mxu0 0
        %4265 = vmatpush1.bf16.msra.mxu0 0
        %4266 = vmatprep.subr.bf16.mxu0 0
        %4267 = vmatpush1.bf16.msra.mxu0 0
        %4268 = vmatprep.subr.bf16.mxu0 0
        %4269 = vmatpush1.bf16.msra.mxu0 0
        %4270 = vmatprep.subr.bf16.mxu0 0
        %4271 = vmatpush1.bf16.msra.mxu0 0
        %4272 = vmatprep.subr.bf16.mxu0 0
        %4273 = vmatpush1.bf16.msra.mxu0 0
        %4274 = vmatprep.subr.bf16.mxu0 0
        %4275 = vmatpush1.bf16.msra.mxu0 0
        %4276 = vmatprep.subr.bf16.mxu0 0
        %4277 = vmatpush1.bf16.msra.mxu0 0
        %4278 = vmatprep.subr.bf16.mxu0 0
        %4279 = vmatpush1.bf16.msra.mxu0 0
        %4280 = vmatprep.subr.bf16.mxu0 0
        %4281 = vmatpush1.bf16.msra.mxu0 0
        %4282 = vmatprep.subr.bf16.mxu0 0
        %4283 = vmatpush1.bf16.msra.mxu0 0
        %4284 = vmatprep.mubr.bf16.mxu0 0
        %4285 = vmatmul.mubr.bf16.gmra.mrb[0].mxu0 %v4247
        %v4286 = vpop.f32.mrb[0].mxu0
        %v4287 = vadd.f32 0.0, %v4286
        %v4288 = vpop.f32.mrb[0].mxu0
        %v4289 = vpop.f32.mrb[0].mxu0
        %v4290 = vpop.f32.mrb[0].mxu0
        %4291 = vdwg.mxu0
        %v4292 = vpack.c.bf16 %v4241, %v4241
        %v4293 = vpack.c.bf16 %v4287, %v4287
        %v4296 = vunpack.c.l.b16 %v4292
        %v4297 = vunpack.c.l.b16 %v4293
        %v4298 = vrot.slane %v4297, 7
        %v4299 = vsel %vm616, %v4298, %v4296
        %v4300 = vpack.c.b16 %v4299, %v4299
        %4302 = vmatprep.subr.bf16.mxu0 0
        %4303 = vmatpush1.bf16.msra.mxu0 %v1185
        %4304 = vmatprep.subr.bf16.mxu0 0
        %4305 = vmatpush1.bf16.msra.mxu0 %v1186
        %4306 = vmatprep.subr.bf16.mxu0 0
        %4307 = vmatpush1.bf16.msra.mxu0 %v1187
        %4308 = vmatprep.subr.bf16.mxu0 0
        %4309 = vmatpush1.bf16.msra.mxu0 %v1188
        %4310 = vmatprep.subr.bf16.mxu0 0
        %4311 = vmatpush1.bf16.msra.mxu0 %v1189
        %4312 = vmatprep.subr.bf16.mxu0 0
        %4313 = vmatpush1.bf16.msra.mxu0 %v1190
        %4314 = vmatprep.subr.bf16.mxu0 0
        %4315 = vmatpush1.bf16.msra.mxu0 %v1191
        %4316 = vmatprep.subr.bf16.mxu0 0
        %4317 = vmatpush1.bf16.msra.mxu0 %v1192
        %4318 = vmatprep.subr.bf16.mxu0 0
        %4319 = vmatpush1.bf16.msra.mxu0 0
        %4320 = vmatprep.subr.bf16.mxu0 0
        %4321 = vmatpush1.bf16.msra.mxu0 0
        %4322 = vmatprep.subr.bf16.mxu0 0
        %4323 = vmatpush1.bf16.msra.mxu0 0
        %4324 = vmatprep.subr.bf16.mxu0 0
        %4325 = vmatpush1.bf16.msra.mxu0 0
        %4326 = vmatprep.subr.bf16.mxu0 0
        %4327 = vmatpush1.bf16.msra.mxu0 0
        %4328 = vmatprep.subr.bf16.mxu0 0
        %4329 = vmatpush1.bf16.msra.mxu0 0
        %4330 = vmatprep.subr.bf16.mxu0 0
        %4331 = vmatpush1.bf16.msra.mxu0 0
        %4332 = vmatprep.subr.bf16.mxu0 0
        %4333 = vmatpush1.bf16.msra.mxu0 0
        %4334 = vmatprep.mubr.bf16.mxu0 0
        %4335 = vmatmul.mubr.bf16.gmra.mrb[0].mxu0 %v4300
        %v4336 = vpop.f32.mrb[0].mxu0
        %v4337 = vadd.f32 0.0, %v4336
        %v4338 = vpop.f32.mrb[0].mxu0
        %v4339 = vpop.f32.mrb[0].mxu0
        %v4340 = vpop.f32.mrb[0].mxu0
        %4341 = vdwg.mxu0
        %v4344 = vunpack.c.l.s4 1966171168
        %v4345 = vunpack.c.0.s8 %v4344
        %v4346 = vlaneseq
        %v4347 = vshrl.u32 %v4346, 7
        %v4348 = vsub.s32 %v4345, %v4347
        %v4349 = vrot.slane %v4337, %v4348
        %v4350 = vcombine.high %v4349, %v4349
        %v4352 = vunpack.c.l.s4 1966171168
        %v4353 = vunpack.c.0.s8 %v4352
        %v4354 = vlaneseq
        %v4355 = vshrl.u32 %v4354, 7
        %v4356 = vsub.s32 %v4353, %v4355
        %v4357 = vrot.slane %v4349, %v4356
        %v4359 = vunpack.c.l.s4 1966171168
        %v4360 = vunpack.c.0.s8 %v4359
        %v4361 = vlaneseq
        %v4362 = vshrl.u32 %v4361, 7
        %v4363 = vsub.s32 %v4360, %v4362
        %v4364 = vrot.slane %v4350, %v4363
        %4367 = vst [vmem:[%s517] sm:$0x1] %v4357
        %4368 = vst [vmem:[%s517 + $0x1] sm:$0x1] %v4364
        %s4369 = sand.u32 %s172, 1
        %s4370 = scalar_lea.sflag [#allocation4], %s4369
        %s4371 = sand.u32 %s172, 1
        %s4372 = smul.addr %s4371, 80
        %s4373 = scalar_lea.vmem [#allocation11], %s4372
        %s4374 = sand.u32 %s34, 1
        %s4375 = scalar_lea.sflag [#allocation13], %s4374
        %s4376 = sand.u32 %s198, 1
        %s4377 = smul.addr %s4376, 80
        %s4378 = scalar_lea.vmem [#allocation12], %s4377
        %s4379 = sand.u32 %s34, 1
        %s4380 = scalar_lea.sflag [#allocation13], %s4379
        %s4381 = sand.u32 %s224, 1
        %s4382 = smul.addr %s4381, 2
        %s4383 = scalar_lea.vmem [#allocation14], %s4382
        // Predicated region
        $region61: #{tpu_custom_call.1} parent=39 // pred_check
          %p4384 = pneg %p182
        $region62: #{tpu_custom_call.1} parent=39 // pred_check_branch
          %4386 = sbr.rel (%p4384) target = $region64
        $region63: #{tpu_custom_call.1} parent=39 // pred_region
          #allocation20 [shape = 'u32[6]{0}', space=smem, size = 0x18, scoped, tag = 'DMA stride descriptor']
          %s4388 = ssub.s32 1280, 1280
          %4389 = vsyncadd %s4370, %s4388
          %s4390 = smul.addr %s34, 5
          %s4391 = smul.addr %s4390, 128
          %s4392 = scalar_lea.hbm %s5, %s4391
          %s4394 = sshll.u32 1, 14
          %s4395 = sxor.u32 4294967295, %s4394
          %s4398 = sshll.u32 7, 18
          %s4399 = sxor.u32 4294967295, %s4398
          %s4400 = sand.u32 0, %s4399
          %s4402 = sor.u32 %s4400, 0
          %s4404 = sshll.u32 3, 24
          %s4405 = sxor.u32 4294967295, %s4404
          %s4406 = sand.u32 %s4402, %s4405
          %s4408 = sor.u32 %s4406, 0
          %s4409 = sshll.u32 %s4373, 4
          %s4410 = int_to_ptr.vmem [resolvable:$true] %s4409
          %4416 = sst [smem:[#allocation20]] 640
          %s4417 = scalar_lea.smem [#allocation20], 1
          %4418 = sst [smem:[%s4417]] 2560
          %s4419 = scalar_lea.smem [#allocation20], 2
          %4420 = sst [smem:[%s4419]] 5
          %s4421 = scalar_lea.smem [#allocation20], 3
          %4422 = sst [smem:[%s4421]] 128
          %s4423 = scalar_lea.smem [#allocation20], 4
          %4424 = sst [smem:[%s4423]] 128
          %s4425 = scalar_lea.smem [#allocation20], 5
          %4426 = sst [smem:[%s4425]] 8
          %4428 = dma.general %s4410, 1280, %s4392, %s4370, [#allocation19], [#allocation20], %s4408, 0
        $region64: #{tpu_custom_call.1} parent=39 // pred_fallthru
          _
        // Predicated region
        $region65: #{tpu_custom_call.1} parent=39 // pred_check
          %p4429 = pneg %p208
        $region66: #{tpu_custom_call.1} parent=39 // pred_check_branch
          %4431 = sbr.rel (%p4429) target = $region68
        $region67: #{tpu_custom_call.1} parent=39 // pred_region
          #allocation22 [shape = 'u32[6]{0}', space=smem, size = 0x18, scoped, tag = 'DMA stride descriptor']
          %s4433 = ssub.s32 1280, 1280
          %4434 = vsyncadd %s4375, %s4433
          %s4435 = smul.addr %s34, 5
          %s4436 = smul.addr %s4435, 128
          %s4437 = scalar_lea.hbm %s6, %s4436
          %s4439 = sshll.u32 1, 14
          %s4440 = sxor.u32 4294967295, %s4439
          %s4443 = sshll.u32 7, 18
          %s4444 = sxor.u32 4294967295, %s4443
          %s4445 = sand.u32 0, %s4444
          %s4447 = sor.u32 %s4445, 0
          %s4449 = sshll.u32 3, 24
          %s4450 = sxor.u32 4294967295, %s4449
          %s4451 = sand.u32 %s4447, %s4450
          %s4453 = sor.u32 %s4451, 0
          %s4454 = sshll.u32 %s4378, 4
          %s4455 = int_to_ptr.vmem [resolvable:$true] %s4454
          %4461 = sst [smem:[#allocation22]] 640
          %s4462 = scalar_lea.smem [#allocation22], 1
          %4463 = sst [smem:[%s4462]] 2560
          %s4464 = scalar_lea.smem [#allocation22], 2
          %4465 = sst [smem:[%s4464]] 5
          %s4466 = scalar_lea.smem [#allocation22], 3
          %4467 = sst [smem:[%s4466]] 128
          %s4468 = scalar_lea.smem [#allocation22], 4
          %4469 = sst [smem:[%s4468]] 128
          %s4470 = scalar_lea.smem [#allocation22], 5
          %4471 = sst [smem:[%s4470]] 8
          %4473 = dma.general %s4455, 1280, %s4437, %s4375, [#allocation21], [#allocation22], %s4453, 0
        $region68: #{tpu_custom_call.1} parent=39 // pred_fallthru
          _
        // Predicated region
        $region69: #{tpu_custom_call.1} parent=39 // pred_check
          %p4474 = pneg %p234
        $region70: #{tpu_custom_call.1} parent=39 // pred_check_branch
          %4476 = sbr.rel (%p4474) target = $region72
        $region71: #{tpu_custom_call.1} parent=39 // pred_region
          %s4478 = ssub.s32 32, 32
          %4479 = vsyncadd %s4380, %s4478
          %s4480 = smul.addr %s34, 16
          %s4481 = scalar_lea.hbm %s7, %s4480
          %s4482 = sshll.u32 %s4383, 4
          %s4483 = int_to_ptr.vmem [resolvable:$true] %s4482
          %4488 = dma.vmem_to_hbm [thread:$0]  %s4483, 32, %s4481, %s4380, 16, 64, 1
        $region72: #{tpu_custom_call.1} parent=39 // pred_fallthru
          _
      $region40: #{tpu_custom_call.1} parent=5 // pred_fallthru
        _
      %p4489 = scmp.le.s32.totalorder 2, %s29
      // Predicated region
      $region73: #{tpu_custom_call.1} parent=5 // pred_check
        %p4490 = pneg %p4489
      $region74: #{tpu_custom_call.1} parent=5 // pred_check_branch
        %4492 = sbr.rel (%p4490) target = $region76
      $region75: #{tpu_custom_call.1} parent=5 // pred_region
        %s4493 = ssub.s32 %s29, 2
        // Predicated region
        $region77: #{tpu_custom_call.1} parent=75 // pred_check
          %p4494 = pneg %p188
        $region78: #{tpu_custom_call.1} parent=75 // pred_check_branch
          %4496 = sbr.rel (%p4494) target = $region80
        $region79: #{tpu_custom_call.1} parent=75 // pred_region
          %s4497 = sand.u32 %s173, 1
          %s4498 = scalar_lea.sflag [#allocation4], %s4497
          %s4499 = sand.u32 %s173, 1
          %s4500 = smul.addr %s4499, 80
          %s4501 = scalar_lea.vmem [#allocation11], %s4500
          %4502 = dma.done %s4498, 1280
        $region80: #{tpu_custom_call.1} parent=75 // pred_fallthru
          _
        // Predicated region
        $region81: #{tpu_custom_call.1} parent=75 // pred_check
          %p4503 = pneg %p214
        $region82: #{tpu_custom_call.1} parent=75 // pred_check_branch
          %4505 = sbr.rel (%p4503) target = $region84
        $region83: #{tpu_custom_call.1} parent=75 // pred_region
          %s4506 = sand.u32 %s35, 1
          %s4507 = scalar_lea.sflag [#allocation13], %s4506
          %s4508 = sand.u32 %s199, 1
          %s4509 = smul.addr %s4508, 80
          %s4510 = scalar_lea.vmem [#allocation12], %s4509
          %4511 = dma.done %s4507, 1280
        $region84: #{tpu_custom_call.1} parent=75 // pred_fallthru
          _
        // Predicated region
        $region85: #{tpu_custom_call.1} parent=75 // pred_check
          %p4512 = pneg %p240
        $region86: #{tpu_custom_call.1} parent=75 // pred_check_branch
          %4514 = sbr.rel (%p4512) target = $region88
        $region87: #{tpu_custom_call.1} parent=75 // pred_region
          %s4515 = sand.u32 %s35, 1
          %s4516 = scalar_lea.sflag [#allocation13], %s4515
          %s4517 = sand.u32 %s225, 1
          %s4518 = smul.addr %s4517, 2
          %s4519 = scalar_lea.vmem [#allocation14], %s4518
          %4520 = dma.done %s4516, 32
        $region88: #{tpu_custom_call.1} parent=75 // pred_fallthru
          _
      $region76: #{tpu_custom_call.1} parent=5 // pred_fallthru
        _
    $region6: #{tpu_custom_call.1} parent=1 // loop_footer
      %s33 = sadd.s32 1, %s29
    $region7: #{tpu_custom_call.1} parent=1 // loop_footer_branch
      %28 = sbr.rel target = $region3
    $region8: #{tpu_custom_call.1} parent=1 // loop_exit
      _
    %4521 = vsyncpa [#allocation3], 1
    %s4522 = scalar_lea.sflag [#allocation3], 1
    %4523 = vsyncpa %s4522, 1
    %4524 = vsyncpa [#allocation6], 1
    %s4525 = scalar_lea.sflag [#allocation6], 1
    %4526 = vsyncpa %s4525, 1
    %4527 = vsyncpa [#allocation9], 1
    %s4528 = scalar_lea.sflag [#allocation9], 1
    %4529 = vsyncpa %s4528, 1
    %4530 = vsyncpa [#allocation4], 1
    %s4531 = scalar_lea.sflag [#allocation4], 1
    %4532 = vsyncpa %s4531, 1
    %4533 = vsyncpa [#allocation13], 1
    %s4534 = scalar_lea.sflag [#allocation13], 1
    %4535 = vsyncpa %s4534, 1

</llo_original>
